<compile_context>
chip_gen: v7x
topology: tpu7x:2x2x1
jax: 0.10.0
libtpu: 0.0.40
codegen_flags: <defaults>
</compile_context>

<pallas_src>
import functools

import jax
import jax.numpy as jnp
from jax import lax
from jax.experimental import pallas as pl
from jax.experimental.pallas import tpu as pltpu

NUM_GROUPS = 32
EPS = 1e-6


def _vmem_limit_bytes():
    # 3/4 of per-TC VMEM (96 MiB on v5e/v6e, 48 MiB on v7x).  Conservative
    # 48 MiB fallback - never >= v7x's entire 64 MiB per-TC capacity.
    try:
        return int(pltpu.get_tpu_info().vmem_capacity_bytes * 3 // 4)
    except Exception:
        return 48 * 1024 * 1024


def _pick_tq(hw):
    # Generation-aware default query-tile size: smaller tiles on VMEM-lean
    # chips (v7x: 64 MiB/TC), larger on v5e/v6e (128 MiB/TC).
    try:
        lean = pltpu.get_tpu_info().vmem_capacity_bytes < (100 << 20)
    except Exception:
        lean = True
    for cand in ((256, 128) if lean else (512, 256, 128)):
        if hw % cand == 0:
            return cand
    return hw


# --------------------------------------------------------------------------
# Fused kernel: one batch element per grid step
#   GroupNorm -> fused QKV 1x1 conv -> Q-tiled attention -> proj -> residual
# --------------------------------------------------------------------------
def attn_block_kernel(x_ref, gamma_ref, beta_ref, red_ref, bcast_ref,
                      wqkv_ref, bqkv_ref, wp_ref, bp_ref,
                      out_ref, q_s, kT_s, v_s,
                      *, c, tq, n_q, approx_recip, exp_dtype):
    x = x_ref[0]                                     # (HW, C) f32
    hw = x.shape[0]
    gs = c // NUM_GROUPS
    n = jnp.float32(hw * gs)

    # ---- GroupNorm (two-pass / shifted variance: no E[x^2]-E[x]^2 cancel) --
    s1 = jnp.sum(x, axis=0, keepdims=True)                                 # (1, C)
    mean_g = jnp.dot(s1, red_ref[...], preferred_element_type=jnp.float32) / n
    mean = jnp.dot(mean_g, bcast_ref[...],
                   preferred_element_type=jnp.float32)                     # (1, C)
    xc = x - mean                                                          # (HW, C)
    s2 = jnp.sum(xc * xc, axis=0, keepdims=True)                           # (1, C)
    var_g = jnp.dot(s2, red_ref[...], preferred_element_type=jnp.float32) / n
    inv_g = lax.rsqrt(var_g + EPS)                                         # (1, G)
    inv = jnp.dot(inv_g, bcast_ref[...],
                  preferred_element_type=jnp.float32)                      # (1, C)
    h = xc * (inv * gamma_ref[...]) + beta_ref[...]                        # (HW, C)
    hb = h.astype(jnp.bfloat16)                                            # MXU operand

    # ---- fused q/k/v projection: one (C, 3C) MXU matmul -------------------
    # The 1/sqrt(C) softmax scale is pre-folded into the q columns of
    # wqkv/bqkv in the wrapper, so no per-tile logit scaling is needed.
    qkv = jnp.dot(hb, wqkv_ref[...],
                  preferred_element_type=jnp.float32) + bqkv_ref[...]      # (HW, 3C)
    q_s[...] = qkv[:, :c].astype(jnp.bfloat16)
    v_s[...] = qkv[:, 2 * c:].astype(jnp.bfloat16)
    # Transpose K once per batch element (amortised over all Q tiles) so the
    # per-tile QK^T is a plain NN contraction - no per-tile transpose.
    kT_s[...] = jnp.transpose(qkv[:, c:2 * c]).astype(jnp.bfloat16)        # (C, HW)

    # ---- Q-tiled attention + output projection + residual -----------------
    def q_tile(t, carry):
        start = pl.multiple_of(t * tq, tq)
        q_t = q_s[pl.ds(start, tq), :]                                     # (TQ, C) bf16
        logits = jnp.dot(q_t, kT_s[...],
                         preferred_element_type=jnp.float32)               # (TQ, HW) f32
        m = jnp.max(logits, axis=-1, keepdims=True)
        # exp in bf16 on v6e/v7x (bf16 EUP); f32 on v5e via exp_dtype flag.
        e = jnp.exp((logits - m).astype(exp_dtype))                        # (TQ, HW)
        denom = jnp.sum(e.astype(jnp.float32), axis=-1, keepdims=True)     # (TQ, 1)
        pv = jnp.dot(e.astype(jnp.bfloat16), v_s[...],
                     preferred_element_type=jnp.float32)                   # (TQ, C)
        attn = pv * pl.reciprocal(denom, approx=approx_recip)
        proj = jnp.dot(attn.astype(jnp.bfloat16), wp_ref[...],
                       preferred_element_type=jnp.float32) + bp_ref[...]   # (TQ, C)
        x_res = x_ref[0, pl.ds(start, tq), :]
        out_ref[0, pl.ds(start, tq), :] = (x_res + proj).astype(out_ref.dtype)
        return carry

    lax.fori_loop(0, n_q, q_tile, 0, unroll=n_q <= 4)


# --------------------------------------------------------------------------
# Channels-last wrapper (single pallas_call)
# --------------------------------------------------------------------------
@functools.partial(jax.jit,
                   static_argnames=("tq", "approx_recip", "exp_in_bf16",
                                    "out_dtype"))
def attn_block_seq(x_seq, gamma, beta, wq, bq, wk, bk, wv, bv, wp, bp,
                   *, tq=None, approx_recip=True, exp_in_bf16=True,
                   out_dtype=jnp.float32):
    """x_seq: (B, HW, C) f32, channels-last.  w*: (C_in, C_out) (W^T of the conv)."""
    b, hw, c = x_seq.shape
    assert c % NUM_GROUPS == 0
    g = NUM_GROUPS
    gs = c // g

    if tq is None:
        tq = _pick_tq(hw)
    assert hw % tq == 0
    n_q = hw // tq
    vmem_limit = _vmem_limit_bytes()

    x_seq = x_seq.astype(jnp.float32)
    gamma2 = gamma.reshape(1, c).astype(jnp.float32)
    beta2 = beta.reshape(1, c).astype(jnp.float32)
    bp2 = bp.reshape(1, c).astype(jnp.float32)

    # Fold the 1/sqrt(C) softmax scale into the q projection, then fuse the
    # three 1x1-conv weights into a single (C, 3C) bf16 matrix.
    scale = float(c) ** -0.5
    w_qkv = jnp.concatenate([wq * scale, wk, wv], axis=1).astype(jnp.bfloat16)
    b_qkv = jnp.concatenate([bq * scale, bk, bv]).reshape(1, 3 * c).astype(jnp.float32)
    wp_b = wp.astype(jnp.bfloat16)

    # Skinny group-aggregation matrices: (C, G) reduce and (G, C) broadcast.
    gid = jnp.arange(c, dtype=jnp.int32) // gs
    red = (gid[:, None] == jnp.arange(g, dtype=jnp.int32)[None, :]).astype(jnp.float32)
    bcast = red.T

    kernel = functools.partial(
        attn_block_kernel, c=c, tq=tq, n_q=n_q, approx_recip=approx_recip,
        exp_dtype=jnp.bfloat16 if exp_in_bf16 else jnp.float32)

    def const(shape):
        return pl.BlockSpec(shape, lambda i: (0,) * len(shape))

    out_seq = pl.pallas_call(
        kernel,
        out_shape=jax.ShapeDtypeStruct((b, hw, c), out_dtype),
        grid_spec=pltpu.PrefetchScalarGridSpec(
            num_scalar_prefetch=0,
            grid=(b,),
            in_specs=[
                pl.BlockSpec((1, hw, c), lambda i: (i, 0, 0)),   # x
                const((1, c)), const((1, c)),                    # gamma, beta
                const((c, g)), const((g, c)),                    # group reduce / bcast
                const((c, 3 * c)), const((1, 3 * c)),            # fused W_qkv, b_qkv
                const((c, c)), const((1, c)),                    # wp, bp
            ],
            out_specs=pl.BlockSpec((1, hw, c), lambda i: (i, 0, 0)),
            scratch_shapes=[
                pltpu.VMEM((hw, c), jnp.bfloat16),   # q
                pltpu.VMEM((c, hw), jnp.bfloat16),   # k^T (transposed once)
                pltpu.VMEM((hw, c), jnp.bfloat16),   # v
            ],
        ),
        compiler_params=pltpu.CompilerParams(
            dimension_semantics=("parallel",),
            vmem_limit_bytes=vmem_limit),
    )(x_seq, gamma2, beta2, red, bcast, w_qkv, b_qkv, wp_b, bp2)

    return out_seq


def attn_block(x_nchw, gamma, beta, wq, bq, wk, bk, wv, bv, wp, bp, *, tq=None):
    """NCHW adapter.  TODO(synk): keep the whole decoder channels-last so these
    two transposes (a full HBM read+write each) never materialise."""
    b, c, h, w = x_nchw.shape
    hw = h * w
    x_seq = jnp.transpose(x_nchw.reshape(b, c, hw), (0, 2, 1))
    out_seq = attn_block_seq(x_seq, gamma, beta, wq, bq, wk, bk, wv, bv, wp, bp,
                             tq=tq)
    return jnp.transpose(out_seq, (0, 2, 1)).reshape(b, c, h, w)


# --------------------------------------------------------------------------
# Pure-JAX f32 reference matching the PyTorch forward exactly
# --------------------------------------------------------------------------
def reference_attn_block(x, gamma, beta, wq, bq, wk, bk, wv, bv, wp, bp):
    b, c, h, w = x.shape
    gs = c // NUM_GROUPS
    xg = x.reshape(b, NUM_GROUPS, gs * h * w)
    mu = xg.mean(axis=-1, keepdims=True)
    var = xg.var(axis=-1, keepdims=True)
    hn = ((xg - mu) / jnp.sqrt(var + EPS)).reshape(b, c, h, w)
    hn = hn * gamma.reshape(1, c, 1, 1) + beta.reshape(1, c, 1, 1)

    def conv1x1(t, wt, bias):  # wt is (C_in, C_out)
        ts = jnp.transpose(t.reshape(b, c, h * w), (0, 2, 1))
        ys = ts @ wt + bias.reshape(1, 1, c)
        return jnp.transpose(ys, (0, 2, 1)).reshape(b, c, h, w)

    q = conv1x1(hn, wq, bq).reshape(b, c, h * w).transpose(0, 2, 1)  # (B,HW,C)
    k = conv1x1(hn, wk, bk).reshape(b, c, h * w)                     # (B,C,HW)
    v = conv1x1(hn, wv, bv).reshape(b, c, h * w)                     # (B,C,HW)
    w_ = jnp.einsum("bqc,bck->bqk", q, k) * (int(c) ** -0.5)
    w_ = jax.nn.softmax(w_, axis=2)
    h_ = jnp.einsum("bck,bqk->bcq", v, w_).reshape(b, c, h, w)
    h_ = conv1x1(h_, wp, bp)
    return x + h_


if __name__ == "__main__":
    # Lane-dense channel count (multiple of 128) and divisible by num_groups=32.
    B, C, H, W = 2, 128, 16, 16

    key = jax.random.PRNGKey(0)
    keys = jax.random.split(key, 12)
    x = jax.random.normal(keys[0], (B, C, H, W), dtype=jnp.float32)

    gamma = 1.0 + 0.1 * jax.random.normal(keys[1], (C,), dtype=jnp.float32)
    beta = 0.1 * jax.random.normal(keys[2], (C,), dtype=jnp.float32)

    # PyTorch stores Conv2d 1x1 weight as (C_out, C_in, 1, 1); we pass W^T.
    def make_w(k):
        return (jax.random.normal(k, (C, C), dtype=jnp.float32) / jnp.sqrt(C)).T

    wq, bq = make_w(keys[3]), 0.01 * jax.random.normal(keys[4], (C,), dtype=jnp.float32)
    wk, bk = make_w(keys[5]), 0.01 * jax.random.normal(keys[6], (C,), dtype=jnp.float32)
    wv, bv = make_w(keys[7]), 0.01 * jax.random.normal(keys[8], (C,), dtype=jnp.float32)
    wp, bp = make_w(keys[9]), 0.01 * jax.random.normal(keys[10], (C,), dtype=jnp.float32)

    # tq=128 exercises the in-kernel Q-tile loop (HW = 256 -> 2 tiles/batch).
    out = attn_block(x, gamma, beta, wq, bq, wk, bk, wv, bv, wp, bp, tq=128)
    out = jax.block_until_ready(out)

    ref = reference_attn_block(x, gamma, beta, wq, bq, wk, bk, wv, bv, wp, bp)
    assert out.shape == (B, C, H, W)
    # Kernel uses bf16 MXU operands / bf16 exp with f32 accumulation;
    # tolerance is loosened vs. the pure-f32 reference accordingly.
    max_err = float(jnp.max(jnp.abs(out - ref)))
    assert jnp.allclose(out, ref, atol=5e-2, rtol=5e-2), max_err

    print("KERNEL_OK")
</pallas_src>

<mosaic_0001>
module attributes {stable_mosaic.version = 11 : i64} {
  func.func @attn_block_kernel(%arg0: i32, %arg1: memref<1x256x128xf32, #tpu.memory_space<vmem>>, %arg2: memref<1x128xf32, #tpu.memory_space<vmem>>, %arg3: memref<1x128xf32, #tpu.memory_space<vmem>>, %arg4: memref<128x32xf32, #tpu.memory_space<vmem>>, %arg5: memref<32x128xf32, #tpu.memory_space<vmem>>, %arg6: memref<128x384xbf16, #tpu.memory_space<vmem>>, %arg7: memref<1x384xf32, #tpu.memory_space<vmem>>, %arg8: memref<128x128xbf16, #tpu.memory_space<vmem>>, %arg9: memref<1x128xf32, #tpu.memory_space<vmem>>, %arg10: memref<1x256x128xf32, #tpu.memory_space<vmem>>, %arg11: memref<256x128xbf16, #tpu.memory_space<vmem>>, %arg12: memref<128x256xbf16, #tpu.memory_space<vmem>>, %arg13: memref<256x128xbf16, #tpu.memory_space<vmem>>) attributes {dimension_semantics = [#tpu.dimension_semantics<parallel>], iteration_bounds = array<i64: 2>, scalar_prefetch = 0 : i64, scratch_operands = 3 : i64, tpu.core_type = #tpu.core_type<tc>, window_params = [{transform_indices = @transform_0, window_bounds = array<i64: 1, 256, 128>}, {pipeline_mode = #tpu.pipeline_mode<synchronous>, transform_indices = @transform_1, window_bounds = array<i64: 1, 128>}, {pipeline_mode = #tpu.pipeline_mode<synchronous>, transform_indices = @transform_2, window_bounds = array<i64: 1, 128>}, {pipeline_mode = #tpu.pipeline_mode<synchronous>, transform_indices = @transform_3, window_bounds = array<i64: 128, 32>}, {pipeline_mode = #tpu.pipeline_mode<synchronous>, transform_indices = @transform_4, window_bounds = array<i64: 32, 128>}, {pipeline_mode = #tpu.pipeline_mode<synchronous>, transform_indices = @transform_5, window_bounds = array<i64: 128, 384>}, {pipeline_mode = #tpu.pipeline_mode<synchronous>, transform_indices = @transform_6, window_bounds = array<i64: 1, 384>}, {pipeline_mode = #tpu.pipeline_mode<synchronous>, transform_indices = @transform_7, window_bounds = array<i64: 128, 128>}, {pipeline_mode = #tpu.pipeline_mode<synchronous>, transform_indices = @transform_8, window_bounds = array<i64: 1, 128>}, {transform_indices = @transform_9, window_bounds = array<i64: 1, 256, 128>}]} {
    %c0 = arith.constant 0 : index
    %c0_0 = arith.constant 0 : index
    %c0_1 = arith.constant 0 : index
    %0 = vector.load %arg1[%c0, %c0_0, %c0_1] : memref<1x256x128xf32, #tpu.memory_space<vmem>>, vector<1x256x128xf32>
    %1 = vector.shape_cast %0 : vector<1x256x128xf32> to vector<256x128xf32>
    %cst = arith.constant dense<0.000000e+00> : vector<128xf32>
    %2 = vector.multi_reduction <add>, %1, %cst [0] : vector<256x128xf32> to vector<128xf32>
    %3 = vector.shape_cast %2 : vector<128xf32> to vector<1x128xf32>
    %c0_2 = arith.constant 0 : index
    %c0_3 = arith.constant 0 : index
    %4 = vector.load %arg4[%c0_2, %c0_3] : memref<128x32xf32, #tpu.memory_space<vmem>>, vector<128x32xf32>
    %cst_4 = arith.constant dense<0.000000e+00> : vector<1x32xf32>
    %5 = tpu.matmul %3, %4, %cst_4 {dimension_numbers = #tpu.dot_dimension_numbers<[1], [0], [0], [1], [0, 0, 1, 1], [], []>} : vector<1x128xf32>, vector<128x32xf32>, vector<1x32xf32> -> vector<1x32xf32>
    %cst_5 = arith.constant 1.024000e+03 : f32
    %6 = vector.broadcast %cst_5 : f32 to vector<1x32xf32>
    %7 = arith.divf %5, %6 : vector<1x32xf32>
    %c0_6 = arith.constant 0 : index
    %c0_7 = arith.constant 0 : index
    %8 = vector.load %arg5[%c0_6, %c0_7] : memref<32x128xf32, #tpu.memory_space<vmem>>, vector<32x128xf32>
    %cst_8 = arith.constant dense<0.000000e+00> : vector<1x128xf32>
    %9 = tpu.matmul %7, %8, %cst_8 {dimension_numbers = #tpu.dot_dimension_numbers<[1], [0], [0], [1], [0, 0, 1, 1], [], []>} : vector<1x32xf32>, vector<32x128xf32>, vector<1x128xf32> -> vector<1x128xf32>
    %10 = vector.broadcast %9 : vector<1x128xf32> to vector<256x128xf32>
    %11 = arith.subf %1, %10 : vector<256x128xf32>
    %12 = arith.mulf %11, %11 : vector<256x128xf32>
    %cst_9 = arith.constant dense<0.000000e+00> : vector<128xf32>
    %13 = vector.multi_reduction <add>, %12, %cst_9 [0] : vector<256x128xf32> to vector<128xf32>
    %14 = vector.shape_cast %13 : vector<128xf32> to vector<1x128xf32>
    %c0_10 = arith.constant 0 : index
    %c0_11 = arith.constant 0 : index
    %15 = vector.load %arg4[%c0_10, %c0_11] : memref<128x32xf32, #tpu.memory_space<vmem>>, vector<128x32xf32>
    %cst_12 = arith.constant dense<0.000000e+00> : vector<1x32xf32>
    %16 = tpu.matmul %14, %15, %cst_12 {dimension_numbers = #tpu.dot_dimension_numbers<[1], [0], [0], [1], [0, 0, 1, 1], [], []>} : vector<1x128xf32>, vector<128x32xf32>, vector<1x32xf32> -> vector<1x32xf32>
    %cst_13 = arith.constant 1.024000e+03 : f32
    %17 = vector.broadcast %cst_13 : f32 to vector<1x32xf32>
    %18 = arith.divf %16, %17 : vector<1x32xf32>
    %cst_14 = arith.constant 9.99999997E-7 : f32
    %19 = vector.broadcast %cst_14 : f32 to vector<1x32xf32>
    %20 = arith.addf %18, %19 : vector<1x32xf32>
    %21 = math.rsqrt %20 : vector<1x32xf32>
    %c0_15 = arith.constant 0 : index
    %c0_16 = arith.constant 0 : index
    %22 = vector.load %arg5[%c0_15, %c0_16] : memref<32x128xf32, #tpu.memory_space<vmem>>, vector<32x128xf32>
    %cst_17 = arith.constant dense<0.000000e+00> : vector<1x128xf32>
    %23 = tpu.matmul %21, %22, %cst_17 {dimension_numbers = #tpu.dot_dimension_numbers<[1], [0], [0], [1], [0, 0, 1, 1], [], []>} : vector<1x32xf32>, vector<32x128xf32>, vector<1x128xf32> -> vector<1x128xf32>
    %c0_18 = arith.constant 0 : index
    %c0_19 = arith.constant 0 : index
    %24 = vector.load %arg2[%c0_18, %c0_19] : memref<1x128xf32, #tpu.memory_space<vmem>>, vector<1x128xf32>
    %25 = arith.mulf %23, %24 : vector<1x128xf32>
    %26 = vector.broadcast %25 : vector<1x128xf32> to vector<256x128xf32>
    %27 = arith.mulf %11, %26 : vector<256x128xf32>
    %c0_20 = arith.constant 0 : index
    %c0_21 = arith.constant 0 : index
    %28 = vector.load %arg3[%c0_20, %c0_21] : memref<1x128xf32, #tpu.memory_space<vmem>>, vector<1x128xf32>
    %29 = vector.broadcast %28 : vector<1x128xf32> to vector<256x128xf32>
    %30 = arith.addf %27, %29 : vector<256x128xf32>
    %31 = arith.truncf %30 : vector<256x128xf32> to vector<256x128xbf16>
    %c0_22 = arith.constant 0 : index
    %c0_23 = arith.constant 0 : index
    %32 = vector.load %arg6[%c0_22, %c0_23] : memref<128x384xbf16, #tpu.memory_space<vmem>>, vector<128x384xbf16>
    %cst_24 = arith.constant dense<0.000000e+00> : vector<256x384xf32>
    %33 = tpu.matmul %31, %32, %cst_24 {dimension_numbers = #tpu.dot_dimension_numbers<[1], [0], [0], [1], [0, 0, 1, 1], [], []>} : vector<256x128xbf16>, vector<128x384xbf16>, vector<256x384xf32> -> vector<256x384xf32>
    %c0_25 = arith.constant 0 : index
    %c0_26 = arith.constant 0 : index
    %34 = vector.load %arg7[%c0_25, %c0_26] : memref<1x384xf32, #tpu.memory_space<vmem>>, vector<1x384xf32>
    %35 = vector.broadcast %34 : vector<1x384xf32> to vector<256x384xf32>
    %36 = arith.addf %33, %35 : vector<256x384xf32>
    %37 = vector.extract_strided_slice %36 {offsets = [0, 0], sizes = [256, 128], strides = [1, 1]} : vector<256x384xf32> to vector<256x128xf32>
    %38 = arith.truncf %37 : vector<256x128xf32> to vector<256x128xbf16>
    %c0_27 = arith.constant 0 : index
    %c0_28 = arith.constant 0 : index
    %39 = vector.load %arg11[%c0_27, %c0_28] : memref<256x128xbf16, #tpu.memory_space<vmem>>, vector<256x128xbf16>
    tpu.vector_store %arg11[%c0_27, %c0_28], %38 {strides = array<i32>} : memref<256x128xbf16, #tpu.memory_space<vmem>>, vector<256x128xbf16>,
    %40 = vector.extract_strided_slice %36 {offsets = [0, 256], sizes = [256, 128], strides = [1, 1]} : vector<256x384xf32> to vector<256x128xf32>
    %41 = arith.truncf %40 : vector<256x128xf32> to vector<256x128xbf16>
    %c0_29 = arith.constant 0 : index
    %c0_30 = arith.constant 0 : index
    %42 = vector.load %arg13[%c0_29, %c0_30] : memref<256x128xbf16, #tpu.memory_space<vmem>>, vector<256x128xbf16>
    tpu.vector_store %arg13[%c0_29, %c0_30], %41 {strides = array<i32>} : memref<256x128xbf16, #tpu.memory_space<vmem>>, vector<256x128xbf16>,
    %43 = vector.extract_strided_slice %36 {offsets = [0, 128], sizes = [256, 128], strides = [1, 1]} : vector<256x384xf32> to vector<256x128xf32>
    %44 = tpu.transpose %43, [1, 0] : vector<256x128xf32> -> vector<128x256xf32>
    %45 = arith.truncf %44 : vector<128x256xf32> to vector<128x256xbf16>
    %c0_31 = arith.constant 0 : index
    %c0_32 = arith.constant 0 : index
    %46 = vector.load %arg12[%c0_31, %c0_32] : memref<128x256xbf16, #tpu.memory_space<vmem>>, vector<128x256xbf16>
    tpu.vector_store %arg12[%c0_31, %c0_32], %45 {strides = array<i32>} : memref<128x256xbf16, #tpu.memory_space<vmem>>, vector<128x256xbf16>,
    %c0_i32 = arith.constant 0 : i32
    %c128_i32 = arith.constant 128 : i32
    %47 = arith.muli %c0_i32, %c128_i32 : i32
    %48 = tpu.assume_multiple %47, 128 : i32
    %49 = arith.index_cast %48 : i32 to index
    %c0_33 = arith.constant 0 : index
    %50 = vector.load %arg11[%49, %c0_33] : memref<256x128xbf16, #tpu.memory_space<vmem>>, vector<128x128xbf16>
    %c0_34 = arith.constant 0 : index
    %c0_35 = arith.constant 0 : index
    %51 = vector.load %arg12[%c0_34, %c0_35] : memref<128x256xbf16, #tpu.memory_space<vmem>>, vector<128x256xbf16>
    %cst_36 = arith.constant dense<0.000000e+00> : vector<128x256xf32>
    %52 = tpu.matmul %50, %51, %cst_36 {dimension_numbers = #tpu.dot_dimension_numbers<[1], [0], [0], [1], [0, 0, 1, 1], [], []>} : vector<128x128xbf16>, vector<128x256xbf16>, vector<128x256xf32> -> vector<128x256xf32>
    %cst_37 = arith.constant dense<0xFF800000> : vector<128xf32>
    %53 = vector.multi_reduction <maximumf>, %52, %cst_37 [1] : vector<128x256xf32> to vector<128xf32>
    %54 = vector.shape_cast %53 : vector<128xf32> to vector<128x1xf32>
    %55 = vector.broadcast %54 : vector<128x1xf32> to vector<128x256xf32>
    %56 = arith.subf %52, %55 : vector<128x256xf32>
    %57 = arith.truncf %56 : vector<128x256xf32> to vector<128x256xbf16>
    %58 = math.exp %57 : vector<128x256xbf16>
    %59 = arith.extf %58 : vector<128x256xbf16> to vector<128x256xf32>
    %cst_38 = arith.constant dense<0.000000e+00> : vector<128xf32>
    %60 = vector.multi_reduction <add>, %59, %cst_38 [1] : vector<128x256xf32> to vector<128xf32>
    %61 = vector.shape_cast %60 : vector<128xf32> to vector<128x1xf32>
    %c0_39 = arith.constant 0 : index
    %c0_40 = arith.constant 0 : index
    %62 = vector.load %arg13[%c0_39, %c0_40] : memref<256x128xbf16, #tpu.memory_space<vmem>>, vector<256x128xbf16>
    %cst_41 = arith.constant dense<0.000000e+00> : vector<128x128xf32>
    %63 = tpu.matmul %58, %62, %cst_41 {dimension_numbers = #tpu.dot_dimension_numbers<[1], [0], [0], [1], [0, 0, 1, 1], [], []>} : vector<128x256xbf16>, vector<256x128xbf16>, vector<128x128xf32> -> vector<128x128xf32>
    %64 = tpu.reciprocal %61 {approx = true} : vector<128x1xf32> -> vector<128x1xf32>
    %65 = vector.broadcast %64 : vector<128x1xf32> to vector<128x128xf32>
    %66 = arith.mulf %63, %65 : vector<128x128xf32>
    %67 = arith.truncf %66 : vector<128x128xf32> to vector<128x128xbf16>
    %c0_42 = arith.constant 0 : index
    %c0_43 = arith.constant 0 : index
    %68 = vector.load %arg8[%c0_42, %c0_43] : memref<128x128xbf16, #tpu.memory_space<vmem>>, vector<128x128xbf16>
    %cst_44 = arith.constant dense<0.000000e+00> : vector<128x128xf32>
    %69 = tpu.matmul %67, %68, %cst_44 {dimension_numbers = #tpu.dot_dimension_numbers<[1], [0], [0], [1], [0, 0, 1, 1], [], []>} : vector<128x128xbf16>, vector<128x128xbf16>, vector<128x128xf32> -> vector<128x128xf32>
    %c0_45 = arith.constant 0 : index
    %c0_46 = arith.constant 0 : index
    %70 = vector.load %arg9[%c0_45, %c0_46] : memref<1x128xf32, #tpu.memory_space<vmem>>, vector<1x128xf32>
    %71 = vector.broadcast %70 : vector<1x128xf32> to vector<128x128xf32>
    %72 = arith.addf %69, %71 : vector<128x128xf32>
    %c0_47 = arith.constant 0 : index
    %73 = arith.index_cast %48 : i32 to index
    %c0_48 = arith.constant 0 : index
    %74 = vector.load %arg1[%c0_47, %73, %c0_48] : memref<1x256x128xf32, #tpu.memory_space<vmem>>, vector<1x128x128xf32>
    %75 = vector.shape_cast %74 : vector<1x128x128xf32> to vector<128x128xf32>
    %76 = arith.addf %75, %72 : vector<128x128xf32>
    %c0_49 = arith.constant 0 : index
    %77 = arith.index_cast %48 : i32 to index
    %c0_50 = arith.constant 0 : index
    %78 = vector.load %arg10[%c0_49, %77, %c0_50] : memref<1x256x128xf32, #tpu.memory_space<vmem>>, vector<1x128x128xf32>
    %79 = vector.shape_cast %78 : vector<1x128x128xf32> to vector<128x128xf32>
    %80 = vector.shape_cast %76 : vector<128x128xf32> to vector<1x128x128xf32>
    tpu.vector_store %arg10[%c0_49, %77, %c0_50], %80 {strides = array<i32>} : memref<1x256x128xf32, #tpu.memory_space<vmem>>, vector<1x128x128xf32>,
    %c1_i32 = arith.constant 1 : i32
    %c128_i32_51 = arith.constant 128 : i32
    %81 = arith.muli %c1_i32, %c128_i32_51 : i32
    %82 = tpu.assume_multiple %81, 128 : i32
    %83 = arith.index_cast %82 : i32 to index
    %c0_52 = arith.constant 0 : index
    %84 = vector.load %arg11[%83, %c0_52] : memref<256x128xbf16, #tpu.memory_space<vmem>>, vector<128x128xbf16>
    %c0_53 = arith.constant 0 : index
    %c0_54 = arith.constant 0 : index
    %85 = vector.load %arg12[%c0_53, %c0_54] : memref<128x256xbf16, #tpu.memory_space<vmem>>, vector<128x256xbf16>
    %cst_55 = arith.constant dense<0.000000e+00> : vector<128x256xf32>
    %86 = tpu.matmul %84, %85, %cst_55 {dimension_numbers = #tpu.dot_dimension_numbers<[1], [0], [0], [1], [0, 0, 1, 1], [], []>} : vector<128x128xbf16>, vector<128x256xbf16>, vector<128x256xf32> -> vector<128x256xf32>
    %cst_56 = arith.constant dense<0xFF800000> : vector<128xf32>
    %87 = vector.multi_reduction <maximumf>, %86, %cst_56 [1] : vector<128x256xf32> to vector<128xf32>
    %88 = vector.shape_cast %87 : vector<128xf32> to vector<128x1xf32>
    %89 = vector.broadcast %88 : vector<128x1xf32> to vector<128x256xf32>
    %90 = arith.subf %86, %89 : vector<128x256xf32>
    %91 = arith.truncf %90 : vector<128x256xf32> to vector<128x256xbf16>
    %92 = math.exp %91 : vector<128x256xbf16>
    %93 = arith.extf %92 : vector<128x256xbf16> to vector<128x256xf32>
    %cst_57 = arith.constant dense<0.000000e+00> : vector<128xf32>
    %94 = vector.multi_reduction <add>, %93, %cst_57 [1] : vector<128x256xf32> to vector<128xf32>
    %95 = vector.shape_cast %94 : vector<128xf32> to vector<128x1xf32>
    %c0_58 = arith.constant 0 : index
    %c0_59 = arith.constant 0 : index
    %96 = vector.load %arg13[%c0_58, %c0_59] : memref<256x128xbf16, #tpu.memory_space<vmem>>, vector<256x128xbf16>
    %cst_60 = arith.constant dense<0.000000e+00> : vector<128x128xf32>
    %97 = tpu.matmul %92, %96, %cst_60 {dimension_numbers = #tpu.dot_dimension_numbers<[1], [0], [0], [1], [0, 0, 1, 1], [], []>} : vector<128x256xbf16>, vector<256x128xbf16>, vector<128x128xf32> -> vector<128x128xf32>
    %98 = tpu.reciprocal %95 {approx = true} : vector<128x1xf32> -> vector<128x1xf32>
    %99 = vector.broadcast %98 : vector<128x1xf32> to vector<128x128xf32>
    %100 = arith.mulf %97, %99 : vector<128x128xf32>
    %101 = arith.truncf %100 : vector<128x128xf32> to vector<128x128xbf16>
    %c0_61 = arith.constant 0 : index
    %c0_62 = arith.constant 0 : index
    %102 = vector.load %arg8[%c0_61, %c0_62] : memref<128x128xbf16, #tpu.memory_space<vmem>>, vector<128x128xbf16>
    %cst_63 = arith.constant dense<0.000000e+00> : vector<128x128xf32>
    %103 = tpu.matmul %101, %102, %cst_63 {dimension_numbers = #tpu.dot_dimension_numbers<[1], [0], [0], [1], [0, 0, 1, 1], [], []>} : vector<128x128xbf16>, vector<128x128xbf16>, vector<128x128xf32> -> vector<128x128xf32>
    %c0_64 = arith.constant 0 : index
    %c0_65 = arith.constant 0 : index
    %104 = vector.load %arg9[%c0_64, %c0_65] : memref<1x128xf32, #tpu.memory_space<vmem>>, vector<1x128xf32>
    %105 = vector.broadcast %104 : vector<1x128xf32> to vector<128x128xf32>
    %106 = arith.addf %103, %105 : vector<128x128xf32>
    %c0_66 = arith.constant 0 : index
    %107 = arith.index_cast %82 : i32 to index
    %c0_67 = arith.constant 0 : index
    %108 = vector.load %arg1[%c0_66, %107, %c0_67] : memref<1x256x128xf32, #tpu.memory_space<vmem>>, vector<1x128x128xf32>
    %109 = vector.shape_cast %108 : vector<1x128x128xf32> to vector<128x128xf32>
    %110 = arith.addf %109, %106 : vector<128x128xf32>
    %c0_68 = arith.constant 0 : index
    %111 = arith.index_cast %82 : i32 to index
    %c0_69 = arith.constant 0 : index
    %112 = vector.load %arg10[%c0_68, %111, %c0_69] : memref<1x256x128xf32, #tpu.memory_space<vmem>>, vector<1x128x128xf32>
    %113 = vector.shape_cast %112 : vector<1x128x128xf32> to vector<128x128xf32>
    %114 = vector.shape_cast %110 : vector<128x128xf32> to vector<1x128x128xf32>
    tpu.vector_store %arg10[%c0_68, %111, %c0_69], %114 {strides = array<i32>} : memref<1x256x128xf32, #tpu.memory_space<vmem>>, vector<1x128x128xf32>,
    %c2_i32 = arith.constant 2 : i32
    return
  }
  func.func @transform_0(%arg0: i32) -> (i32, i32, i32) {
    %c0_i32 = arith.constant 0 : i32
    %c0_i32_0 = arith.constant 0 : i32
    %c0_i32_1 = arith.constant 0 : i32
    return %arg0, %c0_i32, %c0_i32_0 : i32, i32, i32
  }
  func.func @transform_1(%arg0: i32) -> (i32, i32) {
    %c0_i32 = arith.constant 0 : i32
    %c0_i32_0 = arith.constant 0 : i32
    %c0_i32_1 = arith.constant 0 : i32
    return %c0_i32, %c0_i32_0 : i32, i32
  }
  func.func @transform_2(%arg0: i32) -> (i32, i32) {
    %c0_i32 = arith.constant 0 : i32
    %c0_i32_0 = arith.constant 0 : i32
    %c0_i32_1 = arith.constant 0 : i32
    return %c0_i32, %c0_i32_0 : i32, i32
  }
  func.func @transform_3(%arg0: i32) -> (i32, i32) {
    %c0_i32 = arith.constant 0 : i32
    %c0_i32_0 = arith.constant 0 : i32
    %c0_i32_1 = arith.constant 0 : i32
    return %c0_i32, %c0_i32_0 : i32, i32
  }
  func.func @transform_4(%arg0: i32) -> (i32, i32) {
    %c0_i32 = arith.constant 0 : i32
    %c0_i32_0 = arith.constant 0 : i32
    %c0_i32_1 = arith.constant 0 : i32
    return %c0_i32, %c0_i32_0 : i32, i32
  }
  func.func @transform_5(%arg0: i32) -> (i32, i32) {
    %c0_i32 = arith.constant 0 : i32
    %c0_i32_0 = arith.constant 0 : i32
    %c0_i32_1 = arith.constant 0 : i32
    return %c0_i32, %c0_i32_0 : i32, i32
  }
  func.func @transform_6(%arg0: i32) -> (i32, i32) {
    %c0_i32 = arith.constant 0 : i32
    %c0_i32_0 = arith.constant 0 : i32
    %c0_i32_1 = arith.constant 0 : i32
    return %c0_i32, %c0_i32_0 : i32, i32
  }
  func.func @transform_7(%arg0: i32) -> (i32, i32) {
    %c0_i32 = arith.constant 0 : i32
    %c0_i32_0 = arith.constant 0 : i32
    %c0_i32_1 = arith.constant 0 : i32
    return %c0_i32, %c0_i32_0 : i32, i32
  }
  func.func @transform_8(%arg0: i32) -> (i32, i32) {
    %c0_i32 = arith.constant 0 : i32
    %c0_i32_0 = arith.constant 0 : i32
    %c0_i32_1 = arith.constant 0 : i32
    return %c0_i32, %c0_i32_0 : i32, i32
  }
  func.func @transform_9(%arg0: i32) -> (i32, i32, i32) {
    %c0_i32 = arith.constant 0 : i32
    %c0_i32_0 = arith.constant 0 : i32
    %c0_i32_1 = arith.constant 0 : i32
    return %arg0, %c0_i32, %c0_i32_0 : i32, i32, i32
  }
}

</mosaic_0001>

<llo_original>
// kernel: attn_block_seq.1
$region0: #{attn_block_seq.1}
  #allocation0 [shape = 'u32[]', space=smem, size = 0x4, offset = 0x4, fixed_abs, tag = 'smem constant byte address 0x4 - core index']
  #allocation1 [shape = 'u32[144,128]{1,0:T(1,128)}', space=vmem, size = 0x12000, scoped, tag = 'internal scratch']
  #allocation2 [shape = 'bf16[256,128]{1,0:T(16,128)(2,1)}', space=vmem, size = 0x10000, scoped, tag = 'scratch operand']
  #allocation3 [shape = 'bf16[128,256]{1,0:T(16,128)(2,1)}', space=vmem, size = 0x10000, scoped, tag = 'scratch operand']
  #allocation4 [shape = 'bf16[256,128]{1,0:T(16,128)(2,1)}', space=vmem, size = 0x10000, scoped, tag = 'scratch operand']
  %s0 = inlined_call_operand.vmem [shape: f32[2,256,128], index: 0, kind: input, shape index: {}]
  %s1 = inlined_call_operand.vmem [shape: f32[1,128], index: 1, kind: input, shape index: {}]
  %s2 = inlined_call_operand.vmem [shape: f32[1,128], index: 2, kind: input, shape index: {}]
  %s3 = inlined_call_operand.vmem [shape: f32[128,32], index: 3, kind: input, shape index: {}]
  %s4 = inlined_call_operand.vmem [shape: f32[32,128], index: 4, kind: input, shape index: {}]
  %s5 = inlined_call_operand.vmem [shape: bf16[128,384], index: 5, kind: input, shape index: {}]
  %s6 = inlined_call_operand.vmem [shape: f32[1,384], index: 6, kind: input, shape index: {}]
  %s7 = inlined_call_operand.vmem [shape: bf16[128,128], index: 7, kind: input, shape index: {}]
  %s8 = inlined_call_operand.vmem [shape: f32[1,128], index: 8, kind: input, shape index: {}]
  %s9 = inlined_call_operand.hbm [shape: f32[2,256,128], index: 9, kind: output, shape index: {}]
  %s10 = sld [smem:[#allocation0]]
  $region69: #{attn_block_seq.1} parent=0
    _
  %s12 = ssub.s32 1, %s10
  %s13 = scalar_select 0, %s12, %s10
  $region1: #{attn_block_seq.1} parent=0
    #allocation5 [shape = 'u8[262144]{0}', space=vmem, size = 0x40000, scoped, tag = 'output window, operand 0']
    #allocation6 [shape = 's32[2]{0}', space=sflag, size = 0x8, scoped, tag = 'scoped memory for attn_block_seq.1']
    %14 = vsyncpa [#allocation6], 0
    %s15 = scalar_lea.sflag [#allocation6], 1
    %16 = vsyncpa %s15, 0
    loop: start=0, step=1, limit=4
    $region2: #{attn_block_seq.1} parent=1 // loop_pre_header
      _
    $region3: #{attn_block_seq.1} parent=1 // loop_header
      %s18 = sphi 0, %s22
      %p19 = scmp.ge.s32.totalorder %s18, 4
      %s28 = sphi 0, %s30
      %s31 = sphi 0, %s28
      %s32 = sphi 0, %s31
      %s48 = sphi 0, %s32
      %s52 = sphi 0, %s52
      %s54 = sphi 0, %s52
      %s55 = sphi 0, %s54
      %s69 = sphi 0, %s55
      %s73 = sphi 0, %s73
      %s75 = sphi 0, %s73
      %s76 = sphi 0, %s75
      %s90 = sphi 0, %s76
      %s94 = sphi 0, %s94
      %s96 = sphi 0, %s94
      %s97 = sphi 0, %s96
      %s111 = sphi 0, %s97
      %s115 = sphi 0, %s115
      %s117 = sphi 0, %s115
      %s118 = sphi 0, %s117
      %s132 = sphi 0, %s118
      %s136 = sphi 0, %s136
      %s138 = sphi 0, %s136
      %s139 = sphi 0, %s138
      %s153 = sphi 0, %s139
      %s157 = sphi 0, %s157
      %s159 = sphi 0, %s157
      %s160 = sphi 0, %s159
      %s174 = sphi 0, %s160
      %s178 = sphi 0, %s178
      %s180 = sphi 0, %s178
      %s181 = sphi 0, %s180
      %s195 = sphi 0, %s181
      %s199 = sphi 0, %s199
      %s201 = sphi 0, %s199
      %s202 = sphi 0, %s201
      %s216 = sphi 0, %s202
      %s222 = sphi 0, %s224
      %s225 = sphi 0, %s222
      %s226 = sphi 0, %s225
      %s242 = sphi 0, %s226
    $region4: #{attn_block_seq.1} parent=1 // loop_header_branch
      %21 = sbr.rel (%p19) target = $region8
    $region5: #{attn_block_seq.1} parent=1 // loop_body
      %s23 = ssub.s32 %s18, 1
      %s24 = ssub.s32 %s18, 2
      %s25 = sadd.s32 %s18, 1
      %s26 = ssub.s32 %s18, %s25
      %p27 = scmp.eq.s32.totalorder %s26, 0
      %s29 = sadd.s32 %s28, 1
      %s30 = scalar_select %p27, %s28, %s29
      %p33 = pneg %p27
      %p34 = scmp.eq.s32.totalorder %s18, 1
      %p35 = por %p33, %p34
      %p36 = scmp.ne.s32.totalorder %s28, %s31
      %p37 = scmp.eq.s32.totalorder %s18, 0
      %p38 = por %p36, %p37
      %p39 = scmp.ne.s32.totalorder %s28, %s31
      %p40 = scmp.eq.s32.totalorder %s23, 1
      %p41 = por %p39, %p40
      %p42 = scmp.ne.s32.totalorder %s31, %s32
      %p43 = scmp.eq.s32.totalorder %s23, 0
      %p44 = por %p42, %p43
      %p45 = scmp.ne.s32.totalorder %s31, %s32
      %p46 = scmp.eq.s32.totalorder %s24, 1
      %p47 = por %p45, %p46
      %p49 = scmp.ne.s32.totalorder %s32, %s48
      %p50 = scmp.eq.s32.totalorder %s24, 0
      %p51 = por %p49, %p50
      %s53 = sadd.s32 %s52, 1
      %p56 = scmp.eq.s32.totalorder %s18, 1
      %p57 = scmp.ne.s32.totalorder %s52, %s54
      %p58 = scmp.eq.s32.totalorder %s18, 0
      %p59 = por %p57, %p58
      %p60 = scmp.ne.s32.totalorder %s52, %s54
      %p61 = scmp.eq.s32.totalorder %s23, 1
      %p62 = por %p60, %p61
      %p63 = scmp.ne.s32.totalorder %s54, %s55
      %p64 = scmp.eq.s32.totalorder %s23, 0
      %p65 = por %p63, %p64
      %p66 = scmp.ne.s32.totalorder %s54, %s55
      %p67 = scmp.eq.s32.totalorder %s24, 1
      %p68 = por %p66, %p67
      %p70 = scmp.ne.s32.totalorder %s55, %s69
      %p71 = scmp.eq.s32.totalorder %s24, 0
      %p72 = por %p70, %p71
      %s74 = sadd.s32 %s73, 1
      %p77 = scmp.eq.s32.totalorder %s18, 1
      %p78 = scmp.ne.s32.totalorder %s73, %s75
      %p79 = scmp.eq.s32.totalorder %s18, 0
      %p80 = por %p78, %p79
      %p81 = scmp.ne.s32.totalorder %s73, %s75
      %p82 = scmp.eq.s32.totalorder %s23, 1
      %p83 = por %p81, %p82
      %p84 = scmp.ne.s32.totalorder %s75, %s76
      %p85 = scmp.eq.s32.totalorder %s23, 0
      %p86 = por %p84, %p85
      %p87 = scmp.ne.s32.totalorder %s75, %s76
      %p88 = scmp.eq.s32.totalorder %s24, 1
      %p89 = por %p87, %p88
      %p91 = scmp.ne.s32.totalorder %s76, %s90
      %p92 = scmp.eq.s32.totalorder %s24, 0
      %p93 = por %p91, %p92
      %s95 = sadd.s32 %s94, 1
      %p98 = scmp.eq.s32.totalorder %s18, 1
      %p99 = scmp.ne.s32.totalorder %s94, %s96
      %p100 = scmp.eq.s32.totalorder %s18, 0
      %p101 = por %p99, %p100
      %p102 = scmp.ne.s32.totalorder %s94, %s96
      %p103 = scmp.eq.s32.totalorder %s23, 1
      %p104 = por %p102, %p103
      %p105 = scmp.ne.s32.totalorder %s96, %s97
      %p106 = scmp.eq.s32.totalorder %s23, 0
      %p107 = por %p105, %p106
      %p108 = scmp.ne.s32.totalorder %s96, %s97
      %p109 = scmp.eq.s32.totalorder %s24, 1
      %p110 = por %p108, %p109
      %p112 = scmp.ne.s32.totalorder %s97, %s111
      %p113 = scmp.eq.s32.totalorder %s24, 0
      %p114 = por %p112, %p113
      %s116 = sadd.s32 %s115, 1
      %p119 = scmp.eq.s32.totalorder %s18, 1
      %p120 = scmp.ne.s32.totalorder %s115, %s117
      %p121 = scmp.eq.s32.totalorder %s18, 0
      %p122 = por %p120, %p121
      %p123 = scmp.ne.s32.totalorder %s115, %s117
      %p124 = scmp.eq.s32.totalorder %s23, 1
      %p125 = por %p123, %p124
      %p126 = scmp.ne.s32.totalorder %s117, %s118
      %p127 = scmp.eq.s32.totalorder %s23, 0
      %p128 = por %p126, %p127
      %p129 = scmp.ne.s32.totalorder %s117, %s118
      %p130 = scmp.eq.s32.totalorder %s24, 1
      %p131 = por %p129, %p130
      %p133 = scmp.ne.s32.totalorder %s118, %s132
      %p134 = scmp.eq.s32.totalorder %s24, 0
      %p135 = por %p133, %p134
      %s137 = sadd.s32 %s136, 1
      %p140 = scmp.eq.s32.totalorder %s18, 1
      %p141 = scmp.ne.s32.totalorder %s136, %s138
      %p142 = scmp.eq.s32.totalorder %s18, 0
      %p143 = por %p141, %p142
      %p144 = scmp.ne.s32.totalorder %s136, %s138
      %p145 = scmp.eq.s32.totalorder %s23, 1
      %p146 = por %p144, %p145
      %p147 = scmp.ne.s32.totalorder %s138, %s139
      %p148 = scmp.eq.s32.totalorder %s23, 0
      %p149 = por %p147, %p148
      %p150 = scmp.ne.s32.totalorder %s138, %s139
      %p151 = scmp.eq.s32.totalorder %s24, 1
      %p152 = por %p150, %p151
      %p154 = scmp.ne.s32.totalorder %s139, %s153
      %p155 = scmp.eq.s32.totalorder %s24, 0
      %p156 = por %p154, %p155
      %s158 = sadd.s32 %s157, 1
      %p161 = scmp.eq.s32.totalorder %s18, 1
      %p162 = scmp.ne.s32.totalorder %s157, %s159
      %p163 = scmp.eq.s32.totalorder %s18, 0
      %p164 = por %p162, %p163
      %p165 = scmp.ne.s32.totalorder %s157, %s159
      %p166 = scmp.eq.s32.totalorder %s23, 1
      %p167 = por %p165, %p166
      %p168 = scmp.ne.s32.totalorder %s159, %s160
      %p169 = scmp.eq.s32.totalorder %s23, 0
      %p170 = por %p168, %p169
      %p171 = scmp.ne.s32.totalorder %s159, %s160
      %p172 = scmp.eq.s32.totalorder %s24, 1
      %p173 = por %p171, %p172
      %p175 = scmp.ne.s32.totalorder %s160, %s174
      %p176 = scmp.eq.s32.totalorder %s24, 0
      %p177 = por %p175, %p176
      %s179 = sadd.s32 %s178, 1
      %p182 = scmp.eq.s32.totalorder %s18, 1
      %p183 = scmp.ne.s32.totalorder %s178, %s180
      %p184 = scmp.eq.s32.totalorder %s18, 0
      %p185 = por %p183, %p184
      %p186 = scmp.ne.s32.totalorder %s178, %s180
      %p187 = scmp.eq.s32.totalorder %s23, 1
      %p188 = por %p186, %p187
      %p189 = scmp.ne.s32.totalorder %s180, %s181
      %p190 = scmp.eq.s32.totalorder %s23, 0
      %p191 = por %p189, %p190
      %p192 = scmp.ne.s32.totalorder %s180, %s181
      %p193 = scmp.eq.s32.totalorder %s24, 1
      %p194 = por %p192, %p193
      %p196 = scmp.ne.s32.totalorder %s181, %s195
      %p197 = scmp.eq.s32.totalorder %s24, 0
      %p198 = por %p196, %p197
      %s200 = sadd.s32 %s199, 1
      %p203 = scmp.eq.s32.totalorder %s18, 1
      %p204 = scmp.ne.s32.totalorder %s199, %s201
      %p205 = scmp.eq.s32.totalorder %s18, 0
      %p206 = por %p204, %p205
      %p207 = scmp.ne.s32.totalorder %s199, %s201
      %p208 = scmp.eq.s32.totalorder %s23, 1
      %p209 = por %p207, %p208
      %p210 = scmp.ne.s32.totalorder %s201, %s202
      %p211 = scmp.eq.s32.totalorder %s23, 0
      %p212 = por %p210, %p211
      %p213 = scmp.ne.s32.totalorder %s201, %s202
      %p214 = scmp.eq.s32.totalorder %s24, 1
      %p215 = por %p213, %p214
      %p217 = scmp.ne.s32.totalorder %s202, %s216
      %p218 = scmp.eq.s32.totalorder %s24, 0
      %p219 = por %p217, %p218
      %s220 = ssub.s32 %s18, %s25
      %p221 = scmp.eq.s32.totalorder %s220, 0
      %s223 = sadd.s32 %s222, 1
      %s224 = scalar_select %p221, %s222, %s223
      %p227 = pneg %p221
      %p228 = scmp.eq.s32.totalorder %s18, 1
      %p229 = por %p227, %p228
      %p230 = scmp.ne.s32.totalorder %s222, %s225
      %p231 = scmp.eq.s32.totalorder %s18, 0
      %p232 = por %p230, %p231
      %p233 = scmp.ne.s32.totalorder %s222, %s225
      %p234 = scmp.eq.s32.totalorder %s23, 1
      %p235 = por %p233, %p234
      %p236 = scmp.ne.s32.totalorder %s225, %s226
      %p237 = scmp.eq.s32.totalorder %s23, 0
      %p238 = por %p236, %p237
      %p239 = scmp.ne.s32.totalorder %s225, %s226
      %p240 = scmp.eq.s32.totalorder %s24, 1
      %p241 = por %p239, %p240
      %p243 = scmp.ne.s32.totalorder %s226, %s242
      %p244 = scmp.eq.s32.totalorder %s24, 0
      %p245 = por %p243, %p244
      %p246 = scmp.le.s32.totalorder 1, %s18
      %p247 = scmp.lt.s32.totalorder %s18, 3
      %p248 = pnand %p246, %p247
      %p249 = pneg %p248
      // Predicated region
      $region9: #{attn_block_seq.1} parent=5 // pred_check
        _
      $region10: #{attn_block_seq.1} parent=5 // pred_check_branch
        %251 = sbr.rel (%p248) target = $region12
      $region11: #{attn_block_seq.1} parent=5 // pred_region
        %s252 = ssub.s32 %s18, 1
        // Predicated region
        $region13: #{attn_block_seq.1} parent=11 // pred_check
          %p253 = pneg %p65
        $region14: #{attn_block_seq.1} parent=11 // pred_check_branch
          %255 = sbr.rel (%p253) target = $region16
        $region15: #{attn_block_seq.1} parent=11 // pred_region
          _
        $region16: #{attn_block_seq.1} parent=11 // pred_fallthru
          _
        // Predicated region
        $region17: #{attn_block_seq.1} parent=11 // pred_check
          %p256 = pneg %p86
        $region18: #{attn_block_seq.1} parent=11 // pred_check_branch
          %258 = sbr.rel (%p256) target = $region20
        $region19: #{attn_block_seq.1} parent=11 // pred_region
          _
        $region20: #{attn_block_seq.1} parent=11 // pred_fallthru
          _
        // Predicated region
        $region21: #{attn_block_seq.1} parent=11 // pred_check
          %p259 = pneg %p107
        $region22: #{attn_block_seq.1} parent=11 // pred_check_branch
          %261 = sbr.rel (%p259) target = $region24
        $region23: #{attn_block_seq.1} parent=11 // pred_region
          _
        $region24: #{attn_block_seq.1} parent=11 // pred_fallthru
          _
        // Predicated region
        $region25: #{attn_block_seq.1} parent=11 // pred_check
          %p262 = pneg %p128
        $region26: #{attn_block_seq.1} parent=11 // pred_check_branch
          %264 = sbr.rel (%p262) target = $region28
        $region27: #{attn_block_seq.1} parent=11 // pred_region
          _
        $region28: #{attn_block_seq.1} parent=11 // pred_fallthru
          _
        // Predicated region
        $region29: #{attn_block_seq.1} parent=11 // pred_check
          %p265 = pneg %p149
        $region30: #{attn_block_seq.1} parent=11 // pred_check_branch
          %267 = sbr.rel (%p265) target = $region32
        $region31: #{attn_block_seq.1} parent=11 // pred_region
          _
        $region32: #{attn_block_seq.1} parent=11 // pred_fallthru
          _
        // Predicated region
        $region33: #{attn_block_seq.1} parent=11 // pred_check
          %p268 = pneg %p170
        $region34: #{attn_block_seq.1} parent=11 // pred_check_branch
          %270 = sbr.rel (%p268) target = $region36
        $region35: #{attn_block_seq.1} parent=11 // pred_region
          _
        $region36: #{attn_block_seq.1} parent=11 // pred_fallthru
          _
        // Predicated region
        $region37: #{attn_block_seq.1} parent=11 // pred_check
          %p271 = pneg %p191
        $region38: #{attn_block_seq.1} parent=11 // pred_check_branch
          %273 = sbr.rel (%p271) target = $region40
        $region39: #{attn_block_seq.1} parent=11 // pred_region
          _
        $region40: #{attn_block_seq.1} parent=11 // pred_fallthru
          _
        // Predicated region
        $region41: #{attn_block_seq.1} parent=11 // pred_check
          %p274 = pneg %p212
        $region42: #{attn_block_seq.1} parent=11 // pred_check_branch
          %276 = sbr.rel (%p274) target = $region44
        $region43: #{attn_block_seq.1} parent=11 // pred_region
          _
        $region44: #{attn_block_seq.1} parent=11 // pred_fallthru
          _
      $region12: #{attn_block_seq.1} parent=5 // pred_fallthru
        _
      %p277 = scmp.lt.s32.totalorder %s18, 2
      // Predicated region
      $region45: #{attn_block_seq.1} parent=5 // pred_check
        %p278 = pneg %p277
      $region46: #{attn_block_seq.1} parent=5 // pred_check_branch
        %280 = sbr.rel (%p278) target = $region48
      $region47: #{attn_block_seq.1} parent=5 // pred_region
        // Predicated region
        $region49: #{attn_block_seq.1} parent=47 // pred_check
          %p281 = pneg %p38
        $region50: #{attn_block_seq.1} parent=47 // pred_check_branch
          %283 = sbr.rel (%p281) target = $region52
        $region51: #{attn_block_seq.1} parent=47 // pred_region
          %p284 = scmp.lt.s32.totalorder %s18, 1
          %s285 = scalar_select %p284, %s18, 1
          %s286 = smul.addr %s285, 32
          %s287 = smul.addr %s286, 8
          %s288 = scalar_lea.vmem %s0, %s287
        $region52: #{attn_block_seq.1} parent=47 // pred_fallthru
          _
      $region48: #{attn_block_seq.1} parent=5 // pred_fallthru
        _
      %p289 = scmp.le.s32.totalorder 1, %s18
      %p290 = scmp.lt.s32.totalorder %s18, 3
      %p291 = pnand %p289, %p290
      %p292 = pneg %p291
      // Predicated region
      $region53: #{attn_block_seq.1} parent=5 // pred_check
        _
      $region54: #{attn_block_seq.1} parent=5 // pred_check_branch
        %294 = sbr.rel (%p291) target = $region56
      $region55: #{attn_block_seq.1} parent=5 // pred_region
        %s295 = ssub.s32 %s18, 1
        %p296 = scmp.lt.s32.totalorder %s23, 1
        %s297 = scalar_select %p296, %s23, 1
        %s298 = smul.addr %s297, 32
        %s299 = smul.addr %s298, 8
        %s300 = scalar_lea.vmem %s0, %s299
        %p301 = pneg %p44
        %p302 = pneg %p41
        %p303 = pneg %p65
        %p304 = pneg %p62
        %p305 = pneg %p86
        %p306 = pneg %p83
        %p307 = pneg %p107
        %p308 = pneg %p104
        %p309 = pneg %p128
        %p310 = pneg %p125
        %p311 = pneg %p149
        %p312 = pneg %p146
        %p313 = pneg %p170
        %p314 = pneg %p167
        %p315 = pneg %p191
        %p316 = pneg %p188
        %p317 = pneg %p212
        %p318 = pneg %p209
        %p319 = pneg %p238
        %p320 = pneg %p235
        %s321 = sand.u32 %s225, 1
        %s322 = scalar_lea.sflag [#allocation6], %s321
        %s323 = sand.u32 %s225, 1
        %s324 = smul.addr %s323, 256
        %s325 = scalar_lea.vmem [#allocation5], %s324
        %p326 = scmp.lt.s32.totalorder %s23, 1
        %s327 = scalar_select %p326, %s23, 1
        %s328 = smul.addr %s327, 32
        %s329 = smul.addr %s328, 8
        %s330 = scalar_lea.vmem %s0, %s329
        %v332 = vld [vmem:[%s330] sm:$0xff]
        %v333 = vld [vmem:[%s330 + $0x8] sm:$0xff]
        %v334 = vld [vmem:[%s330 + $0x10] sm:$0xff]
        %v335 = vld [vmem:[%s330 + $0x18] sm:$0xff]
        %v336 = vld [vmem:[%s330 + $0x20] sm:$0xff]
        %v337 = vld [vmem:[%s330 + $0x28] sm:$0xff]
        %v338 = vld [vmem:[%s330 + $0x30] sm:$0xff]
        %v339 = vld [vmem:[%s330 + $0x38] sm:$0xff]
        %v340 = vld [vmem:[%s330 + $0x40] sm:$0xff]
        %v341 = vld [vmem:[%s330 + $0x48] sm:$0xff]
        %v342 = vld [vmem:[%s330 + $0x50] sm:$0xff]
        %v343 = vld [vmem:[%s330 + $0x58] sm:$0xff]
        %v344 = vld [vmem:[%s330 + $0x60] sm:$0xff]
        %v345 = vld [vmem:[%s330 + $0x68] sm:$0xff]
        %v346 = vld [vmem:[%s330 + $0x70] sm:$0xff]
        %v347 = vld [vmem:[%s330 + $0x78] sm:$0xff]
        %v348 = vld [vmem:[%s330 + $0x80] sm:$0xff]
        %v349 = vld [vmem:[%s330 + $0x88] sm:$0xff]
        %v350 = vld [vmem:[%s330 + $0x90] sm:$0xff]
        %v351 = vld [vmem:[%s330 + $0x98] sm:$0xff]
        %v352 = vld [vmem:[%s330 + $0xa0] sm:$0xff]
        %v353 = vld [vmem:[%s330 + $0xa8] sm:$0xff]
        %v354 = vld [vmem:[%s330 + $0xb0] sm:$0xff]
        %v355 = vld [vmem:[%s330 + $0xb8] sm:$0xff]
        %v356 = vld [vmem:[%s330 + $0xc0] sm:$0xff]
        %v357 = vld [vmem:[%s330 + $0xc8] sm:$0xff]
        %v358 = vld [vmem:[%s330 + $0xd0] sm:$0xff]
        %v359 = vld [vmem:[%s330 + $0xd8] sm:$0xff]
        %v360 = vld [vmem:[%s330 + $0xe0] sm:$0xff]
        %v361 = vld [vmem:[%s330 + $0xe8] sm:$0xff]
        %v362 = vld [vmem:[%s330 + $0xf0] sm:$0xff]
        %v363 = vld [vmem:[%s330 + $0xf8] sm:$0xff]
        %v364 = vadd.f32 %v332, %v333
        %v365 = vadd.f32 %v364, %v334
        %v366 = vadd.f32 %v365, %v335
        %v367 = vadd.f32 %v366, %v336
        %v368 = vadd.f32 %v367, %v337
        %v369 = vadd.f32 %v368, %v338
        %v370 = vadd.f32 %v369, %v339
        %v371 = vadd.f32 %v370, %v340
        %v372 = vadd.f32 %v371, %v341
        %v373 = vadd.f32 %v372, %v342
        %v374 = vadd.f32 %v373, %v343
        %v375 = vadd.f32 %v374, %v344
        %v376 = vadd.f32 %v375, %v345
        %v377 = vadd.f32 %v376, %v346
        %v378 = vadd.f32 %v377, %v347
        %v379 = vadd.f32 %v378, %v348
        %v380 = vadd.f32 %v379, %v349
        %v381 = vadd.f32 %v380, %v350
        %v382 = vadd.f32 %v381, %v351
        %v383 = vadd.f32 %v382, %v352
        %v384 = vadd.f32 %v383, %v353
        %v385 = vadd.f32 %v384, %v354
        %v386 = vadd.f32 %v385, %v355
        %v387 = vadd.f32 %v386, %v356
        %v388 = vadd.f32 %v387, %v357
        %v389 = vadd.f32 %v388, %v358
        %v390 = vadd.f32 %v389, %v359
        %v391 = vadd.f32 %v390, %v360
        %v392 = vadd.f32 %v391, %v361
        %v393 = vadd.f32 %v392, %v362
        %v394 = vadd.f32 %v393, %v363
        %v395 = vrot.slane %v394, 4
        %v396 = vadd.f32 %v394, %v395
        %v397 = vrot.slane %v396, 2
        %v398 = vadd.f32 %v396, %v397
        %v399 = vrot.slane %v398, 1
        %v400 = vadd.f32 %v398, %v399
        %v401 = vld [vmem:[%s3] sm:$0xff]
        %v402 = vld [vmem:[%s3 + $0x8] sm:$0xff]
        %v403 = vld [vmem:[%s3 + $0x10] sm:$0xff]
        %v404 = vld [vmem:[%s3 + $0x18] sm:$0xff]
        %v405 = vld [vmem:[%s3 + $0x20] sm:$0xff]
        %v406 = vld [vmem:[%s3 + $0x28] sm:$0xff]
        %v407 = vld [vmem:[%s3 + $0x30] sm:$0xff]
        %v408 = vld [vmem:[%s3 + $0x38] sm:$0xff]
        %v409 = vld [vmem:[%s3 + $0x40] sm:$0xff]
        %v410 = vld [vmem:[%s3 + $0x48] sm:$0xff]
        %v411 = vld [vmem:[%s3 + $0x50] sm:$0xff]
        %v412 = vld [vmem:[%s3 + $0x58] sm:$0xff]
        %v413 = vld [vmem:[%s3 + $0x60] sm:$0xff]
        %v414 = vld [vmem:[%s3 + $0x68] sm:$0xff]
        %v415 = vld [vmem:[%s3 + $0x70] sm:$0xff]
        %v416 = vld [vmem:[%s3 + $0x78] sm:$0xff]
        %417 = vmatprep.subr.mxu0 0.0
        %418 = vmatpush1.msra.mxu0 %v401
        %419 = vmatprep.subr.mxu0 0.0
        %420 = vmatpush1.msra.mxu0 %v402
        %421 = vmatprep.subr.mxu0 0.0
        %422 = vmatpush1.msra.mxu0 %v403
        %423 = vmatprep.subr.mxu0 0.0
        %424 = vmatpush1.msra.mxu0 %v404
        %425 = vmatprep.subr.mxu0 0.0
        %426 = vmatpush1.msra.mxu0 %v405
        %427 = vmatprep.subr.mxu0 0.0
        %428 = vmatpush1.msra.mxu0 %v406
        %429 = vmatprep.subr.mxu0 0.0
        %430 = vmatpush1.msra.mxu0 %v407
        %431 = vmatprep.subr.mxu0 0.0
        %432 = vmatpush1.msra.mxu0 %v408
        %433 = vmatprep.subr.mxu0 0.0
        %434 = vmatpush1.msra.mxu0 %v409
        %435 = vmatprep.subr.mxu0 0.0
        %436 = vmatpush1.msra.mxu0 %v410
        %437 = vmatprep.subr.mxu0 0.0
        %438 = vmatpush1.msra.mxu0 %v411
        %439 = vmatprep.subr.mxu0 0.0
        %440 = vmatpush1.msra.mxu0 %v412
        %441 = vmatprep.subr.mxu0 0.0
        %442 = vmatpush1.msra.mxu0 %v413
        %443 = vmatprep.subr.mxu0 0.0
        %444 = vmatpush1.msra.mxu0 %v414
        %445 = vmatprep.subr.mxu0 0.0
        %446 = vmatpush1.msra.mxu0 %v415
        %447 = vmatprep.subr.mxu0 0.0
        %448 = vmatpush1.msra.mxu0 %v416
        %449 = vmatprep.subr.mxu0 0.0
        %450 = vmatpush1.msra.mxu0 0.0
        %451 = vmatprep.subr.mxu0 0.0
        %452 = vmatpush1.msra.mxu0 0.0
        %453 = vmatprep.subr.mxu0 0.0
        %454 = vmatpush1.msra.mxu0 0.0
        %455 = vmatprep.subr.mxu0 0.0
        %456 = vmatpush1.msra.mxu0 0.0
        %457 = vmatprep.subr.mxu0 0.0
        %458 = vmatpush1.msra.mxu0 0.0
        %459 = vmatprep.subr.mxu0 0.0
        %460 = vmatpush1.msra.mxu0 0.0
        %461 = vmatprep.subr.mxu0 0.0
        %462 = vmatpush1.msra.mxu0 0.0
        %463 = vmatprep.subr.mxu0 0.0
        %464 = vmatpush1.msra.mxu0 0.0
        %465 = vmatprep.subr.mxu0 0.0
        %466 = vmatpush1.msra.mxu0 0.0
        %467 = vmatprep.subr.mxu0 0.0
        %468 = vmatpush1.msra.mxu0 0.0
        %469 = vmatprep.subr.mxu0 0.0
        %470 = vmatpush1.msra.mxu0 0.0
        %471 = vmatprep.subr.mxu0 0.0
        %472 = vmatpush1.msra.mxu0 0.0
        %473 = vmatprep.subr.mxu0 0.0
        %474 = vmatpush1.msra.mxu0 0.0
        %475 = vmatprep.subr.mxu0 0.0
        %476 = vmatpush1.msra.mxu0 0.0
        %477 = vmatprep.subr.mxu0 0.0
        %478 = vmatpush1.msra.mxu0 0.0
        %479 = vmatprep.subr.mxu0 0.0
        %480 = vmatpush1.msra.mxu0 0.0
        %481 = vmatprep.mubr.f32.mxu0 0.0
        %482 = vmatmul.mubr.f32.gmra.mrb[0].mxu0 %v400
        %v483 = vpop.f32.mrb[0].mxu0
        %v484 = vadd.f32 0.0, %v483
        %v485 = vpop.f32.mrb[0].mxu0
        %486 = vdwg.mxu0
        %v487 = vrcp.pop 1024.0
        %v488 = vmul.f32 %v484, %v487
        %v489 = vld [vmem:[%s4] sm:$0xff]
        %v490 = vld [vmem:[%s4 + $0x8] sm:$0xff]
        %v491 = vld [vmem:[%s4 + $0x10] sm:$0xff]
        %v492 = vld [vmem:[%s4 + $0x18] sm:$0xff]
        %vm493 = vcmask 261120
        %v495 = vsel %vm493, %v488, 0
        %497 = vmatprep.subr.mxu0 0.0
        %498 = vmatpush1.msra.mxu0 %v489
        %499 = vmatprep.subr.mxu0 0.0
        %500 = vmatpush1.msra.mxu0 %v490
        %501 = vmatprep.subr.mxu0 0.0
        %502 = vmatpush1.msra.mxu0 %v491
        %503 = vmatprep.subr.mxu0 0.0
        %504 = vmatpush1.msra.mxu0 %v492
        %505 = vmatprep.subr.mxu0 0.0
        %506 = vmatpush1.msra.mxu0 0.0
        %507 = vmatprep.subr.mxu0 0.0
        %508 = vmatpush1.msra.mxu0 0.0
        %509 = vmatprep.subr.mxu0 0.0
        %510 = vmatpush1.msra.mxu0 0.0
        %511 = vmatprep.subr.mxu0 0.0
        %512 = vmatpush1.msra.mxu0 0.0
        %513 = vmatprep.subr.mxu0 0.0
        %514 = vmatpush1.msra.mxu0 0.0
        %515 = vmatprep.subr.mxu0 0.0
        %516 = vmatpush1.msra.mxu0 0.0
        %517 = vmatprep.subr.mxu0 0.0
        %518 = vmatpush1.msra.mxu0 0.0
        %519 = vmatprep.subr.mxu0 0.0
        %520 = vmatpush1.msra.mxu0 0.0
        %521 = vmatprep.subr.mxu0 0.0
        %522 = vmatpush1.msra.mxu0 0.0
        %523 = vmatprep.subr.mxu0 0.0
        %524 = vmatpush1.msra.mxu0 0.0
        %525 = vmatprep.subr.mxu0 0.0
        %526 = vmatpush1.msra.mxu0 0.0
        %527 = vmatprep.subr.mxu0 0.0
        %528 = vmatpush1.msra.mxu0 0.0
        %529 = vmatprep.subr.mxu0 0.0
        %530 = vmatpush1.msra.mxu0 0.0
        %531 = vmatprep.subr.mxu0 0.0
        %532 = vmatpush1.msra.mxu0 0.0
        %533 = vmatprep.subr.mxu0 0.0
        %534 = vmatpush1.msra.mxu0 0.0
        %535 = vmatprep.subr.mxu0 0.0
        %536 = vmatpush1.msra.mxu0 0.0
        %537 = vmatprep.subr.mxu0 0.0
        %538 = vmatpush1.msra.mxu0 0.0
        %539 = vmatprep.subr.mxu0 0.0
        %540 = vmatpush1.msra.mxu0 0.0
        %541 = vmatprep.subr.mxu0 0.0
        %542 = vmatpush1.msra.mxu0 0.0
        %543 = vmatprep.subr.mxu0 0.0
        %544 = vmatpush1.msra.mxu0 0.0
        %545 = vmatprep.subr.mxu0 0.0
        %546 = vmatpush1.msra.mxu0 0.0
        %547 = vmatprep.subr.mxu0 0.0
        %548 = vmatpush1.msra.mxu0 0.0
        %549 = vmatprep.subr.mxu0 0.0
        %550 = vmatpush1.msra.mxu0 0.0
        %551 = vmatprep.subr.mxu0 0.0
        %552 = vmatpush1.msra.mxu0 0.0
        %553 = vmatprep.subr.mxu0 0.0
        %554 = vmatpush1.msra.mxu0 0.0
        %555 = vmatprep.subr.mxu0 0.0
        %556 = vmatpush1.msra.mxu0 0.0
        %557 = vmatprep.subr.mxu0 0.0
        %558 = vmatpush1.msra.mxu0 0.0
        %559 = vmatprep.subr.mxu0 0.0
        %560 = vmatpush1.msra.mxu0 0.0
        %561 = vmatprep.mubr.f32.mxu0 0.0
        %562 = vmatmul.mubr.f32.gmra.mrb[0].mxu0 %v495
        %v563 = vpop.f32.mrb[0].mxu0
        %v564 = vadd.f32 0.0, %v563
        %v565 = vpop.f32.mrb[0].mxu0
        %566 = vdwg.mxu0
        %v567 = vlaneseq
        %v568 = vshrl.u32 %v567, 7
        %v569 = vsub.s32 0, %v568
        %v570 = vrot.slane %v564, %v569
        %v571 = vsub.f32 %v332, %v570
        %v572 = vsub.f32 %v333, %v570
        %v573 = vsub.f32 %v334, %v570
        %v574 = vsub.f32 %v335, %v570
        %v575 = vsub.f32 %v336, %v570
        %v576 = vsub.f32 %v337, %v570
        %v577 = vsub.f32 %v338, %v570
        %v578 = vsub.f32 %v339, %v570
        %v579 = vsub.f32 %v340, %v570
        %v580 = vsub.f32 %v341, %v570
        %v581 = vsub.f32 %v342, %v570
        %v582 = vsub.f32 %v343, %v570
        %v583 = vsub.f32 %v344, %v570
        %v584 = vsub.f32 %v345, %v570
        %v585 = vsub.f32 %v346, %v570
        %v586 = vsub.f32 %v347, %v570
        %v587 = vsub.f32 %v348, %v570
        %v588 = vsub.f32 %v349, %v570
        %v589 = vsub.f32 %v350, %v570
        %v590 = vsub.f32 %v351, %v570
        %v591 = vsub.f32 %v352, %v570
        %v592 = vsub.f32 %v353, %v570
        %v593 = vsub.f32 %v354, %v570
        %v594 = vsub.f32 %v355, %v570
        %v595 = vsub.f32 %v356, %v570
        %v596 = vsub.f32 %v357, %v570
        %v597 = vsub.f32 %v358, %v570
        %v598 = vsub.f32 %v359, %v570
        %v599 = vsub.f32 %v360, %v570
        %v600 = vsub.f32 %v361, %v570
        %v601 = vsub.f32 %v362, %v570
        %v602 = vsub.f32 %v363, %v570
        %v603 = vmul.f32 %v571, %v571
        %v604 = vmul.f32 %v572, %v572
        %v605 = vmul.f32 %v573, %v573
        %v606 = vmul.f32 %v574, %v574
        %v607 = vmul.f32 %v575, %v575
        %v608 = vmul.f32 %v576, %v576
        %v609 = vmul.f32 %v577, %v577
        %v610 = vmul.f32 %v578, %v578
        %v611 = vmul.f32 %v579, %v579
        %v612 = vmul.f32 %v580, %v580
        %v613 = vmul.f32 %v581, %v581
        %v614 = vmul.f32 %v582, %v582
        %v615 = vmul.f32 %v583, %v583
        %v616 = vmul.f32 %v584, %v584
        %v617 = vmul.f32 %v585, %v585
        %v618 = vmul.f32 %v586, %v586
        %v619 = vmul.f32 %v587, %v587
        %v620 = vmul.f32 %v588, %v588
        %v621 = vmul.f32 %v589, %v589
        %v622 = vmul.f32 %v590, %v590
        %v623 = vmul.f32 %v591, %v591
        %v624 = vmul.f32 %v592, %v592
        %v625 = vmul.f32 %v593, %v593
        %v626 = vmul.f32 %v594, %v594
        %v627 = vmul.f32 %v595, %v595
        %v628 = vmul.f32 %v596, %v596
        %v629 = vmul.f32 %v597, %v597
        %v630 = vmul.f32 %v598, %v598
        %v631 = vmul.f32 %v599, %v599
        %v632 = vmul.f32 %v600, %v600
        %v633 = vmul.f32 %v601, %v601
        %v634 = vmul.f32 %v602, %v602
        %v635 = vadd.f32 %v603, %v604
        %v636 = vadd.f32 %v635, %v605
        %v637 = vadd.f32 %v636, %v606
        %v638 = vadd.f32 %v637, %v607
        %v639 = vadd.f32 %v638, %v608
        %v640 = vadd.f32 %v639, %v609
        %v641 = vadd.f32 %v640, %v610
        %v642 = vadd.f32 %v641, %v611
        %v643 = vadd.f32 %v642, %v612
        %v644 = vadd.f32 %v643, %v613
        %v645 = vadd.f32 %v644, %v614
        %v646 = vadd.f32 %v645, %v615
        %v647 = vadd.f32 %v646, %v616
        %v648 = vadd.f32 %v647, %v617
        %v649 = vadd.f32 %v648, %v618
        %v650 = vadd.f32 %v649, %v619
        %v651 = vadd.f32 %v650, %v620
        %v652 = vadd.f32 %v651, %v621
        %v653 = vadd.f32 %v652, %v622
        %v654 = vadd.f32 %v653, %v623
        %v655 = vadd.f32 %v654, %v624
        %v656 = vadd.f32 %v655, %v625
        %v657 = vadd.f32 %v656, %v626
        %v658 = vadd.f32 %v657, %v627
        %v659 = vadd.f32 %v658, %v628
        %v660 = vadd.f32 %v659, %v629
        %v661 = vadd.f32 %v660, %v630
        %v662 = vadd.f32 %v661, %v631
        %v663 = vadd.f32 %v662, %v632
        %v664 = vadd.f32 %v663, %v633
        %v665 = vadd.f32 %v664, %v634
        %v666 = vrot.slane %v665, 4
        %v667 = vadd.f32 %v665, %v666
        %v668 = vrot.slane %v667, 2
        %v669 = vadd.f32 %v667, %v668
        %v670 = vrot.slane %v669, 1
        %v671 = vadd.f32 %v669, %v670
        %672 = vmatprep.subr.mxu0 0.0
        %673 = vmatpush1.msra.mxu0 %v401
        %674 = vmatprep.subr.mxu0 0.0
        %675 = vmatpush1.msra.mxu0 %v402
        %676 = vmatprep.subr.mxu0 0.0
        %677 = vmatpush1.msra.mxu0 %v403
        %678 = vmatprep.subr.mxu0 0.0
        %679 = vmatpush1.msra.mxu0 %v404
        %680 = vmatprep.subr.mxu0 0.0
        %681 = vmatpush1.msra.mxu0 %v405
        %682 = vmatprep.subr.mxu0 0.0
        %683 = vmatpush1.msra.mxu0 %v406
        %684 = vmatprep.subr.mxu0 0.0
        %685 = vmatpush1.msra.mxu0 %v407
        %686 = vmatprep.subr.mxu0 0.0
        %687 = vmatpush1.msra.mxu0 %v408
        %688 = vmatprep.subr.mxu0 0.0
        %689 = vmatpush1.msra.mxu0 %v409
        %690 = vmatprep.subr.mxu0 0.0
        %691 = vmatpush1.msra.mxu0 %v410
        %692 = vmatprep.subr.mxu0 0.0
        %693 = vmatpush1.msra.mxu0 %v411
        %694 = vmatprep.subr.mxu0 0.0
        %695 = vmatpush1.msra.mxu0 %v412
        %696 = vmatprep.subr.mxu0 0.0
        %697 = vmatpush1.msra.mxu0 %v413
        %698 = vmatprep.subr.mxu0 0.0
        %699 = vmatpush1.msra.mxu0 %v414
        %700 = vmatprep.subr.mxu0 0.0
        %701 = vmatpush1.msra.mxu0 %v415
        %702 = vmatprep.subr.mxu0 0.0
        %703 = vmatpush1.msra.mxu0 %v416
        %704 = vmatprep.subr.mxu0 0.0
        %705 = vmatpush1.msra.mxu0 0.0
        %706 = vmatprep.subr.mxu0 0.0
        %707 = vmatpush1.msra.mxu0 0.0
        %708 = vmatprep.subr.mxu0 0.0
        %709 = vmatpush1.msra.mxu0 0.0
        %710 = vmatprep.subr.mxu0 0.0
        %711 = vmatpush1.msra.mxu0 0.0
        %712 = vmatprep.subr.mxu0 0.0
        %713 = vmatpush1.msra.mxu0 0.0
        %714 = vmatprep.subr.mxu0 0.0
        %715 = vmatpush1.msra.mxu0 0.0
        %716 = vmatprep.subr.mxu0 0.0
        %717 = vmatpush1.msra.mxu0 0.0
        %718 = vmatprep.subr.mxu0 0.0
        %719 = vmatpush1.msra.mxu0 0.0
        %720 = vmatprep.subr.mxu0 0.0
        %721 = vmatpush1.msra.mxu0 0.0
        %722 = vmatprep.subr.mxu0 0.0
        %723 = vmatpush1.msra.mxu0 0.0
        %724 = vmatprep.subr.mxu0 0.0
        %725 = vmatpush1.msra.mxu0 0.0
        %726 = vmatprep.subr.mxu0 0.0
        %727 = vmatpush1.msra.mxu0 0.0
        %728 = vmatprep.subr.mxu0 0.0
        %729 = vmatpush1.msra.mxu0 0.0
        %730 = vmatprep.subr.mxu0 0.0
        %731 = vmatpush1.msra.mxu0 0.0
        %732 = vmatprep.subr.mxu0 0.0
        %733 = vmatpush1.msra.mxu0 0.0
        %734 = vmatprep.subr.mxu0 0.0
        %735 = vmatpush1.msra.mxu0 0.0
        %736 = vmatprep.mubr.f32.mxu0 0.0
        %737 = vmatmul.mubr.f32.gmra.mrb[0].mxu0 %v671
        %v738 = vpop.f32.mrb[0].mxu0
        %v739 = vadd.f32 0.0, %v738
        %v740 = vpop.f32.mrb[0].mxu0
        %741 = vdwg.mxu0
        %v742 = vmul.f32 %v739, %v487
        %v743 = vadd.f32 %v742, 1e-06
        %v744 = vrsqrt.pop %v743
        %v746 = vsel %vm493, %v744, 0
        %748 = vmatprep.subr.mxu0 0.0
        %749 = vmatpush1.msra.mxu0 %v489
        %750 = vmatprep.subr.mxu0 0.0
        %751 = vmatpush1.msra.mxu0 %v490
        %752 = vmatprep.subr.mxu0 0.0
        %753 = vmatpush1.msra.mxu0 %v491
        %754 = vmatprep.subr.mxu0 0.0
        %755 = vmatpush1.msra.mxu0 %v492
        %756 = vmatprep.subr.mxu0 0.0
        %757 = vmatpush1.msra.mxu0 0.0
        %758 = vmatprep.subr.mxu0 0.0
        %759 = vmatpush1.msra.mxu0 0.0
        %760 = vmatprep.subr.mxu0 0.0
        %761 = vmatpush1.msra.mxu0 0.0
        %762 = vmatprep.subr.mxu0 0.0
        %763 = vmatpush1.msra.mxu0 0.0
        %764 = vmatprep.subr.mxu0 0.0
        %765 = vmatpush1.msra.mxu0 0.0
        %766 = vmatprep.subr.mxu0 0.0
        %767 = vmatpush1.msra.mxu0 0.0
        %768 = vmatprep.subr.mxu0 0.0
        %769 = vmatpush1.msra.mxu0 0.0
        %770 = vmatprep.subr.mxu0 0.0
        %771 = vmatpush1.msra.mxu0 0.0
        %772 = vmatprep.subr.mxu0 0.0
        %773 = vmatpush1.msra.mxu0 0.0
        %774 = vmatprep.subr.mxu0 0.0
        %775 = vmatpush1.msra.mxu0 0.0
        %776 = vmatprep.subr.mxu0 0.0
        %777 = vmatpush1.msra.mxu0 0.0
        %778 = vmatprep.subr.mxu0 0.0
        %779 = vmatpush1.msra.mxu0 0.0
        %780 = vmatprep.subr.mxu0 0.0
        %781 = vmatpush1.msra.mxu0 0.0
        %782 = vmatprep.subr.mxu0 0.0
        %783 = vmatpush1.msra.mxu0 0.0
        %784 = vmatprep.subr.mxu0 0.0
        %785 = vmatpush1.msra.mxu0 0.0
        %786 = vmatprep.subr.mxu0 0.0
        %787 = vmatpush1.msra.mxu0 0.0
        %788 = vmatprep.subr.mxu0 0.0
        %789 = vmatpush1.msra.mxu0 0.0
        %790 = vmatprep.subr.mxu0 0.0
        %791 = vmatpush1.msra.mxu0 0.0
        %792 = vmatprep.subr.mxu0 0.0
        %793 = vmatpush1.msra.mxu0 0.0
        %794 = vmatprep.subr.mxu0 0.0
        %795 = vmatpush1.msra.mxu0 0.0
        %796 = vmatprep.subr.mxu0 0.0
        %797 = vmatpush1.msra.mxu0 0.0
        %798 = vmatprep.subr.mxu0 0.0
        %799 = vmatpush1.msra.mxu0 0.0
        %800 = vmatprep.subr.mxu0 0.0
        %801 = vmatpush1.msra.mxu0 0.0
        %802 = vmatprep.subr.mxu0 0.0
        %803 = vmatpush1.msra.mxu0 0.0
        %804 = vmatprep.subr.mxu0 0.0
        %805 = vmatpush1.msra.mxu0 0.0
        %806 = vmatprep.subr.mxu0 0.0
        %807 = vmatpush1.msra.mxu0 0.0
        %808 = vmatprep.subr.mxu0 0.0
        %809 = vmatpush1.msra.mxu0 0.0
        %810 = vmatprep.subr.mxu0 0.0
        %811 = vmatpush1.msra.mxu0 0.0
        %812 = vmatprep.mubr.f32.mxu0 0.0
        %813 = vmatmul.mubr.f32.gmra.mrb[0].mxu0 %v746
        %v814 = vpop.f32.mrb[0].mxu0
        %v815 = vadd.f32 0.0, %v814
        %v816 = vpop.f32.mrb[0].mxu0
        %817 = vdwg.mxu0
        %v818 = vld [vmem:[%s1] sm:$0x1]
        %v819 = vmul.f32 %v815, %v818
        %v820 = vlaneseq
        %v821 = vshrl.u32 %v820, 7
        %v822 = vsub.s32 0, %v821
        %v823 = vrot.slane %v819, %v822
        %v824 = vmul.f32 %v571, %v823
        %v825 = vmul.f32 %v572, %v823
        %v826 = vmul.f32 %v573, %v823
        %v827 = vmul.f32 %v574, %v823
        %v828 = vmul.f32 %v575, %v823
        %v829 = vmul.f32 %v576, %v823
        %v830 = vmul.f32 %v577, %v823
        %v831 = vmul.f32 %v578, %v823
        %v832 = vmul.f32 %v579, %v823
        %v833 = vmul.f32 %v580, %v823
        %v834 = vmul.f32 %v581, %v823
        %v835 = vmul.f32 %v582, %v823
        %v836 = vmul.f32 %v583, %v823
        %v837 = vmul.f32 %v584, %v823
        %v838 = vmul.f32 %v585, %v823
        %v839 = vmul.f32 %v586, %v823
        %v840 = vmul.f32 %v587, %v823
        %v841 = vmul.f32 %v588, %v823
        %v842 = vmul.f32 %v589, %v823
        %v843 = vmul.f32 %v590, %v823
        %v844 = vmul.f32 %v591, %v823
        %v845 = vmul.f32 %v592, %v823
        %v846 = vmul.f32 %v593, %v823
        %v847 = vmul.f32 %v594, %v823
        %v848 = vmul.f32 %v595, %v823
        %v849 = vmul.f32 %v596, %v823
        %v850 = vmul.f32 %v597, %v823
        %v851 = vmul.f32 %v598, %v823
        %v852 = vmul.f32 %v599, %v823
        %v853 = vmul.f32 %v600, %v823
        %v854 = vmul.f32 %v601, %v823
        %v855 = vmul.f32 %v602, %v823
        %v856 = vld [vmem:[%s2] sm:$0x1]
        %v858 = vlaneseq
        %v859 = vshrl.u32 %v858, 7
        %v860 = vsub.s32 0, %v859
        %v861 = vrot.slane %v856, %v860
        %v863 = vadd.f32 %v824, %v861
        %v864 = vadd.f32 %v825, %v861
        %v865 = vadd.f32 %v826, %v861
        %v866 = vadd.f32 %v827, %v861
        %v867 = vadd.f32 %v828, %v861
        %v868 = vadd.f32 %v829, %v861
        %v869 = vadd.f32 %v830, %v861
        %v870 = vadd.f32 %v831, %v861
        %v871 = vadd.f32 %v832, %v861
        %v872 = vadd.f32 %v833, %v861
        %v873 = vadd.f32 %v834, %v861
        %v874 = vadd.f32 %v835, %v861
        %v875 = vadd.f32 %v836, %v861
        %v876 = vadd.f32 %v837, %v861
        %v877 = vadd.f32 %v838, %v861
        %v878 = vadd.f32 %v839, %v861
        %v879 = vadd.f32 %v840, %v861
        %v880 = vadd.f32 %v841, %v861
        %v881 = vadd.f32 %v842, %v861
        %v882 = vadd.f32 %v843, %v861
        %v883 = vadd.f32 %v844, %v861
        %v884 = vadd.f32 %v845, %v861
        %v885 = vadd.f32 %v846, %v861
        %v886 = vadd.f32 %v847, %v861
        %v887 = vadd.f32 %v848, %v861
        %v888 = vadd.f32 %v849, %v861
        %v889 = vadd.f32 %v850, %v861
        %v890 = vadd.f32 %v851, %v861
        %v891 = vadd.f32 %v852, %v861
        %v892 = vadd.f32 %v853, %v861
        %v893 = vadd.f32 %v854, %v861
        %v894 = vadd.f32 %v855, %v861
        %v895 = vpack.c.bf16 %v864, %v863
        %v896 = vpack.c.bf16 %v866, %v865
        %v897 = vpack.c.bf16 %v868, %v867
        %v898 = vpack.c.bf16 %v870, %v869
        %v899 = vpack.c.bf16 %v872, %v871
        %v900 = vpack.c.bf16 %v874, %v873
        %v901 = vpack.c.bf16 %v876, %v875
        %v902 = vpack.c.bf16 %v878, %v877
        %v903 = vpack.c.bf16 %v880, %v879
        %v904 = vpack.c.bf16 %v882, %v881
        %v905 = vpack.c.bf16 %v884, %v883
        %v906 = vpack.c.bf16 %v886, %v885
        %v907 = vpack.c.bf16 %v888, %v887
        %v908 = vpack.c.bf16 %v890, %v889
        %v909 = vpack.c.bf16 %v892, %v891
        %v910 = vpack.c.bf16 %v894, %v893
        %v911 = vld [vmem:[%s5] sm:$0xff]
        %v912 = vld [vmem:[%s5 + $0x8] sm:$0xf]
        %v913 = vld [vmem:[%s5 + $0xc] sm:$0xff]
        %v914 = vld [vmem:[%s5 + $0x14] sm:$0xf]
        %v915 = vld [vmem:[%s5 + $0x18] sm:$0xff]
        %v916 = vld [vmem:[%s5 + $0x20] sm:$0xf]
        %v917 = vld [vmem:[%s5 + $0x24] sm:$0xff]
        %v918 = vld [vmem:[%s5 + $0x2c] sm:$0xf]
        %v919 = vld [vmem:[%s5 + $0x30] sm:$0xff]
        %v920 = vld [vmem:[%s5 + $0x38] sm:$0xf]
        %v921 = vld [vmem:[%s5 + $0x3c] sm:$0xff]
        %v922 = vld [vmem:[%s5 + $0x44] sm:$0xf]
        %v923 = vld [vmem:[%s5 + $0x48] sm:$0xff]
        %v924 = vld [vmem:[%s5 + $0x50] sm:$0xf]
        %v925 = vld [vmem:[%s5 + $0x54] sm:$0xff]
        %v926 = vld [vmem:[%s5 + $0x5c] sm:$0xf]
        %v927 = vld [vmem:[%s5 + $0x60] sm:$0xff]
        %v928 = vld [vmem:[%s5 + $0x68] sm:$0xf]
        %v929 = vld [vmem:[%s5 + $0x6c] sm:$0xff]
        %v930 = vld [vmem:[%s5 + $0x74] sm:$0xf]
        %v931 = vld [vmem:[%s5 + $0x78] sm:$0xff]
        %v932 = vld [vmem:[%s5 + $0x80] sm:$0xf]
        %v933 = vld [vmem:[%s5 + $0x84] sm:$0xff]
        %v934 = vld [vmem:[%s5 + $0x8c] sm:$0xf]
        %v935 = vld [vmem:[%s5 + $0x90] sm:$0xff]
        %v936 = vld [vmem:[%s5 + $0x98] sm:$0xf]
        %v937 = vld [vmem:[%s5 + $0x9c] sm:$0xff]
        %v938 = vld [vmem:[%s5 + $0xa4] sm:$0xf]
        %v939 = vld [vmem:[%s5 + $0xa8] sm:$0xff]
        %v940 = vld [vmem:[%s5 + $0xb0] sm:$0xf]
        %v941 = vld [vmem:[%s5 + $0xb4] sm:$0xff]
        %v942 = vld [vmem:[%s5 + $0xbc] sm:$0xf]
        %v943 = vld [vmem:[%s6] sm:$0x7]
        %v945 = vlaneseq
        %v946 = vshrl.u32 %v945, 7
        %v947 = vsub.s32 0, %v946
        %v948 = vrot.slane %v943, %v947
        %v949 = vlaneseq
        %v950 = vshrl.u32 %v949, 7
        %v951 = vsub.s32 1, %v950
        %v952 = vrot.slane %v943, %v951
        %v953 = vlaneseq
        %v954 = vshrl.u32 %v953, 7
        %v955 = vsub.s32 2, %v954
        %v956 = vrot.slane %v943, %v955
        %v992 = vunpack.c.l.b16 %v911
        %v993 = vunpack.c.h.b16 %v911
        %v994 = vunpack.c.l.b16 %v912
        %v995 = vunpack.c.l.b16 %v913
        %v996 = vunpack.c.h.b16 %v913
        %v997 = vunpack.c.l.b16 %v914
        %v998 = vunpack.c.l.b16 %v915
        %v999 = vunpack.c.h.b16 %v915
        %v1000 = vunpack.c.l.b16 %v916
        %v1001 = vunpack.c.l.b16 %v917
        %v1002 = vunpack.c.h.b16 %v917
        %v1003 = vunpack.c.l.b16 %v918
        %v1004 = vunpack.c.l.b16 %v919
        %v1005 = vunpack.c.h.b16 %v919
        %v1006 = vunpack.c.l.b16 %v920
        %v1007 = vunpack.c.l.b16 %v921
        %v1008 = vunpack.c.h.b16 %v921
        %v1009 = vunpack.c.l.b16 %v922
        %v1010 = vunpack.c.l.b16 %v923
        %v1011 = vunpack.c.h.b16 %v923
        %v1012 = vunpack.c.l.b16 %v924
        %v1013 = vunpack.c.l.b16 %v925
        %v1014 = vunpack.c.h.b16 %v925
        %v1015 = vunpack.c.l.b16 %v926
        %v1016 = vunpack.c.l.b16 %v927
        %v1017 = vunpack.c.h.b16 %v927
        %v1018 = vunpack.c.l.b16 %v928
        %v1019 = vunpack.c.l.b16 %v929
        %v1020 = vunpack.c.h.b16 %v929
        %v1021 = vunpack.c.l.b16 %v930
        %v1022 = vunpack.c.l.b16 %v931
        %v1023 = vunpack.c.h.b16 %v931
        %v1024 = vunpack.c.l.b16 %v932
        %v1025 = vunpack.c.l.b16 %v933
        %v1026 = vunpack.c.h.b16 %v933
        %v1027 = vunpack.c.l.b16 %v934
        %v1028 = vunpack.c.l.b16 %v935
        %v1029 = vunpack.c.h.b16 %v935
        %v1030 = vunpack.c.l.b16 %v936
        %v1031 = vunpack.c.l.b16 %v937
        %v1032 = vunpack.c.h.b16 %v937
        %v1033 = vunpack.c.l.b16 %v938
        %v1034 = vunpack.c.l.b16 %v939
        %v1035 = vunpack.c.h.b16 %v939
        %v1036 = vunpack.c.l.b16 %v940
        %v1037 = vunpack.c.l.b16 %v941
        %v1038 = vunpack.c.h.b16 %v941
        %v1039 = vunpack.c.l.b16 %v942
        %v1040 = vpack.c.b16 %v995, %v992
        %v1041 = vpack.c.b16 %v996, %v993
        %v1042 = vpack.c.b16 %v997, %v994
        %v1043 = vpack.c.b16 %v1001, %v998
        %v1044 = vpack.c.b16 %v1002, %v999
        %v1045 = vpack.c.b16 %v1003, %v1000
        %v1046 = vpack.c.b16 %v1007, %v1004
        %v1047 = vpack.c.b16 %v1008, %v1005
        %v1048 = vpack.c.b16 %v1009, %v1006
        %v1049 = vpack.c.b16 %v1013, %v1010
        %v1050 = vpack.c.b16 %v1014, %v1011
        %v1051 = vpack.c.b16 %v1015, %v1012
        %v1052 = vpack.c.b16 %v1019, %v1016
        %v1053 = vpack.c.b16 %v1020, %v1017
        %v1054 = vpack.c.b16 %v1021, %v1018
        %v1055 = vpack.c.b16 %v1025, %v1022
        %v1056 = vpack.c.b16 %v1026, %v1023
        %v1057 = vpack.c.b16 %v1027, %v1024
        %v1058 = vpack.c.b16 %v1031, %v1028
        %v1059 = vpack.c.b16 %v1032, %v1029
        %v1060 = vpack.c.b16 %v1033, %v1030
        %v1061 = vpack.c.b16 %v1037, %v1034
        %v1062 = vpack.c.b16 %v1038, %v1035
        %v1063 = vpack.c.b16 %v1039, %v1036
        %1088 = vmatprep.subr.bf16.mxu0 %v1041
        %1089 = vmatpush1.bf16.msra.mxu0 %v1040
        %1090 = vmatprep.subr.bf16.mxu0 %v1044
        %1091 = vmatpush1.bf16.msra.mxu0 %v1043
        %1092 = vmatprep.subr.bf16.mxu0 %v1047
        %1093 = vmatpush1.bf16.msra.mxu0 %v1046
        %1094 = vmatprep.subr.bf16.mxu0 %v1050
        %1095 = vmatpush1.bf16.msra.mxu0 %v1049
        %1096 = vmatprep.subr.bf16.mxu0 %v1053
        %1097 = vmatpush1.bf16.msra.mxu0 %v1052
        %1098 = vmatprep.subr.bf16.mxu0 %v1056
        %1099 = vmatpush1.bf16.msra.mxu0 %v1055
        %1100 = vmatprep.subr.bf16.mxu0 %v1059
        %1101 = vmatpush1.bf16.msra.mxu0 %v1058
        %1102 = vmatprep.subr.bf16.mxu0 %v1062
        %1103 = vmatpush1.bf16.msra.mxu0 %v1061
        %1104 = vmatprep.subr.bf16.mxu0 0
        %1105 = vmatpush1.bf16.msra.mxu0 0
        %1106 = vmatprep.subr.bf16.mxu0 0
        %1107 = vmatpush1.bf16.msra.mxu0 0
        %1108 = vmatprep.subr.bf16.mxu0 0
        %1109 = vmatpush1.bf16.msra.mxu0 0
        %1110 = vmatprep.subr.bf16.mxu0 0
        %1111 = vmatpush1.bf16.msra.mxu0 0
        %1112 = vmatprep.subr.bf16.mxu0 0
        %1113 = vmatpush1.bf16.msra.mxu0 0
        %1114 = vmatprep.subr.bf16.mxu0 0
        %1115 = vmatpush1.bf16.msra.mxu0 0
        %1116 = vmatprep.subr.bf16.mxu0 0
        %1117 = vmatpush1.bf16.msra.mxu0 0
        %1118 = vmatprep.subr.bf16.mxu0 0
        %1119 = vmatpush1.bf16.msra.mxu0 0
        %1120 = vmatprep.mubr.bf16.mxu0 0
        %1121 = vmatmul.mubr.bf16.gmra.mrb[0].mxu0 %v895
        %v1122 = vpop.f32.mrb[0].mxu0
        %v1123 = vadd.f32 %v948, %v1122
        %v1124 = vpop.f32.mrb[0].mxu0
        %v1125 = vadd.f32 %v952, %v1124
        %v1126 = vpop.f32.mrb[0].mxu0
        %v1127 = vadd.f32 %v948, %v1126
        %v1128 = vpop.f32.mrb[0].mxu0
        %v1129 = vadd.f32 %v952, %v1128
        %1130 = vmatprep.mubr.bf16.mxu0 0
        %1131 = vmatmul.mubr.bf16.gmra.mrb[0].mxu0 %v896
        %v1132 = vpop.f32.mrb[0].mxu0
        %v1133 = vadd.f32 %v948, %v1132
        %v1134 = vpop.f32.mrb[0].mxu0
        %v1135 = vadd.f32 %v952, %v1134
        %v1136 = vpop.f32.mrb[0].mxu0
        %v1137 = vadd.f32 %v948, %v1136
        %v1138 = vpop.f32.mrb[0].mxu0
        %v1139 = vadd.f32 %v952, %v1138
        %1140 = vmatprep.mubr.bf16.mxu0 0
        %1141 = vmatmul.mubr.bf16.gmra.mrb[0].mxu0 %v897
        %v1142 = vpop.f32.mrb[0].mxu0
        %v1143 = vadd.f32 %v948, %v1142
        %v1144 = vpop.f32.mrb[0].mxu0
        %v1145 = vadd.f32 %v952, %v1144
        %v1146 = vpop.f32.mrb[0].mxu0
        %v1147 = vadd.f32 %v948, %v1146
        %v1148 = vpop.f32.mrb[0].mxu0
        %v1149 = vadd.f32 %v952, %v1148
        %1150 = vmatprep.mubr.bf16.mxu0 0
        %1151 = vmatmul.mubr.bf16.gmra.mrb[0].mxu0 %v898
        %v1152 = vpop.f32.mrb[0].mxu0
        %v1153 = vadd.f32 %v948, %v1152
        %v1154 = vpop.f32.mrb[0].mxu0
        %v1155 = vadd.f32 %v952, %v1154
        %v1156 = vpop.f32.mrb[0].mxu0
        %v1157 = vadd.f32 %v948, %v1156
        %v1158 = vpop.f32.mrb[0].mxu0
        %v1159 = vadd.f32 %v952, %v1158
        %1160 = vmatprep.mubr.bf16.mxu0 0
        %1161 = vmatmul.mubr.bf16.gmra.mrb[0].mxu0 %v899
        %v1162 = vpop.f32.mrb[0].mxu0
        %v1163 = vadd.f32 %v948, %v1162
        %v1164 = vpop.f32.mrb[0].mxu0
        %v1165 = vadd.f32 %v952, %v1164
        %v1166 = vpop.f32.mrb[0].mxu0
        %v1167 = vadd.f32 %v948, %v1166
        %v1168 = vpop.f32.mrb[0].mxu0
        %v1169 = vadd.f32 %v952, %v1168
        %1170 = vmatprep.mubr.bf16.mxu0 0
        %1171 = vmatmul.mubr.bf16.gmra.mrb[0].mxu0 %v900
        %v1172 = vpop.f32.mrb[0].mxu0
        %v1173 = vadd.f32 %v948, %v1172
        %v1174 = vpop.f32.mrb[0].mxu0
        %v1175 = vadd.f32 %v952, %v1174
        %v1176 = vpop.f32.mrb[0].mxu0
        %v1177 = vadd.f32 %v948, %v1176
        %v1178 = vpop.f32.mrb[0].mxu0
        %v1179 = vadd.f32 %v952, %v1178
        %1180 = vmatprep.mubr.bf16.mxu0 0
        %1181 = vmatmul.mubr.bf16.gmra.mrb[0].mxu0 %v901
        %v1182 = vpop.f32.mrb[0].mxu0
        %v1183 = vadd.f32 %v948, %v1182
        %v1184 = vpop.f32.mrb[0].mxu0
        %v1185 = vadd.f32 %v952, %v1184
        %v1186 = vpop.f32.mrb[0].mxu0
        %v1187 = vadd.f32 %v948, %v1186
        %v1188 = vpop.f32.mrb[0].mxu0
        %v1189 = vadd.f32 %v952, %v1188
        %1190 = vmatprep.mubr.bf16.mxu0 0
        %1191 = vmatmul.mubr.bf16.gmra.mrb[0].mxu0 %v902
        %v1192 = vpop.f32.mrb[0].mxu0
        %v1193 = vadd.f32 %v948, %v1192
        %v1194 = vpop.f32.mrb[0].mxu0
        %v1195 = vadd.f32 %v952, %v1194
        %v1196 = vpop.f32.mrb[0].mxu0
        %v1197 = vadd.f32 %v948, %v1196
        %v1198 = vpop.f32.mrb[0].mxu0
        %v1199 = vadd.f32 %v952, %v1198
        %1200 = vmatprep.mubr.bf16.mxu0 0
        %1201 = vmatmul.mubr.bf16.gmra.mrb[0].mxu0 %v903
        %v1202 = vpop.f32.mrb[0].mxu0
        %v1203 = vadd.f32 %v948, %v1202
        %v1204 = vpop.f32.mrb[0].mxu0
        %v1205 = vadd.f32 %v952, %v1204
        %v1206 = vpop.f32.mrb[0].mxu0
        %v1207 = vadd.f32 %v948, %v1206
        %v1208 = vpop.f32.mrb[0].mxu0
        %v1209 = vadd.f32 %v952, %v1208
        %1210 = vmatprep.mubr.bf16.mxu0 0
        %1211 = vmatmul.mubr.bf16.gmra.mrb[0].mxu0 %v904
        %v1212 = vpop.f32.mrb[0].mxu0
        %v1213 = vadd.f32 %v948, %v1212
        %v1214 = vpop.f32.mrb[0].mxu0
        %v1215 = vadd.f32 %v952, %v1214
        %v1216 = vpop.f32.mrb[0].mxu0
        %v1217 = vadd.f32 %v948, %v1216
        %v1218 = vpop.f32.mrb[0].mxu0
        %v1219 = vadd.f32 %v952, %v1218
        %1220 = vmatprep.mubr.bf16.mxu0 0
        %1221 = vmatmul.mubr.bf16.gmra.mrb[0].mxu0 %v905
        %v1222 = vpop.f32.mrb[0].mxu0
        %v1223 = vadd.f32 %v948, %v1222
        %v1224 = vpop.f32.mrb[0].mxu0
        %v1225 = vadd.f32 %v952, %v1224
        %v1226 = vpop.f32.mrb[0].mxu0
        %v1227 = vadd.f32 %v948, %v1226
        %v1228 = vpop.f32.mrb[0].mxu0
        %v1229 = vadd.f32 %v952, %v1228
        %1230 = vmatprep.mubr.bf16.mxu0 0
        %1231 = vmatmul.mubr.bf16.gmra.mrb[0].mxu0 %v906
        %v1232 = vpop.f32.mrb[0].mxu0
        %v1233 = vadd.f32 %v948, %v1232
        %v1234 = vpop.f32.mrb[0].mxu0
        %v1235 = vadd.f32 %v952, %v1234
        %v1236 = vpop.f32.mrb[0].mxu0
        %v1237 = vadd.f32 %v948, %v1236
        %v1238 = vpop.f32.mrb[0].mxu0
        %v1239 = vadd.f32 %v952, %v1238
        %1240 = vmatprep.mubr.bf16.mxu0 0
        %1241 = vmatmul.mubr.bf16.gmra.mrb[0].mxu0 %v907
        %v1242 = vpop.f32.mrb[0].mxu0
        %v1243 = vadd.f32 %v948, %v1242
        %v1244 = vpop.f32.mrb[0].mxu0
        %v1245 = vadd.f32 %v952, %v1244
        %v1246 = vpop.f32.mrb[0].mxu0
        %v1247 = vadd.f32 %v948, %v1246
        %v1248 = vpop.f32.mrb[0].mxu0
        %v1249 = vadd.f32 %v952, %v1248
        %1250 = vmatprep.mubr.bf16.mxu0 0
        %1251 = vmatmul.mubr.bf16.gmra.mrb[0].mxu0 %v908
        %v1252 = vpop.f32.mrb[0].mxu0
        %v1253 = vadd.f32 %v948, %v1252
        %v1254 = vpop.f32.mrb[0].mxu0
        %v1255 = vadd.f32 %v952, %v1254
        %v1256 = vpop.f32.mrb[0].mxu0
        %v1257 = vadd.f32 %v948, %v1256
        %v1258 = vpop.f32.mrb[0].mxu0
        %v1259 = vadd.f32 %v952, %v1258
        %1260 = vmatprep.mubr.bf16.mxu0 0
        %1261 = vmatmul.mubr.bf16.gmra.mrb[0].mxu0 %v909
        %v1262 = vpop.f32.mrb[0].mxu0
        %v1263 = vadd.f32 %v948, %v1262
        %v1264 = vpop.f32.mrb[0].mxu0
        %v1265 = vadd.f32 %v952, %v1264
        %v1266 = vpop.f32.mrb[0].mxu0
        %v1267 = vadd.f32 %v948, %v1266
        %v1268 = vpop.f32.mrb[0].mxu0
        %v1269 = vadd.f32 %v952, %v1268
        %1270 = vmatprep.mubr.bf16.mxu0 0
        %1271 = vmatmul.mubr.bf16.gmra.mrb[0].mxu0 %v910
        %v1272 = vpop.f32.mrb[0].mxu0
        %v1273 = vadd.f32 %v948, %v1272
        %v1274 = vpop.f32.mrb[0].mxu0
        %v1275 = vadd.f32 %v952, %v1274
        %v1276 = vpop.f32.mrb[0].mxu0
        %v1277 = vadd.f32 %v948, %v1276
        %v1278 = vpop.f32.mrb[0].mxu0
        %v1279 = vadd.f32 %v952, %v1278
        %1280 = vdwg.mxu0
        %1281 = vmatprep.subr.bf16.mxu0 0
        %1282 = vmatpush1.bf16.msra.mxu0 %v1042
        %1283 = vmatprep.subr.bf16.mxu0 0
        %1284 = vmatpush1.bf16.msra.mxu0 %v1045
        %1285 = vmatprep.subr.bf16.mxu0 0
        %1286 = vmatpush1.bf16.msra.mxu0 %v1048
        %1287 = vmatprep.subr.bf16.mxu0 0
        %1288 = vmatpush1.bf16.msra.mxu0 %v1051
        %1289 = vmatprep.subr.bf16.mxu0 0
        %1290 = vmatpush1.bf16.msra.mxu0 %v1054
        %1291 = vmatprep.subr.bf16.mxu0 0
        %1292 = vmatpush1.bf16.msra.mxu0 %v1057
        %1293 = vmatprep.subr.bf16.mxu0 0
        %1294 = vmatpush1.bf16.msra.mxu0 %v1060
        %1295 = vmatprep.subr.bf16.mxu0 0
        %1296 = vmatpush1.bf16.msra.mxu0 %v1063
        %1297 = vmatprep.subr.bf16.mxu0 0
        %1298 = vmatpush1.bf16.msra.mxu0 0
        %1299 = vmatprep.subr.bf16.mxu0 0
        %1300 = vmatpush1.bf16.msra.mxu0 0
        %1301 = vmatprep.subr.bf16.mxu0 0
        %1302 = vmatpush1.bf16.msra.mxu0 0
        %1303 = vmatprep.subr.bf16.mxu0 0
        %1304 = vmatpush1.bf16.msra.mxu0 0
        %1305 = vmatprep.subr.bf16.mxu0 0
        %1306 = vmatpush1.bf16.msra.mxu0 0
        %1307 = vmatprep.subr.bf16.mxu0 0
        %1308 = vmatpush1.bf16.msra.mxu0 0
        %1309 = vmatprep.subr.bf16.mxu0 0
        %1310 = vmatpush1.bf16.msra.mxu0 0
        %1311 = vmatprep.subr.bf16.mxu0 0
        %1312 = vmatpush1.bf16.msra.mxu0 0
        %1313 = vmatprep.mubr.bf16.mxu0 0
        %1314 = vmatmul.mubr.bf16.gmra.mrb[0].mxu0 %v895
        %v1315 = vpop.f32.mrb[0].mxu0
        %v1316 = vadd.f32 %v956, %v1315
        %v1317 = vpop.f32.mrb[0].mxu0
        %v1318 = vpop.f32.mrb[0].mxu0
        %v1319 = vadd.f32 %v956, %v1318
        %v1320 = vpop.f32.mrb[0].mxu0
        %1321 = vmatprep.mubr.bf16.mxu0 0
        %1322 = vmatmul.mubr.bf16.gmra.mrb[0].mxu0 %v896
        %v1323 = vpop.f32.mrb[0].mxu0
        %v1324 = vadd.f32 %v956, %v1323
        %v1325 = vpop.f32.mrb[0].mxu0
        %v1326 = vpop.f32.mrb[0].mxu0
        %v1327 = vadd.f32 %v956, %v1326
        %v1328 = vpop.f32.mrb[0].mxu0
        %1329 = vmatprep.mubr.bf16.mxu0 0
        %1330 = vmatmul.mubr.bf16.gmra.mrb[0].mxu0 %v897
        %v1331 = vpop.f32.mrb[0].mxu0
        %v1332 = vadd.f32 %v956, %v1331
        %v1333 = vpop.f32.mrb[0].mxu0
        %v1334 = vpop.f32.mrb[0].mxu0
        %v1335 = vadd.f32 %v956, %v1334
        %v1336 = vpop.f32.mrb[0].mxu0
        %1337 = vmatprep.mubr.bf16.mxu0 0
        %1338 = vmatmul.mubr.bf16.gmra.mrb[0].mxu0 %v898
        %v1339 = vpop.f32.mrb[0].mxu0
        %v1340 = vadd.f32 %v956, %v1339
        %v1341 = vpop.f32.mrb[0].mxu0
        %v1342 = vpop.f32.mrb[0].mxu0
        %v1343 = vadd.f32 %v956, %v1342
        %v1344 = vpop.f32.mrb[0].mxu0
        %1345 = vmatprep.mubr.bf16.mxu0 0
        %1346 = vmatmul.mubr.bf16.gmra.mrb[0].mxu0 %v899
        %v1347 = vpop.f32.mrb[0].mxu0
        %v1348 = vadd.f32 %v956, %v1347
        %v1349 = vpop.f32.mrb[0].mxu0
        %v1350 = vpop.f32.mrb[0].mxu0
        %v1351 = vadd.f32 %v956, %v1350
        %v1352 = vpop.f32.mrb[0].mxu0
        %1353 = vmatprep.mubr.bf16.mxu0 0
        %1354 = vmatmul.mubr.bf16.gmra.mrb[0].mxu0 %v900
        %v1355 = vpop.f32.mrb[0].mxu0
        %v1356 = vadd.f32 %v956, %v1355
        %v1357 = vpop.f32.mrb[0].mxu0
        %v1358 = vpop.f32.mrb[0].mxu0
        %v1359 = vadd.f32 %v956, %v1358
        %v1360 = vpop.f32.mrb[0].mxu0
        %1361 = vmatprep.mubr.bf16.mxu0 0
        %1362 = vmatmul.mubr.bf16.gmra.mrb[0].mxu0 %v901
        %v1363 = vpop.f32.mrb[0].mxu0
        %v1364 = vadd.f32 %v956, %v1363
        %v1365 = vpop.f32.mrb[0].mxu0
        %v1366 = vpop.f32.mrb[0].mxu0
        %v1367 = vadd.f32 %v956, %v1366
        %v1368 = vpop.f32.mrb[0].mxu0
        %1369 = vmatprep.mubr.bf16.mxu0 0
        %1370 = vmatmul.mubr.bf16.gmra.mrb[0].mxu0 %v902
        %v1371 = vpop.f32.mrb[0].mxu0
        %v1372 = vadd.f32 %v956, %v1371
        %v1373 = vpop.f32.mrb[0].mxu0
        %v1374 = vpop.f32.mrb[0].mxu0
        %v1375 = vadd.f32 %v956, %v1374
        %v1376 = vpop.f32.mrb[0].mxu0
        %1377 = vmatprep.mubr.bf16.mxu0 0
        %1378 = vmatmul.mubr.bf16.gmra.mrb[0].mxu0 %v903
        %v1379 = vpop.f32.mrb[0].mxu0
        %v1380 = vadd.f32 %v956, %v1379
        %v1381 = vpop.f32.mrb[0].mxu0
        %v1382 = vpop.f32.mrb[0].mxu0
        %v1383 = vadd.f32 %v956, %v1382
        %v1384 = vpop.f32.mrb[0].mxu0
        %1385 = vmatprep.mubr.bf16.mxu0 0
        %1386 = vmatmul.mubr.bf16.gmra.mrb[0].mxu0 %v904
        %v1387 = vpop.f32.mrb[0].mxu0
        %v1388 = vadd.f32 %v956, %v1387
        %v1389 = vpop.f32.mrb[0].mxu0
        %v1390 = vpop.f32.mrb[0].mxu0
        %v1391 = vadd.f32 %v956, %v1390
        %v1392 = vpop.f32.mrb[0].mxu0
        %1393 = vmatprep.mubr.bf16.mxu0 0
        %1394 = vmatmul.mubr.bf16.gmra.mrb[0].mxu0 %v905
        %v1395 = vpop.f32.mrb[0].mxu0
        %v1396 = vadd.f32 %v956, %v1395
        %v1397 = vpop.f32.mrb[0].mxu0
        %v1398 = vpop.f32.mrb[0].mxu0
        %v1399 = vadd.f32 %v956, %v1398
        %v1400 = vpop.f32.mrb[0].mxu0
        %1401 = vmatprep.mubr.bf16.mxu0 0
        %1402 = vmatmul.mubr.bf16.gmra.mrb[0].mxu0 %v906
        %v1403 = vpop.f32.mrb[0].mxu0
        %v1404 = vadd.f32 %v956, %v1403
        %v1405 = vpop.f32.mrb[0].mxu0
        %v1406 = vpop.f32.mrb[0].mxu0
        %v1407 = vadd.f32 %v956, %v1406
        %v1408 = vpop.f32.mrb[0].mxu0
        %1409 = vmatprep.mubr.bf16.mxu0 0
        %1410 = vmatmul.mubr.bf16.gmra.mrb[0].mxu0 %v907
        %v1411 = vpop.f32.mrb[0].mxu0
        %v1412 = vadd.f32 %v956, %v1411
        %v1413 = vpop.f32.mrb[0].mxu0
        %v1414 = vpop.f32.mrb[0].mxu0
        %v1415 = vadd.f32 %v956, %v1414
        %v1416 = vpop.f32.mrb[0].mxu0
        %1417 = vmatprep.mubr.bf16.mxu0 0
        %1418 = vmatmul.mubr.bf16.gmra.mrb[0].mxu0 %v908
        %v1419 = vpop.f32.mrb[0].mxu0
        %v1420 = vadd.f32 %v956, %v1419
        %v1421 = vpop.f32.mrb[0].mxu0
        %v1422 = vpop.f32.mrb[0].mxu0
        %v1423 = vadd.f32 %v956, %v1422
        %v1424 = vpop.f32.mrb[0].mxu0
        %1425 = vmatprep.mubr.bf16.mxu0 0
        %1426 = vmatmul.mubr.bf16.gmra.mrb[0].mxu0 %v909
        %v1427 = vpop.f32.mrb[0].mxu0
        %v1428 = vadd.f32 %v956, %v1427
        %v1429 = vpop.f32.mrb[0].mxu0
        %v1430 = vpop.f32.mrb[0].mxu0
        %v1431 = vadd.f32 %v956, %v1430
        %v1432 = vpop.f32.mrb[0].mxu0
        %1433 = vmatprep.mubr.bf16.mxu0 0
        %1434 = vmatmul.mubr.bf16.gmra.mrb[0].mxu0 %v910
        %v1435 = vpop.f32.mrb[0].mxu0
        %v1436 = vadd.f32 %v956, %v1435
        %v1437 = vpop.f32.mrb[0].mxu0
        %v1438 = vpop.f32.mrb[0].mxu0
        %v1439 = vadd.f32 %v956, %v1438
        %v1440 = vpop.f32.mrb[0].mxu0
        %1441 = vdwg.mxu0
        %v1442 = vpack.c.bf16 %v1127, %v1123
        %v1443 = vpack.c.bf16 %v1137, %v1133
        %v1444 = vpack.c.bf16 %v1147, %v1143
        %v1445 = vpack.c.bf16 %v1157, %v1153
        %v1446 = vpack.c.bf16 %v1167, %v1163
        %v1447 = vpack.c.bf16 %v1177, %v1173
        %v1448 = vpack.c.bf16 %v1187, %v1183
        %v1449 = vpack.c.bf16 %v1197, %v1193
        %v1450 = vpack.c.bf16 %v1207, %v1203
        %v1451 = vpack.c.bf16 %v1217, %v1213
        %v1452 = vpack.c.bf16 %v1227, %v1223
        %v1453 = vpack.c.bf16 %v1237, %v1233
        %v1454 = vpack.c.bf16 %v1247, %v1243
        %v1455 = vpack.c.bf16 %v1257, %v1253
        %v1456 = vpack.c.bf16 %v1267, %v1263
        %v1457 = vpack.c.bf16 %v1277, %v1273
        %1458 = vst [vmem:[#allocation2] sm:$0xff] %v1442
        %1459 = vst [vmem:[#allocation2 + $0x8] sm:$0xff] %v1443
        %1460 = vst [vmem:[#allocation2 + $0x10] sm:$0xff] %v1444
        %1461 = vst [vmem:[#allocation2 + $0x18] sm:$0xff] %v1445
        %1462 = vst [vmem:[#allocation2 + $0x20] sm:$0xff] %v1446
        %1463 = vst [vmem:[#allocation2 + $0x28] sm:$0xff] %v1447
        %1464 = vst [vmem:[#allocation2 + $0x30] sm:$0xff] %v1448
        %1465 = vst [vmem:[#allocation2 + $0x38] sm:$0xff] %v1449
        %1466 = vst [vmem:[#allocation2 + $0x40] sm:$0xff] %v1450
        %1467 = vst [vmem:[#allocation2 + $0x48] sm:$0xff] %v1451
        %1468 = vst [vmem:[#allocation2 + $0x50] sm:$0xff] %v1452
        %1469 = vst [vmem:[#allocation2 + $0x58] sm:$0xff] %v1453
        %1470 = vst [vmem:[#allocation2 + $0x60] sm:$0xff] %v1454
        %1471 = vst [vmem:[#allocation2 + $0x68] sm:$0xff] %v1455
        %1472 = vst [vmem:[#allocation2 + $0x70] sm:$0xff] %v1456
        %1473 = vst [vmem:[#allocation2 + $0x78] sm:$0xff] %v1457
        %v1474 = vpack.c.bf16 %v1319, %v1316
        %v1475 = vpack.c.bf16 %v1327, %v1324
        %v1476 = vpack.c.bf16 %v1335, %v1332
        %v1477 = vpack.c.bf16 %v1343, %v1340
        %v1478 = vpack.c.bf16 %v1351, %v1348
        %v1479 = vpack.c.bf16 %v1359, %v1356
        %v1480 = vpack.c.bf16 %v1367, %v1364
        %v1481 = vpack.c.bf16 %v1375, %v1372
        %v1482 = vpack.c.bf16 %v1383, %v1380
        %v1483 = vpack.c.bf16 %v1391, %v1388
        %v1484 = vpack.c.bf16 %v1399, %v1396
        %v1485 = vpack.c.bf16 %v1407, %v1404
        %v1486 = vpack.c.bf16 %v1415, %v1412
        %v1487 = vpack.c.bf16 %v1423, %v1420
        %v1488 = vpack.c.bf16 %v1431, %v1428
        %v1489 = vpack.c.bf16 %v1439, %v1436
        %1490 = vst [vmem:[#allocation4] sm:$0xff] %v1474
        %1491 = vst [vmem:[#allocation4 + $0x8] sm:$0xff] %v1475
        %1492 = vst [vmem:[#allocation4 + $0x10] sm:$0xff] %v1476
        %1493 = vst [vmem:[#allocation4 + $0x18] sm:$0xff] %v1477
        %1494 = vst [vmem:[#allocation4 + $0x20] sm:$0xff] %v1478
        %1495 = vst [vmem:[#allocation4 + $0x28] sm:$0xff] %v1479
        %1496 = vst [vmem:[#allocation4 + $0x30] sm:$0xff] %v1480
        %1497 = vst [vmem:[#allocation4 + $0x38] sm:$0xff] %v1481
        %1498 = vst [vmem:[#allocation4 + $0x40] sm:$0xff] %v1482
        %1499 = vst [vmem:[#allocation4 + $0x48] sm:$0xff] %v1483
        %1500 = vst [vmem:[#allocation4 + $0x50] sm:$0xff] %v1484
        %1501 = vst [vmem:[#allocation4 + $0x58] sm:$0xff] %v1485
        %1502 = vst [vmem:[#allocation4 + $0x60] sm:$0xff] %v1486
        %1503 = vst [vmem:[#allocation4 + $0x68] sm:$0xff] %v1487
        %1504 = vst [vmem:[#allocation4 + $0x70] sm:$0xff] %v1488
        %1505 = vst [vmem:[#allocation4 + $0x78] sm:$0xff] %v1489
        %1506 = vxpose.xlu0.b32.start [1/16] %v1125, 128
        %1507 = vxpose.xlu0.b32.cont [2/16] %v1129, 128
        %1508 = vxpose.xlu0.b32.cont [3/16] %v1135, 128
        %1509 = vxpose.xlu0.b32.cont [4/16] %v1139, 128
        %1510 = vxpose.xlu0.b32.cont [5/16] %v1145, 128
        %1511 = vxpose.xlu0.b32.cont [6/16] %v1149, 128
        %1512 = vxpose.xlu0.b32.cont [7/16] %v1155, 128
        %1513 = vxpose.xlu0.b32.cont [8/16] %v1159, 128
        %1514 = vxpose.xlu0.b32.cont [9/16] %v1165, 128
        %1515 = vxpose.xlu0.b32.cont [10/16] %v1169, 128
        %1516 = vxpose.xlu0.b32.cont [11/16] %v1175, 128
        %1517 = vxpose.xlu0.b32.cont [12/16] %v1179, 128
        %1518 = vxpose.xlu0.b32.cont [13/16] %v1185, 128
        %1519 = vxpose.xlu0.b32.cont [14/16] %v1189, 128
        %1520 = vxpose.xlu0.b32.cont [15/16] %v1195, 128
        %1521 = vxpose.xlu0.b32.end [16/16] %v1199, 128
        %v1522 = vpop.trf.xlu0
        %v1523 = vpop.trf.xlu0
        %v1524 = vpop.trf.xlu0
        %v1525 = vpop.trf.xlu0
        %v1526 = vpop.trf.xlu0
        %v1527 = vpop.trf.xlu0
        %v1528 = vpop.trf.xlu0
        %v1529 = vpop.trf.xlu0
        %v1530 = vpop.trf.xlu0
        %v1531 = vpop.trf.xlu0
        %v1532 = vpop.trf.xlu0
        %v1533 = vpop.trf.xlu0
        %v1534 = vpop.trf.xlu0
        %v1535 = vpop.trf.xlu0
        %v1536 = vpop.trf.xlu0
        %v1537 = vpop.trf.xlu0
        %1538 = vxpose.xlu0.b32.start [1/16] %v1205, 128
        %1539 = vxpose.xlu0.b32.cont [2/16] %v1209, 128
        %1540 = vxpose.xlu0.b32.cont [3/16] %v1215, 128
        %1541 = vxpose.xlu0.b32.cont [4/16] %v1219, 128
        %1542 = vxpose.xlu0.b32.cont [5/16] %v1225, 128
        %1543 = vxpose.xlu0.b32.cont [6/16] %v1229, 128
        %1544 = vxpose.xlu0.b32.cont [7/16] %v1235, 128
        %1545 = vxpose.xlu0.b32.cont [8/16] %v1239, 128
        %1546 = vxpose.xlu0.b32.cont [9/16] %v1245, 128
        %1547 = vxpose.xlu0.b32.cont [10/16] %v1249, 128
        %1548 = vxpose.xlu0.b32.cont [11/16] %v1255, 128
        %1549 = vxpose.xlu0.b32.cont [12/16] %v1259, 128
        %1550 = vxpose.xlu0.b32.cont [13/16] %v1265, 128
        %1551 = vxpose.xlu0.b32.cont [14/16] %v1269, 128
        %1552 = vxpose.xlu0.b32.cont [15/16] %v1275, 128
        %1553 = vxpose.xlu0.b32.end [16/16] %v1279, 128
        %v1554 = vpop.trf.xlu0
        %v1555 = vpop.trf.xlu0
        %v1556 = vpop.trf.xlu0
        %v1557 = vpop.trf.xlu0
        %v1558 = vpop.trf.xlu0
        %v1559 = vpop.trf.xlu0
        %v1560 = vpop.trf.xlu0
        %v1561 = vpop.trf.xlu0
        %v1562 = vpop.trf.xlu0
        %v1563 = vpop.trf.xlu0
        %v1564 = vpop.trf.xlu0
        %v1565 = vpop.trf.xlu0
        %v1566 = vpop.trf.xlu0
        %v1567 = vpop.trf.xlu0
        %v1568 = vpop.trf.xlu0
        %v1569 = vpop.trf.xlu0
        %v1570 = vpack.c.bf16 %v1523, %v1522
        %v1571 = vpack.c.bf16 %v1555, %v1554
        %v1572 = vpack.c.bf16 %v1525, %v1524
        %v1573 = vpack.c.bf16 %v1557, %v1556
        %v1574 = vpack.c.bf16 %v1527, %v1526
        %v1575 = vpack.c.bf16 %v1559, %v1558
        %v1576 = vpack.c.bf16 %v1529, %v1528
        %v1577 = vpack.c.bf16 %v1561, %v1560
        %v1578 = vpack.c.bf16 %v1531, %v1530
        %v1579 = vpack.c.bf16 %v1563, %v1562
        %v1580 = vpack.c.bf16 %v1533, %v1532
        %v1581 = vpack.c.bf16 %v1565, %v1564
        %v1582 = vpack.c.bf16 %v1535, %v1534
        %v1583 = vpack.c.bf16 %v1567, %v1566
        %v1584 = vpack.c.bf16 %v1537, %v1536
        %v1585 = vpack.c.bf16 %v1569, %v1568
        %1586 = vst [vmem:[#allocation3] sm:$0xff] %v1570
        %1587 = vst [vmem:[#allocation3 + $0x8] sm:$0xff] %v1571
        %1588 = vst [vmem:[#allocation3 + $0x10] sm:$0xff] %v1572
        %1589 = vst [vmem:[#allocation3 + $0x18] sm:$0xff] %v1573
        %1590 = vst [vmem:[#allocation3 + $0x20] sm:$0xff] %v1574
        %1591 = vst [vmem:[#allocation3 + $0x28] sm:$0xff] %v1575
        %1592 = vst [vmem:[#allocation3 + $0x30] sm:$0xff] %v1576
        %1593 = vst [vmem:[#allocation3 + $0x38] sm:$0xff] %v1577
        %1594 = vst [vmem:[#allocation3 + $0x40] sm:$0xff] %v1578
        %1595 = vst [vmem:[#allocation3 + $0x48] sm:$0xff] %v1579
        %1596 = vst [vmem:[#allocation3 + $0x50] sm:$0xff] %v1580
        %1597 = vst [vmem:[#allocation3 + $0x58] sm:$0xff] %v1581
        %1598 = vst [vmem:[#allocation3 + $0x60] sm:$0xff] %v1582
        %1599 = vst [vmem:[#allocation3 + $0x68] sm:$0xff] %v1583
        %1600 = vst [vmem:[#allocation3 + $0x70] sm:$0xff] %v1584
        %1601 = vst [vmem:[#allocation3 + $0x78] sm:$0xff] %v1585
        %v1602 = vld [vmem:[#allocation2] sm:$0xff]
        %v1603 = vld [vmem:[#allocation2 + $0x8] sm:$0xff]
        %v1604 = vld [vmem:[#allocation2 + $0x10] sm:$0xff]
        %v1605 = vld [vmem:[#allocation2 + $0x18] sm:$0xff]
        %v1606 = vld [vmem:[#allocation2 + $0x20] sm:$0xff]
        %v1607 = vld [vmem:[#allocation2 + $0x28] sm:$0xff]
        %v1608 = vld [vmem:[#allocation2 + $0x30] sm:$0xff]
        %v1609 = vld [vmem:[#allocation2 + $0x38] sm:$0xff]
        %v1610 = vld [vmem:[#allocation3] sm:$0xff]
        %v1611 = vld [vmem:[#allocation3 + $0x8] sm:$0xff]
        %v1612 = vld [vmem:[#allocation3 + $0x10] sm:$0xff]
        %v1613 = vld [vmem:[#allocation3 + $0x18] sm:$0xff]
        %v1614 = vld [vmem:[#allocation3 + $0x20] sm:$0xff]
        %v1615 = vld [vmem:[#allocation3 + $0x28] sm:$0xff]
        %v1616 = vld [vmem:[#allocation3 + $0x30] sm:$0xff]
        %v1617 = vld [vmem:[#allocation3 + $0x38] sm:$0xff]
        %v1618 = vld [vmem:[#allocation3 + $0x40] sm:$0xff]
        %v1619 = vld [vmem:[#allocation3 + $0x48] sm:$0xff]
        %v1620 = vld [vmem:[#allocation3 + $0x50] sm:$0xff]
        %v1621 = vld [vmem:[#allocation3 + $0x58] sm:$0xff]
        %v1622 = vld [vmem:[#allocation3 + $0x60] sm:$0xff]
        %v1623 = vld [vmem:[#allocation3 + $0x68] sm:$0xff]
        %v1624 = vld [vmem:[#allocation3 + $0x70] sm:$0xff]
        %v1625 = vld [vmem:[#allocation3 + $0x78] sm:$0xff]
        %1626 = vmatprep.subr.bf16.mxu0 %v1611
        %1627 = vmatpush1.bf16.msra.mxu0 %v1610
        %1628 = vmatprep.subr.bf16.mxu0 %v1613
        %1629 = vmatpush1.bf16.msra.mxu0 %v1612
        %1630 = vmatprep.subr.bf16.mxu0 %v1615
        %1631 = vmatpush1.bf16.msra.mxu0 %v1614
        %1632 = vmatprep.subr.bf16.mxu0 %v1617
        %1633 = vmatpush1.bf16.msra.mxu0 %v1616
        %1634 = vmatprep.subr.bf16.mxu0 %v1619
        %1635 = vmatpush1.bf16.msra.mxu0 %v1618
        %1636 = vmatprep.subr.bf16.mxu0 %v1621
        %1637 = vmatpush1.bf16.msra.mxu0 %v1620
        %1638 = vmatprep.subr.bf16.mxu0 %v1623
        %1639 = vmatpush1.bf16.msra.mxu0 %v1622
        %1640 = vmatprep.subr.bf16.mxu0 %v1625
        %1641 = vmatpush1.bf16.msra.mxu0 %v1624
        %1642 = vmatprep.subr.bf16.mxu0 0
        %1643 = vmatpush1.bf16.msra.mxu0 0
        %1644 = vmatprep.subr.bf16.mxu0 0
        %1645 = vmatpush1.bf16.msra.mxu0 0
        %1646 = vmatprep.subr.bf16.mxu0 0
        %1647 = vmatpush1.bf16.msra.mxu0 0
        %1648 = vmatprep.subr.bf16.mxu0 0
        %1649 = vmatpush1.bf16.msra.mxu0 0
        %1650 = vmatprep.subr.bf16.mxu0 0
        %1651 = vmatpush1.bf16.msra.mxu0 0
        %1652 = vmatprep.subr.bf16.mxu0 0
        %1653 = vmatpush1.bf16.msra.mxu0 0
        %1654 = vmatprep.subr.bf16.mxu0 0
        %1655 = vmatpush1.bf16.msra.mxu0 0
        %1656 = vmatprep.subr.bf16.mxu0 0
        %1657 = vmatpush1.bf16.msra.mxu0 0
        %1658 = vmatprep.mubr.bf16.mxu0 0
        %1659 = vmatmul.mubr.bf16.gmra.mrb[0].mxu0 %v1602
        %v1660 = vpop.f32.mrb[0].mxu0
        %v1661 = vadd.f32 0.0, %v1660
        %v1662 = vpop.f32.mrb[0].mxu0
        %v1663 = vadd.f32 0.0, %v1662
        %v1664 = vpop.f32.mrb[0].mxu0
        %v1665 = vadd.f32 0.0, %v1664
        %v1666 = vpop.f32.mrb[0].mxu0
        %v1667 = vadd.f32 0.0, %v1666
        %1668 = vmatprep.mubr.bf16.mxu0 0
        %1669 = vmatmul.mubr.bf16.gmra.mrb[0].mxu0 %v1603
        %v1670 = vpop.f32.mrb[0].mxu0
        %v1671 = vadd.f32 0.0, %v1670
        %v1672 = vpop.f32.mrb[0].mxu0
        %v1673 = vadd.f32 0.0, %v1672
        %v1674 = vpop.f32.mrb[0].mxu0
        %v1675 = vadd.f32 0.0, %v1674
        %v1676 = vpop.f32.mrb[0].mxu0
        %v1677 = vadd.f32 0.0, %v1676
        %1678 = vmatprep.mubr.bf16.mxu0 0
        %1679 = vmatmul.mubr.bf16.gmra.mrb[0].mxu0 %v1604
        %v1680 = vpop.f32.mrb[0].mxu0
        %v1681 = vadd.f32 0.0, %v1680
        %v1682 = vpop.f32.mrb[0].mxu0
        %v1683 = vadd.f32 0.0, %v1682
        %v1684 = vpop.f32.mrb[0].mxu0
        %v1685 = vadd.f32 0.0, %v1684
        %v1686 = vpop.f32.mrb[0].mxu0
        %v1687 = vadd.f32 0.0, %v1686
        %1688 = vmatprep.mubr.bf16.mxu0 0
        %1689 = vmatmul.mubr.bf16.gmra.mrb[0].mxu0 %v1605
        %v1690 = vpop.f32.mrb[0].mxu0
        %v1691 = vadd.f32 0.0, %v1690
        %v1692 = vpop.f32.mrb[0].mxu0
        %v1693 = vadd.f32 0.0, %v1692
        %v1694 = vpop.f32.mrb[0].mxu0
        %v1695 = vadd.f32 0.0, %v1694
        %v1696 = vpop.f32.mrb[0].mxu0
        %v1697 = vadd.f32 0.0, %v1696
        %1698 = vmatprep.mubr.bf16.mxu0 0
        %1699 = vmatmul.mubr.bf16.gmra.mrb[0].mxu0 %v1606
        %v1700 = vpop.f32.mrb[0].mxu0
        %v1701 = vadd.f32 0.0, %v1700
        %v1702 = vpop.f32.mrb[0].mxu0
        %v1703 = vadd.f32 0.0, %v1702
        %v1704 = vpop.f32.mrb[0].mxu0
        %v1705 = vadd.f32 0.0, %v1704
        %v1706 = vpop.f32.mrb[0].mxu0
        %v1707 = vadd.f32 0.0, %v1706
        %1708 = vmatprep.mubr.bf16.mxu0 0
        %1709 = vmatmul.mubr.bf16.gmra.mrb[0].mxu0 %v1607
        %v1710 = vpop.f32.mrb[0].mxu0
        %v1711 = vadd.f32 0.0, %v1710
        %v1712 = vpop.f32.mrb[0].mxu0
        %v1713 = vadd.f32 0.0, %v1712
        %v1714 = vpop.f32.mrb[0].mxu0
        %v1715 = vadd.f32 0.0, %v1714
        %v1716 = vpop.f32.mrb[0].mxu0
        %v1717 = vadd.f32 0.0, %v1716
        %1718 = vmatprep.mubr.bf16.mxu0 0
        %1719 = vmatmul.mubr.bf16.gmra.mrb[0].mxu0 %v1608
        %v1720 = vpop.f32.mrb[0].mxu0
        %v1721 = vadd.f32 0.0, %v1720
        %v1722 = vpop.f32.mrb[0].mxu0
        %v1723 = vadd.f32 0.0, %v1722
        %v1724 = vpop.f32.mrb[0].mxu0
        %v1725 = vadd.f32 0.0, %v1724
        %v1726 = vpop.f32.mrb[0].mxu0
        %v1727 = vadd.f32 0.0, %v1726
        %1728 = vmatprep.mubr.bf16.mxu0 0
        %1729 = vmatmul.mubr.bf16.gmra.mrb[0].mxu0 %v1609
        %v1730 = vpop.f32.mrb[0].mxu0
        %v1731 = vadd.f32 0.0, %v1730
        %v1732 = vpop.f32.mrb[0].mxu0
        %v1733 = vadd.f32 0.0, %v1732
        %v1734 = vpop.f32.mrb[0].mxu0
        %v1735 = vadd.f32 0.0, %v1734
        %v1736 = vpop.f32.mrb[0].mxu0
        %v1737 = vadd.f32 0.0, %v1736
        %1738 = vdwg.mxu0
        %v1739 = vmax.f32 %v1661, %v1663
        %1740 = vmax.xlane.f32.xlu0 %v1739
        %v1741 = vpop.xlane.xlu0 %1740
        %v1742 = vmax.f32 %v1665, %v1667
        %1743 = vmax.xlane.f32.xlu0 %v1742
        %v1744 = vpop.xlane.xlu0 %1743
        %v1745 = vmax.f32 %v1671, %v1673
        %1746 = vmax.xlane.f32.xlu0 %v1745
        %v1747 = vpop.xlane.xlu0 %1746
        %v1748 = vmax.f32 %v1675, %v1677
        %1749 = vmax.xlane.f32.xlu0 %v1748
        %v1750 = vpop.xlane.xlu0 %1749
        %v1751 = vmax.f32 %v1681, %v1683
        %1752 = vmax.xlane.f32.xlu0 %v1751
        %v1753 = vpop.xlane.xlu0 %1752
        %v1754 = vmax.f32 %v1685, %v1687
        %1755 = vmax.xlane.f32.xlu0 %v1754
        %v1756 = vpop.xlane.xlu0 %1755
        %v1757 = vmax.f32 %v1691, %v1693
        %1758 = vmax.xlane.f32.xlu0 %v1757
        %v1759 = vpop.xlane.xlu0 %1758
        %v1760 = vmax.f32 %v1695, %v1697
        %1761 = vmax.xlane.f32.xlu0 %v1760
        %v1762 = vpop.xlane.xlu0 %1761
        %v1763 = vmax.f32 %v1701, %v1703
        %1764 = vmax.xlane.f32.xlu0 %v1763
        %v1765 = vpop.xlane.xlu0 %1764
        %v1766 = vmax.f32 %v1705, %v1707
        %1767 = vmax.xlane.f32.xlu0 %v1766
        %v1768 = vpop.xlane.xlu0 %1767
        %v1769 = vmax.f32 %v1711, %v1713
        %1770 = vmax.xlane.f32.xlu0 %v1769
        %v1771 = vpop.xlane.xlu0 %1770
        %v1772 = vmax.f32 %v1715, %v1717
        %1773 = vmax.xlane.f32.xlu0 %v1772
        %v1774 = vpop.xlane.xlu0 %1773
        %v1775 = vmax.f32 %v1721, %v1723
        %1776 = vmax.xlane.f32.xlu0 %v1775
        %v1777 = vpop.xlane.xlu0 %1776
        %v1778 = vmax.f32 %v1725, %v1727
        %1779 = vmax.xlane.f32.xlu0 %v1778
        %v1780 = vpop.xlane.xlu0 %1779
        %v1781 = vmax.f32 %v1731, %v1733
        %1782 = vmax.xlane.f32.xlu0 %v1781
        %v1783 = vpop.xlane.xlu0 %1782
        %v1784 = vmax.f32 %v1735, %v1737
        %1785 = vmax.xlane.f32.xlu0 %v1784
        %v1786 = vpop.xlane.xlu0 %1785
        %v1787 = vsub.f32 %v1661, %v1741
        %v1788 = vsub.f32 %v1663, %v1741
        %v1789 = vsub.f32 %v1665, %v1744
        %v1790 = vsub.f32 %v1667, %v1744
        %v1791 = vsub.f32 %v1671, %v1747
        %v1792 = vsub.f32 %v1673, %v1747
        %v1793 = vsub.f32 %v1675, %v1750
        %v1794 = vsub.f32 %v1677, %v1750
        %v1795 = vsub.f32 %v1681, %v1753
        %v1796 = vsub.f32 %v1683, %v1753
        %v1797 = vsub.f32 %v1685, %v1756
        %v1798 = vsub.f32 %v1687, %v1756
        %v1799 = vsub.f32 %v1691, %v1759
        %v1800 = vsub.f32 %v1693, %v1759
        %v1801 = vsub.f32 %v1695, %v1762
        %v1802 = vsub.f32 %v1697, %v1762
        %v1803 = vsub.f32 %v1701, %v1765
        %v1804 = vsub.f32 %v1703, %v1765
        %v1805 = vsub.f32 %v1705, %v1768
        %v1806 = vsub.f32 %v1707, %v1768
        %v1807 = vsub.f32 %v1711, %v1771
        %v1808 = vsub.f32 %v1713, %v1771
        %v1809 = vsub.f32 %v1715, %v1774
        %v1810 = vsub.f32 %v1717, %v1774
        %v1811 = vsub.f32 %v1721, %v1777
        %v1812 = vsub.f32 %v1723, %v1777
        %v1813 = vsub.f32 %v1725, %v1780
        %v1814 = vsub.f32 %v1727, %v1780
        %v1815 = vsub.f32 %v1731, %v1783
        %v1816 = vsub.f32 %v1733, %v1783
        %v1817 = vsub.f32 %v1735, %v1786
        %v1818 = vsub.f32 %v1737, %v1786
        %v1819 = vpack.c.bf16 %v1789, %v1787
        %v1820 = vpack.c.bf16 %v1790, %v1788
        %v1821 = vpack.c.bf16 %v1793, %v1791
        %v1822 = vpack.c.bf16 %v1794, %v1792
        %v1823 = vpack.c.bf16 %v1797, %v1795
        %v1824 = vpack.c.bf16 %v1798, %v1796
        %v1825 = vpack.c.bf16 %v1801, %v1799
        %v1826 = vpack.c.bf16 %v1802, %v1800
        %v1827 = vpack.c.bf16 %v1805, %v1803
        %v1828 = vpack.c.bf16 %v1806, %v1804
        %v1829 = vpack.c.bf16 %v1809, %v1807
        %v1830 = vpack.c.bf16 %v1810, %v1808
        %v1831 = vpack.c.bf16 %v1813, %v1811
        %v1832 = vpack.c.bf16 %v1814, %v1812
        %v1833 = vpack.c.bf16 %v1817, %v1815
        %v1834 = vpack.c.bf16 %v1818, %v1816
        %v1836 = vmul.bf16 %v1819, 1069105081
        %v1837 = vpow.bf16.pop %v1836
        %v1839 = vmul.bf16 %v1820, 1069105081
        %v1840 = vpow.bf16.pop %v1839
        %v1842 = vmul.bf16 %v1821, 1069105081
        %v1843 = vpow.bf16.pop %v1842
        %v1845 = vmul.bf16 %v1822, 1069105081
        %v1846 = vpow.bf16.pop %v1845
        %v1848 = vmul.bf16 %v1823, 1069105081
        %v1849 = vpow.bf16.pop %v1848
        %v1851 = vmul.bf16 %v1824, 1069105081
        %v1852 = vpow.bf16.pop %v1851
        %v1854 = vmul.bf16 %v1825, 1069105081
        %v1855 = vpow.bf16.pop %v1854
        %v1857 = vmul.bf16 %v1826, 1069105081
        %v1858 = vpow.bf16.pop %v1857
        %v1860 = vmul.bf16 %v1827, 1069105081
        %v1861 = vpow.bf16.pop %v1860
        %v1863 = vmul.bf16 %v1828, 1069105081
        %v1864 = vpow.bf16.pop %v1863
        %v1866 = vmul.bf16 %v1829, 1069105081
        %v1867 = vpow.bf16.pop %v1866
        %v1869 = vmul.bf16 %v1830, 1069105081
        %v1870 = vpow.bf16.pop %v1869
        %v1872 = vmul.bf16 %v1831, 1069105081
        %v1873 = vpow.bf16.pop %v1872
        %v1875 = vmul.bf16 %v1832, 1069105081
        %v1876 = vpow.bf16.pop %v1875
        %v1878 = vmul.bf16 %v1833, 1069105081
        %v1879 = vpow.bf16.pop %v1878
        %v1881 = vmul.bf16 %v1834, 1069105081
        %v1882 = vpow.bf16.pop %v1881
        %v1883 = vunpack.c.l.bf16 %v1837
        %v1884 = vunpack.c.l.bf16 %v1840
        %v1885 = vunpack.c.h.bf16 %v1837
        %v1886 = vunpack.c.h.bf16 %v1840
        %v1887 = vunpack.c.l.bf16 %v1843
        %v1888 = vunpack.c.l.bf16 %v1846
        %v1889 = vunpack.c.h.bf16 %v1843
        %v1890 = vunpack.c.h.bf16 %v1846
        %v1891 = vunpack.c.l.bf16 %v1849
        %v1892 = vunpack.c.l.bf16 %v1852
        %v1893 = vunpack.c.h.bf16 %v1849
        %v1894 = vunpack.c.h.bf16 %v1852
        %v1895 = vunpack.c.l.bf16 %v1855
        %v1896 = vunpack.c.l.bf16 %v1858
        %v1897 = vunpack.c.h.bf16 %v1855
        %v1898 = vunpack.c.h.bf16 %v1858
        %v1899 = vunpack.c.l.bf16 %v1861
        %v1900 = vunpack.c.l.bf16 %v1864
        %v1901 = vunpack.c.h.bf16 %v1861
        %v1902 = vunpack.c.h.bf16 %v1864
        %v1903 = vunpack.c.l.bf16 %v1867
        %v1904 = vunpack.c.l.bf16 %v1870
        %v1905 = vunpack.c.h.bf16 %v1867
        %v1906 = vunpack.c.h.bf16 %v1870
        %v1907 = vunpack.c.l.bf16 %v1873
        %v1908 = vunpack.c.l.bf16 %v1876
        %v1909 = vunpack.c.h.bf16 %v1873
        %v1910 = vunpack.c.h.bf16 %v1876
        %v1911 = vunpack.c.l.bf16 %v1879
        %v1912 = vunpack.c.l.bf16 %v1882
        %v1913 = vunpack.c.h.bf16 %v1879
        %v1914 = vunpack.c.h.bf16 %v1882
        %v1915 = vadd.f32 %v1883, %v1884
        %1916 = vadd.xlane.f32.xlu0 %v1915
        %v1917 = vpop.xlane.xlu0 %1916
        %v1918 = vadd.f32 %v1885, %v1886
        %1919 = vadd.xlane.f32.xlu0 %v1918
        %v1920 = vpop.xlane.xlu0 %1919
        %v1921 = vadd.f32 %v1887, %v1888
        %1922 = vadd.xlane.f32.xlu0 %v1921
        %v1923 = vpop.xlane.xlu0 %1922
        %v1924 = vadd.f32 %v1889, %v1890
        %1925 = vadd.xlane.f32.xlu0 %v1924
        %v1926 = vpop.xlane.xlu0 %1925
        %v1927 = vadd.f32 %v1891, %v1892
        %1928 = vadd.xlane.f32.xlu0 %v1927
        %v1929 = vpop.xlane.xlu0 %1928
        %v1930 = vadd.f32 %v1893, %v1894
        %1931 = vadd.xlane.f32.xlu0 %v1930
        %v1932 = vpop.xlane.xlu0 %1931
        %v1933 = vadd.f32 %v1895, %v1896
        %1934 = vadd.xlane.f32.xlu0 %v1933
        %v1935 = vpop.xlane.xlu0 %1934
        %v1936 = vadd.f32 %v1897, %v1898
        %1937 = vadd.xlane.f32.xlu0 %v1936
        %v1938 = vpop.xlane.xlu0 %1937
        %v1939 = vadd.f32 %v1899, %v1900
        %1940 = vadd.xlane.f32.xlu0 %v1939
        %v1941 = vpop.xlane.xlu0 %1940
        %v1942 = vadd.f32 %v1901, %v1902
        %1943 = vadd.xlane.f32.xlu0 %v1942
        %v1944 = vpop.xlane.xlu0 %1943
        %v1945 = vadd.f32 %v1903, %v1904
        %1946 = vadd.xlane.f32.xlu0 %v1945
        %v1947 = vpop.xlane.xlu0 %1946
        %v1948 = vadd.f32 %v1905, %v1906
        %1949 = vadd.xlane.f32.xlu0 %v1948
        %v1950 = vpop.xlane.xlu0 %1949
        %v1951 = vadd.f32 %v1907, %v1908
        %1952 = vadd.xlane.f32.xlu0 %v1951
        %v1953 = vpop.xlane.xlu0 %1952
        %v1954 = vadd.f32 %v1909, %v1910
        %1955 = vadd.xlane.f32.xlu0 %v1954
        %v1956 = vpop.xlane.xlu0 %1955
        %v1957 = vadd.f32 %v1911, %v1912
        %1958 = vadd.xlane.f32.xlu0 %v1957
        %v1959 = vpop.xlane.xlu0 %1958
        %v1960 = vadd.f32 %v1913, %v1914
        %1961 = vadd.xlane.f32.xlu0 %v1960
        %v1962 = vpop.xlane.xlu0 %1961
        %v1963 = vld [vmem:[#allocation4] sm:$0xff]
        %v1964 = vld [vmem:[#allocation4 + $0x8] sm:$0xff]
        %v1965 = vld [vmem:[#allocation4 + $0x10] sm:$0xff]
        %v1966 = vld [vmem:[#allocation4 + $0x18] sm:$0xff]
        %v1967 = vld [vmem:[#allocation4 + $0x20] sm:$0xff]
        %v1968 = vld [vmem:[#allocation4 + $0x28] sm:$0xff]
        %v1969 = vld [vmem:[#allocation4 + $0x30] sm:$0xff]
        %v1970 = vld [vmem:[#allocation4 + $0x38] sm:$0xff]
        %v1971 = vld [vmem:[#allocation4 + $0x40] sm:$0xff]
        %v1972 = vld [vmem:[#allocation4 + $0x48] sm:$0xff]
        %v1973 = vld [vmem:[#allocation4 + $0x50] sm:$0xff]
        %v1974 = vld [vmem:[#allocation4 + $0x58] sm:$0xff]
        %v1975 = vld [vmem:[#allocation4 + $0x60] sm:$0xff]
        %v1976 = vld [vmem:[#allocation4 + $0x68] sm:$0xff]
        %v1977 = vld [vmem:[#allocation4 + $0x70] sm:$0xff]
        %v1978 = vld [vmem:[#allocation4 + $0x78] sm:$0xff]
        %1979 = vmatprep.subr.bf16.mxu0 0
        %1980 = vmatpush1.bf16.msra.mxu0 %v1963
        %1981 = vmatprep.subr.bf16.mxu0 0
        %1982 = vmatpush1.bf16.msra.mxu0 %v1964
        %1983 = vmatprep.subr.bf16.mxu0 0
        %1984 = vmatpush1.bf16.msra.mxu0 %v1965
        %1985 = vmatprep.subr.bf16.mxu0 0
        %1986 = vmatpush1.bf16.msra.mxu0 %v1966
        %1987 = vmatprep.subr.bf16.mxu0 0
        %1988 = vmatpush1.bf16.msra.mxu0 %v1967
        %1989 = vmatprep.subr.bf16.mxu0 0
        %1990 = vmatpush1.bf16.msra.mxu0 %v1968
        %1991 = vmatprep.subr.bf16.mxu0 0
        %1992 = vmatpush1.bf16.msra.mxu0 %v1969
        %1993 = vmatprep.subr.bf16.mxu0 0
        %1994 = vmatpush1.bf16.msra.mxu0 %v1970
        %1995 = vmatprep.subr.bf16.mxu0 0
        %1996 = vmatpush1.bf16.msra.mxu0 %v1971
        %1997 = vmatprep.subr.bf16.mxu0 0
        %1998 = vmatpush1.bf16.msra.mxu0 %v1972
        %1999 = vmatprep.subr.bf16.mxu0 0
        %2000 = vmatpush1.bf16.msra.mxu0 %v1973
        %2001 = vmatprep.subr.bf16.mxu0 0
        %2002 = vmatpush1.bf16.msra.mxu0 %v1974
        %2003 = vmatprep.subr.bf16.mxu0 0
        %2004 = vmatpush1.bf16.msra.mxu0 %v1975
        %2005 = vmatprep.subr.bf16.mxu0 0
        %2006 = vmatpush1.bf16.msra.mxu0 %v1976
        %2007 = vmatprep.subr.bf16.mxu0 0
        %2008 = vmatpush1.bf16.msra.mxu0 %v1977
        %2009 = vmatprep.subr.bf16.mxu0 0
        %2010 = vmatpush1.bf16.msra.mxu0 %v1978
        %2011 = vmatprep.mubr.bf16.mxu0 %v1840
        %2012 = vmatmul.mubr.bf16.gmra.mrb[0].mxu0 %v1837
        %v2013 = vpop.f32.mrb[0].mxu0
        %v2014 = vadd.f32 0.0, %v2013
        %v2015 = vpop.f32.mrb[0].mxu0
        %v2016 = vpop.f32.mrb[0].mxu0
        %v2017 = vadd.f32 0.0, %v2016
        %v2018 = vpop.f32.mrb[0].mxu0
        %2019 = vmatprep.mubr.bf16.mxu0 %v1846
        %2020 = vmatmul.mubr.bf16.gmra.mrb[0].mxu0 %v1843
        %v2021 = vpop.f32.mrb[0].mxu0
        %v2022 = vadd.f32 0.0, %v2021
        %v2023 = vpop.f32.mrb[0].mxu0
        %v2024 = vpop.f32.mrb[0].mxu0
        %v2025 = vadd.f32 0.0, %v2024
        %v2026 = vpop.f32.mrb[0].mxu0
        %2027 = vmatprep.mubr.bf16.mxu0 %v1852
        %2028 = vmatmul.mubr.bf16.gmra.mrb[0].mxu0 %v1849
        %v2029 = vpop.f32.mrb[0].mxu0
        %v2030 = vadd.f32 0.0, %v2029
        %v2031 = vpop.f32.mrb[0].mxu0
        %v2032 = vpop.f32.mrb[0].mxu0
        %v2033 = vadd.f32 0.0, %v2032
        %v2034 = vpop.f32.mrb[0].mxu0
        %2035 = vmatprep.mubr.bf16.mxu0 %v1858
        %2036 = vmatmul.mubr.bf16.gmra.mrb[0].mxu0 %v1855
        %v2037 = vpop.f32.mrb[0].mxu0
        %v2038 = vadd.f32 0.0, %v2037
        %v2039 = vpop.f32.mrb[0].mxu0
        %v2040 = vpop.f32.mrb[0].mxu0
        %v2041 = vadd.f32 0.0, %v2040
        %v2042 = vpop.f32.mrb[0].mxu0
        %2043 = vmatprep.mubr.bf16.mxu0 %v1864
        %2044 = vmatmul.mubr.bf16.gmra.mrb[0].mxu0 %v1861
        %v2045 = vpop.f32.mrb[0].mxu0
        %v2046 = vadd.f32 0.0, %v2045
        %v2047 = vpop.f32.mrb[0].mxu0
        %v2048 = vpop.f32.mrb[0].mxu0
        %v2049 = vadd.f32 0.0, %v2048
        %v2050 = vpop.f32.mrb[0].mxu0
        %2051 = vmatprep.mubr.bf16.mxu0 %v1870
        %2052 = vmatmul.mubr.bf16.gmra.mrb[0].mxu0 %v1867
        %v2053 = vpop.f32.mrb[0].mxu0
        %v2054 = vadd.f32 0.0, %v2053
        %v2055 = vpop.f32.mrb[0].mxu0
        %v2056 = vpop.f32.mrb[0].mxu0
        %v2057 = vadd.f32 0.0, %v2056
        %v2058 = vpop.f32.mrb[0].mxu0
        %2059 = vmatprep.mubr.bf16.mxu0 %v1876
        %2060 = vmatmul.mubr.bf16.gmra.mrb[0].mxu0 %v1873
        %v2061 = vpop.f32.mrb[0].mxu0
        %v2062 = vadd.f32 0.0, %v2061
        %v2063 = vpop.f32.mrb[0].mxu0
        %v2064 = vpop.f32.mrb[0].mxu0
        %v2065 = vadd.f32 0.0, %v2064
        %v2066 = vpop.f32.mrb[0].mxu0
        %2067 = vmatprep.mubr.bf16.mxu0 %v1882
        %2068 = vmatmul.mubr.bf16.gmra.mrb[0].mxu0 %v1879
        %v2069 = vpop.f32.mrb[0].mxu0
        %v2070 = vadd.f32 0.0, %v2069
        %v2071 = vpop.f32.mrb[0].mxu0
        %v2072 = vpop.f32.mrb[0].mxu0
        %v2073 = vadd.f32 0.0, %v2072
        %v2074 = vpop.f32.mrb[0].mxu0
        %2075 = vdwg.mxu0
        %v2076 = vrcp.pop %v1917
        %v2077 = vrcp.pop %v1920
        %v2078 = vrcp.pop %v1923
        %v2079 = vrcp.pop %v1926
        %v2080 = vrcp.pop %v1929
        %v2081 = vrcp.pop %v1932
        %v2082 = vrcp.pop %v1935
        %v2083 = vrcp.pop %v1938
        %v2084 = vrcp.pop %v1941
        %v2085 = vrcp.pop %v1944
        %v2086 = vrcp.pop %v1947
        %v2087 = vrcp.pop %v1950
        %v2088 = vrcp.pop %v1953
        %v2089 = vrcp.pop %v1956
        %v2090 = vrcp.pop %v1959
        %v2091 = vrcp.pop %v1962
        %v2092 = vmul.f32 %v2014, %v2076
        %v2093 = vmul.f32 %v2017, %v2077
        %v2094 = vmul.f32 %v2022, %v2078
        %v2095 = vmul.f32 %v2025, %v2079
        %v2096 = vmul.f32 %v2030, %v2080
        %v2097 = vmul.f32 %v2033, %v2081
        %v2098 = vmul.f32 %v2038, %v2082
        %v2099 = vmul.f32 %v2041, %v2083
        %v2100 = vmul.f32 %v2046, %v2084
        %v2101 = vmul.f32 %v2049, %v2085
        %v2102 = vmul.f32 %v2054, %v2086
        %v2103 = vmul.f32 %v2057, %v2087
        %v2104 = vmul.f32 %v2062, %v2088
        %v2105 = vmul.f32 %v2065, %v2089
        %v2106 = vmul.f32 %v2070, %v2090
        %v2107 = vmul.f32 %v2073, %v2091
        %v2108 = vpack.c.bf16 %v2093, %v2092
        %v2109 = vpack.c.bf16 %v2095, %v2094
        %v2110 = vpack.c.bf16 %v2097, %v2096
        %v2111 = vpack.c.bf16 %v2099, %v2098
        %v2112 = vpack.c.bf16 %v2101, %v2100
        %v2113 = vpack.c.bf16 %v2103, %v2102
        %v2114 = vpack.c.bf16 %v2105, %v2104
        %v2115 = vpack.c.bf16 %v2107, %v2106
        %v2116 = vld [vmem:[%s7] sm:$0xf]
        %v2117 = vld [vmem:[%s7 + $0x4] sm:$0xf]
        %v2118 = vld [vmem:[%s7 + $0x8] sm:$0xf]
        %v2119 = vld [vmem:[%s7 + $0xc] sm:$0xf]
        %v2120 = vld [vmem:[%s7 + $0x10] sm:$0xf]
        %v2121 = vld [vmem:[%s7 + $0x14] sm:$0xf]
        %v2122 = vld [vmem:[%s7 + $0x18] sm:$0xf]
        %v2123 = vld [vmem:[%s7 + $0x1c] sm:$0xf]
        %v2124 = vld [vmem:[%s7 + $0x20] sm:$0xf]
        %v2125 = vld [vmem:[%s7 + $0x24] sm:$0xf]
        %v2126 = vld [vmem:[%s7 + $0x28] sm:$0xf]
        %v2127 = vld [vmem:[%s7 + $0x2c] sm:$0xf]
        %v2128 = vld [vmem:[%s7 + $0x30] sm:$0xf]
        %v2129 = vld [vmem:[%s7 + $0x34] sm:$0xf]
        %v2130 = vld [vmem:[%s7 + $0x38] sm:$0xf]
        %v2131 = vld [vmem:[%s7 + $0x3c] sm:$0xf]
        %v2132 = vld [vmem:[%s8] sm:$0x1]
        %v2134 = vlaneseq
        %v2135 = vshrl.u32 %v2134, 7
        %v2136 = vsub.s32 0, %v2135
        %v2137 = vrot.slane %v2132, %v2136
        %v2155 = vunpack.c.l.b16 %v2116
        %v2156 = vunpack.c.l.b16 %v2117
        %v2157 = vunpack.c.l.b16 %v2118
        %v2158 = vunpack.c.l.b16 %v2119
        %v2159 = vunpack.c.l.b16 %v2120
        %v2160 = vunpack.c.l.b16 %v2121
        %v2161 = vunpack.c.l.b16 %v2122
        %v2162 = vunpack.c.l.b16 %v2123
        %v2163 = vunpack.c.l.b16 %v2124
        %v2164 = vunpack.c.l.b16 %v2125
        %v2165 = vunpack.c.l.b16 %v2126
        %v2166 = vunpack.c.l.b16 %v2127
        %v2167 = vunpack.c.l.b16 %v2128
        %v2168 = vunpack.c.l.b16 %v2129
        %v2169 = vunpack.c.l.b16 %v2130
        %v2170 = vunpack.c.l.b16 %v2131
        %v2171 = vpack.c.b16 %v2156, %v2155
        %v2172 = vpack.c.b16 %v2158, %v2157
        %v2173 = vpack.c.b16 %v2160, %v2159
        %v2174 = vpack.c.b16 %v2162, %v2161
        %v2175 = vpack.c.b16 %v2164, %v2163
        %v2176 = vpack.c.b16 %v2166, %v2165
        %v2177 = vpack.c.b16 %v2168, %v2167
        %v2178 = vpack.c.b16 %v2170, %v2169
        %2187 = vmatprep.subr.bf16.mxu0 0
        %2188 = vmatpush1.bf16.msra.mxu0 %v2171
        %2189 = vmatprep.subr.bf16.mxu0 0
        %2190 = vmatpush1.bf16.msra.mxu0 %v2172
        %2191 = vmatprep.subr.bf16.mxu0 0
        %2192 = vmatpush1.bf16.msra.mxu0 %v2173
        %2193 = vmatprep.subr.bf16.mxu0 0
        %2194 = vmatpush1.bf16.msra.mxu0 %v2174
        %2195 = vmatprep.subr.bf16.mxu0 0
        %2196 = vmatpush1.bf16.msra.mxu0 %v2175
        %2197 = vmatprep.subr.bf16.mxu0 0
        %2198 = vmatpush1.bf16.msra.mxu0 %v2176
        %2199 = vmatprep.subr.bf16.mxu0 0
        %2200 = vmatpush1.bf16.msra.mxu0 %v2177
        %2201 = vmatprep.subr.bf16.mxu0 0
        %2202 = vmatpush1.bf16.msra.mxu0 %v2178
        %2203 = vmatprep.subr.bf16.mxu0 0
        %2204 = vmatpush1.bf16.msra.mxu0 0
        %2205 = vmatprep.subr.bf16.mxu0 0
        %2206 = vmatpush1.bf16.msra.mxu0 0
        %2207 = vmatprep.subr.bf16.mxu0 0
        %2208 = vmatpush1.bf16.msra.mxu0 0
        %2209 = vmatprep.subr.bf16.mxu0 0
        %2210 = vmatpush1.bf16.msra.mxu0 0
        %2211 = vmatprep.subr.bf16.mxu0 0
        %2212 = vmatpush1.bf16.msra.mxu0 0
        %2213 = vmatprep.subr.bf16.mxu0 0
        %2214 = vmatpush1.bf16.msra.mxu0 0
        %2215 = vmatprep.subr.bf16.mxu0 0
        %2216 = vmatpush1.bf16.msra.mxu0 0
        %2217 = vmatprep.subr.bf16.mxu0 0
        %2218 = vmatpush1.bf16.msra.mxu0 0
        %2219 = vmatprep.mubr.bf16.mxu0 0
        %2220 = vmatmul.mubr.bf16.gmra.mrb[0].mxu0 %v2108
        %v2221 = vpop.f32.mrb[0].mxu0
        %v2222 = vadd.f32 %v2137, %v2221
        %v2223 = vpop.f32.mrb[0].mxu0
        %v2224 = vpop.f32.mrb[0].mxu0
        %v2225 = vadd.f32 %v2137, %v2224
        %v2226 = vpop.f32.mrb[0].mxu0
        %2227 = vmatprep.mubr.bf16.mxu0 0
        %2228 = vmatmul.mubr.bf16.gmra.mrb[0].mxu0 %v2109
        %v2229 = vpop.f32.mrb[0].mxu0
        %v2230 = vadd.f32 %v2137, %v2229
        %v2231 = vpop.f32.mrb[0].mxu0
        %v2232 = vpop.f32.mrb[0].mxu0
        %v2233 = vadd.f32 %v2137, %v2232
        %v2234 = vpop.f32.mrb[0].mxu0
        %2235 = vmatprep.mubr.bf16.mxu0 0
        %2236 = vmatmul.mubr.bf16.gmra.mrb[0].mxu0 %v2110
        %v2237 = vpop.f32.mrb[0].mxu0
        %v2238 = vadd.f32 %v2137, %v2237
        %v2239 = vpop.f32.mrb[0].mxu0
        %v2240 = vpop.f32.mrb[0].mxu0
        %v2241 = vadd.f32 %v2137, %v2240
        %v2242 = vpop.f32.mrb[0].mxu0
        %2243 = vmatprep.mubr.bf16.mxu0 0
        %2244 = vmatmul.mubr.bf16.gmra.mrb[0].mxu0 %v2111
        %v2245 = vpop.f32.mrb[0].mxu0
        %v2246 = vadd.f32 %v2137, %v2245
        %v2247 = vpop.f32.mrb[0].mxu0
        %v2248 = vpop.f32.mrb[0].mxu0
        %v2249 = vadd.f32 %v2137, %v2248
        %v2250 = vpop.f32.mrb[0].mxu0
        %2251 = vmatprep.mubr.bf16.mxu0 0
        %2252 = vmatmul.mubr.bf16.gmra.mrb[0].mxu0 %v2112
        %v2253 = vpop.f32.mrb[0].mxu0
        %v2254 = vadd.f32 %v2137, %v2253
        %v2255 = vpop.f32.mrb[0].mxu0
        %v2256 = vpop.f32.mrb[0].mxu0
        %v2257 = vadd.f32 %v2137, %v2256
        %v2258 = vpop.f32.mrb[0].mxu0
        %2259 = vmatprep.mubr.bf16.mxu0 0
        %2260 = vmatmul.mubr.bf16.gmra.mrb[0].mxu0 %v2113
        %v2261 = vpop.f32.mrb[0].mxu0
        %v2262 = vadd.f32 %v2137, %v2261
        %v2263 = vpop.f32.mrb[0].mxu0
        %v2264 = vpop.f32.mrb[0].mxu0
        %v2265 = vadd.f32 %v2137, %v2264
        %v2266 = vpop.f32.mrb[0].mxu0
        %2267 = vmatprep.mubr.bf16.mxu0 0
        %2268 = vmatmul.mubr.bf16.gmra.mrb[0].mxu0 %v2114
        %v2269 = vpop.f32.mrb[0].mxu0
        %v2270 = vadd.f32 %v2137, %v2269
        %v2271 = vpop.f32.mrb[0].mxu0
        %v2272 = vpop.f32.mrb[0].mxu0
        %v2273 = vadd.f32 %v2137, %v2272
        %v2274 = vpop.f32.mrb[0].mxu0
        %2275 = vmatprep.mubr.bf16.mxu0 0
        %2276 = vmatmul.mubr.bf16.gmra.mrb[0].mxu0 %v2115
        %v2277 = vpop.f32.mrb[0].mxu0
        %v2278 = vadd.f32 %v2137, %v2277
        %v2279 = vpop.f32.mrb[0].mxu0
        %v2280 = vpop.f32.mrb[0].mxu0
        %v2281 = vadd.f32 %v2137, %v2280
        %v2282 = vpop.f32.mrb[0].mxu0
        %2283 = vdwg.mxu0
        %v2284 = vld [vmem:[%s330] sm:$0xff]
        %v2285 = vld [vmem:[%s330 + $0x8] sm:$0xff]
        %v2286 = vld [vmem:[%s330 + $0x10] sm:$0xff]
        %v2287 = vld [vmem:[%s330 + $0x18] sm:$0xff]
        %v2288 = vld [vmem:[%s330 + $0x20] sm:$0xff]
        %v2289 = vld [vmem:[%s330 + $0x28] sm:$0xff]
        %v2290 = vld [vmem:[%s330 + $0x30] sm:$0xff]
        %v2291 = vld [vmem:[%s330 + $0x38] sm:$0xff]
        %v2292 = vld [vmem:[%s330 + $0x40] sm:$0xff]
        %v2293 = vld [vmem:[%s330 + $0x48] sm:$0xff]
        %v2294 = vld [vmem:[%s330 + $0x50] sm:$0xff]
        %v2295 = vld [vmem:[%s330 + $0x58] sm:$0xff]
        %v2296 = vld [vmem:[%s330 + $0x60] sm:$0xff]
        %v2297 = vld [vmem:[%s330 + $0x68] sm:$0xff]
        %v2298 = vld [vmem:[%s330 + $0x70] sm:$0xff]
        %v2299 = vld [vmem:[%s330 + $0x78] sm:$0xff]
        %v2300 = vadd.f32 %v2284, %v2222
        %v2301 = vadd.f32 %v2285, %v2225
        %v2302 = vadd.f32 %v2286, %v2230
        %v2303 = vadd.f32 %v2287, %v2233
        %v2304 = vadd.f32 %v2288, %v2238
        %v2305 = vadd.f32 %v2289, %v2241
        %v2306 = vadd.f32 %v2290, %v2246
        %v2307 = vadd.f32 %v2291, %v2249
        %v2308 = vadd.f32 %v2292, %v2254
        %v2309 = vadd.f32 %v2293, %v2257
        %v2310 = vadd.f32 %v2294, %v2262
        %v2311 = vadd.f32 %v2295, %v2265
        %v2312 = vadd.f32 %v2296, %v2270
        %v2313 = vadd.f32 %v2297, %v2273
        %v2314 = vadd.f32 %v2298, %v2278
        %v2315 = vadd.f32 %v2299, %v2281
        %2316 = vst [vmem:[%s325] sm:$0xff] %v2300
        %2317 = vst [vmem:[%s325 + $0x8] sm:$0xff] %v2301
        %2318 = vst [vmem:[%s325 + $0x10] sm:$0xff] %v2302
        %2319 = vst [vmem:[%s325 + $0x18] sm:$0xff] %v2303
        %2320 = vst [vmem:[%s325 + $0x20] sm:$0xff] %v2304
        %2321 = vst [vmem:[%s325 + $0x28] sm:$0xff] %v2305
        %2322 = vst [vmem:[%s325 + $0x30] sm:$0xff] %v2306
        %2323 = vst [vmem:[%s325 + $0x38] sm:$0xff] %v2307
        %2324 = vst [vmem:[%s325 + $0x40] sm:$0xff] %v2308
        %2325 = vst [vmem:[%s325 + $0x48] sm:$0xff] %v2309
        %2326 = vst [vmem:[%s325 + $0x50] sm:$0xff] %v2310
        %2327 = vst [vmem:[%s325 + $0x58] sm:$0xff] %v2311
        %2328 = vst [vmem:[%s325 + $0x60] sm:$0xff] %v2312
        %2329 = vst [vmem:[%s325 + $0x68] sm:$0xff] %v2313
        %2330 = vst [vmem:[%s325 + $0x70] sm:$0xff] %v2314
        %2331 = vst [vmem:[%s325 + $0x78] sm:$0xff] %v2315
        %s2332 = scalar_lea.vmem [#allocation2], 64
        %v2333 = vld [vmem:[%s2332] sm:$0xff]
        %v2334 = vld [vmem:[%s2332 + $0x8] sm:$0xff]
        %v2335 = vld [vmem:[%s2332 + $0x10] sm:$0xff]
        %v2336 = vld [vmem:[%s2332 + $0x18] sm:$0xff]
        %v2337 = vld [vmem:[%s2332 + $0x20] sm:$0xff]
        %v2338 = vld [vmem:[%s2332 + $0x28] sm:$0xff]
        %v2339 = vld [vmem:[%s2332 + $0x30] sm:$0xff]
        %v2340 = vld [vmem:[%s2332 + $0x38] sm:$0xff]
        %v2341 = vld [vmem:[#allocation3] sm:$0xff]
        %v2342 = vld [vmem:[#allocation3 + $0x8] sm:$0xff]
        %v2343 = vld [vmem:[#allocation3 + $0x10] sm:$0xff]
        %v2344 = vld [vmem:[#allocation3 + $0x18] sm:$0xff]
        %v2345 = vld [vmem:[#allocation3 + $0x20] sm:$0xff]
        %v2346 = vld [vmem:[#allocation3 + $0x28] sm:$0xff]
        %v2347 = vld [vmem:[#allocation3 + $0x30] sm:$0xff]
        %v2348 = vld [vmem:[#allocation3 + $0x38] sm:$0xff]
        %v2349 = vld [vmem:[#allocation3 + $0x40] sm:$0xff]
        %v2350 = vld [vmem:[#allocation3 + $0x48] sm:$0xff]
        %v2351 = vld [vmem:[#allocation3 + $0x50] sm:$0xff]
        %v2352 = vld [vmem:[#allocation3 + $0x58] sm:$0xff]
        %v2353 = vld [vmem:[#allocation3 + $0x60] sm:$0xff]
        %v2354 = vld [vmem:[#allocation3 + $0x68] sm:$0xff]
        %v2355 = vld [vmem:[#allocation3 + $0x70] sm:$0xff]
        %v2356 = vld [vmem:[#allocation3 + $0x78] sm:$0xff]
        %2357 = vmatprep.subr.bf16.mxu0 %v2342
        %2358 = vmatpush1.bf16.msra.mxu0 %v2341
        %2359 = vmatprep.subr.bf16.mxu0 %v2344
        %2360 = vmatpush1.bf16.msra.mxu0 %v2343
        %2361 = vmatprep.subr.bf16.mxu0 %v2346
        %2362 = vmatpush1.bf16.msra.mxu0 %v2345
        %2363 = vmatprep.subr.bf16.mxu0 %v2348
        %2364 = vmatpush1.bf16.msra.mxu0 %v2347
        %2365 = vmatprep.subr.bf16.mxu0 %v2350
        %2366 = vmatpush1.bf16.msra.mxu0 %v2349
        %2367 = vmatprep.subr.bf16.mxu0 %v2352
        %2368 = vmatpush1.bf16.msra.mxu0 %v2351
        %2369 = vmatprep.subr.bf16.mxu0 %v2354
        %2370 = vmatpush1.bf16.msra.mxu0 %v2353
        %2371 = vmatprep.subr.bf16.mxu0 %v2356
        %2372 = vmatpush1.bf16.msra.mxu0 %v2355
        %2373 = vmatprep.subr.bf16.mxu0 0
        %2374 = vmatpush1.bf16.msra.mxu0 0
        %2375 = vmatprep.subr.bf16.mxu0 0
        %2376 = vmatpush1.bf16.msra.mxu0 0
        %2377 = vmatprep.subr.bf16.mxu0 0
        %2378 = vmatpush1.bf16.msra.mxu0 0
        %2379 = vmatprep.subr.bf16.mxu0 0
        %2380 = vmatpush1.bf16.msra.mxu0 0
        %2381 = vmatprep.subr.bf16.mxu0 0
        %2382 = vmatpush1.bf16.msra.mxu0 0
        %2383 = vmatprep.subr.bf16.mxu0 0
        %2384 = vmatpush1.bf16.msra.mxu0 0
        %2385 = vmatprep.subr.bf16.mxu0 0
        %2386 = vmatpush1.bf16.msra.mxu0 0
        %2387 = vmatprep.subr.bf16.mxu0 0
        %2388 = vmatpush1.bf16.msra.mxu0 0
        %2389 = vmatprep.mubr.bf16.mxu0 0
        %2390 = vmatmul.mubr.bf16.gmra.mrb[0].mxu0 %v2333
        %v2391 = vpop.f32.mrb[0].mxu0
        %v2392 = vadd.f32 0.0, %v2391
        %v2393 = vpop.f32.mrb[0].mxu0
        %v2394 = vadd.f32 0.0, %v2393
        %v2395 = vpop.f32.mrb[0].mxu0
        %v2396 = vadd.f32 0.0, %v2395
        %v2397 = vpop.f32.mrb[0].mxu0
        %v2398 = vadd.f32 0.0, %v2397
        %2399 = vmatprep.mubr.bf16.mxu0 0
        %2400 = vmatmul.mubr.bf16.gmra.mrb[0].mxu0 %v2334
        %v2401 = vpop.f32.mrb[0].mxu0
        %v2402 = vadd.f32 0.0, %v2401
        %v2403 = vpop.f32.mrb[0].mxu0
        %v2404 = vadd.f32 0.0, %v2403
        %v2405 = vpop.f32.mrb[0].mxu0
        %v2406 = vadd.f32 0.0, %v2405
        %v2407 = vpop.f32.mrb[0].mxu0
        %v2408 = vadd.f32 0.0, %v2407
        %2409 = vmatprep.mubr.bf16.mxu0 0
        %2410 = vmatmul.mubr.bf16.gmra.mrb[0].mxu0 %v2335
        %v2411 = vpop.f32.mrb[0].mxu0
        %v2412 = vadd.f32 0.0, %v2411
        %v2413 = vpop.f32.mrb[0].mxu0
        %v2414 = vadd.f32 0.0, %v2413
        %v2415 = vpop.f32.mrb[0].mxu0
        %v2416 = vadd.f32 0.0, %v2415
        %v2417 = vpop.f32.mrb[0].mxu0
        %v2418 = vadd.f32 0.0, %v2417
        %2419 = vmatprep.mubr.bf16.mxu0 0
        %2420 = vmatmul.mubr.bf16.gmra.mrb[0].mxu0 %v2336
        %v2421 = vpop.f32.mrb[0].mxu0
        %v2422 = vadd.f32 0.0, %v2421
        %v2423 = vpop.f32.mrb[0].mxu0
        %v2424 = vadd.f32 0.0, %v2423
        %v2425 = vpop.f32.mrb[0].mxu0
        %v2426 = vadd.f32 0.0, %v2425
        %v2427 = vpop.f32.mrb[0].mxu0
        %v2428 = vadd.f32 0.0, %v2427
        %2429 = vmatprep.mubr.bf16.mxu0 0
        %2430 = vmatmul.mubr.bf16.gmra.mrb[0].mxu0 %v2337
        %v2431 = vpop.f32.mrb[0].mxu0
        %v2432 = vadd.f32 0.0, %v2431
        %v2433 = vpop.f32.mrb[0].mxu0
        %v2434 = vadd.f32 0.0, %v2433
        %v2435 = vpop.f32.mrb[0].mxu0
        %v2436 = vadd.f32 0.0, %v2435
        %v2437 = vpop.f32.mrb[0].mxu0
        %v2438 = vadd.f32 0.0, %v2437
        %2439 = vmatprep.mubr.bf16.mxu0 0
        %2440 = vmatmul.mubr.bf16.gmra.mrb[0].mxu0 %v2338
        %v2441 = vpop.f32.mrb[0].mxu0
        %v2442 = vadd.f32 0.0, %v2441
        %v2443 = vpop.f32.mrb[0].mxu0
        %v2444 = vadd.f32 0.0, %v2443
        %v2445 = vpop.f32.mrb[0].mxu0
        %v2446 = vadd.f32 0.0, %v2445
        %v2447 = vpop.f32.mrb[0].mxu0
        %v2448 = vadd.f32 0.0, %v2447
        %2449 = vmatprep.mubr.bf16.mxu0 0
        %2450 = vmatmul.mubr.bf16.gmra.mrb[0].mxu0 %v2339
        %v2451 = vpop.f32.mrb[0].mxu0
        %v2452 = vadd.f32 0.0, %v2451
        %v2453 = vpop.f32.mrb[0].mxu0
        %v2454 = vadd.f32 0.0, %v2453
        %v2455 = vpop.f32.mrb[0].mxu0
        %v2456 = vadd.f32 0.0, %v2455
        %v2457 = vpop.f32.mrb[0].mxu0
        %v2458 = vadd.f32 0.0, %v2457
        %2459 = vmatprep.mubr.bf16.mxu0 0
        %2460 = vmatmul.mubr.bf16.gmra.mrb[0].mxu0 %v2340
        %v2461 = vpop.f32.mrb[0].mxu0
        %v2462 = vadd.f32 0.0, %v2461
        %v2463 = vpop.f32.mrb[0].mxu0
        %v2464 = vadd.f32 0.0, %v2463
        %v2465 = vpop.f32.mrb[0].mxu0
        %v2466 = vadd.f32 0.0, %v2465
        %v2467 = vpop.f32.mrb[0].mxu0
        %v2468 = vadd.f32 0.0, %v2467
        %2469 = vdwg.mxu0
        %v2470 = vmax.f32 %v2392, %v2394
        %2471 = vmax.xlane.f32.xlu0 %v2470
        %v2472 = vpop.xlane.xlu0 %2471
        %v2473 = vmax.f32 %v2396, %v2398
        %2474 = vmax.xlane.f32.xlu0 %v2473
        %v2475 = vpop.xlane.xlu0 %2474
        %v2476 = vmax.f32 %v2402, %v2404
        %2477 = vmax.xlane.f32.xlu0 %v2476
        %v2478 = vpop.xlane.xlu0 %2477
        %v2479 = vmax.f32 %v2406, %v2408
        %2480 = vmax.xlane.f32.xlu0 %v2479
        %v2481 = vpop.xlane.xlu0 %2480
        %v2482 = vmax.f32 %v2412, %v2414
        %2483 = vmax.xlane.f32.xlu0 %v2482
        %v2484 = vpop.xlane.xlu0 %2483
        %v2485 = vmax.f32 %v2416, %v2418
        %2486 = vmax.xlane.f32.xlu0 %v2485
        %v2487 = vpop.xlane.xlu0 %2486
        %v2488 = vmax.f32 %v2422, %v2424
        %2489 = vmax.xlane.f32.xlu0 %v2488
        %v2490 = vpop.xlane.xlu0 %2489
        %v2491 = vmax.f32 %v2426, %v2428
        %2492 = vmax.xlane.f32.xlu0 %v2491
        %v2493 = vpop.xlane.xlu0 %2492
        %v2494 = vmax.f32 %v2432, %v2434
        %2495 = vmax.xlane.f32.xlu0 %v2494
        %v2496 = vpop.xlane.xlu0 %2495
        %v2497 = vmax.f32 %v2436, %v2438
        %2498 = vmax.xlane.f32.xlu0 %v2497
        %v2499 = vpop.xlane.xlu0 %2498
        %v2500 = vmax.f32 %v2442, %v2444
        %2501 = vmax.xlane.f32.xlu0 %v2500
        %v2502 = vpop.xlane.xlu0 %2501
        %v2503 = vmax.f32 %v2446, %v2448
        %2504 = vmax.xlane.f32.xlu0 %v2503
        %v2505 = vpop.xlane.xlu0 %2504
        %v2506 = vmax.f32 %v2452, %v2454
        %2507 = vmax.xlane.f32.xlu0 %v2506
        %v2508 = vpop.xlane.xlu0 %2507
        %v2509 = vmax.f32 %v2456, %v2458
        %2510 = vmax.xlane.f32.xlu0 %v2509
        %v2511 = vpop.xlane.xlu0 %2510
        %v2512 = vmax.f32 %v2462, %v2464
        %2513 = vmax.xlane.f32.xlu0 %v2512
        %v2514 = vpop.xlane.xlu0 %2513
        %v2515 = vmax.f32 %v2466, %v2468
        %2516 = vmax.xlane.f32.xlu0 %v2515
        %v2517 = vpop.xlane.xlu0 %2516
        %v2518 = vsub.f32 %v2392, %v2472
        %v2519 = vsub.f32 %v2394, %v2472
        %v2520 = vsub.f32 %v2396, %v2475
        %v2521 = vsub.f32 %v2398, %v2475
        %v2522 = vsub.f32 %v2402, %v2478
        %v2523 = vsub.f32 %v2404, %v2478
        %v2524 = vsub.f32 %v2406, %v2481
        %v2525 = vsub.f32 %v2408, %v2481
        %v2526 = vsub.f32 %v2412, %v2484
        %v2527 = vsub.f32 %v2414, %v2484
        %v2528 = vsub.f32 %v2416, %v2487
        %v2529 = vsub.f32 %v2418, %v2487
        %v2530 = vsub.f32 %v2422, %v2490
        %v2531 = vsub.f32 %v2424, %v2490
        %v2532 = vsub.f32 %v2426, %v2493
        %v2533 = vsub.f32 %v2428, %v2493
        %v2534 = vsub.f32 %v2432, %v2496
        %v2535 = vsub.f32 %v2434, %v2496
        %v2536 = vsub.f32 %v2436, %v2499
        %v2537 = vsub.f32 %v2438, %v2499
        %v2538 = vsub.f32 %v2442, %v2502
        %v2539 = vsub.f32 %v2444, %v2502
        %v2540 = vsub.f32 %v2446, %v2505
        %v2541 = vsub.f32 %v2448, %v2505
        %v2542 = vsub.f32 %v2452, %v2508
        %v2543 = vsub.f32 %v2454, %v2508
        %v2544 = vsub.f32 %v2456, %v2511
        %v2545 = vsub.f32 %v2458, %v2511
        %v2546 = vsub.f32 %v2462, %v2514
        %v2547 = vsub.f32 %v2464, %v2514
        %v2548 = vsub.f32 %v2466, %v2517
        %v2549 = vsub.f32 %v2468, %v2517
        %v2550 = vpack.c.bf16 %v2520, %v2518
        %v2551 = vpack.c.bf16 %v2521, %v2519
        %v2552 = vpack.c.bf16 %v2524, %v2522
        %v2553 = vpack.c.bf16 %v2525, %v2523
        %v2554 = vpack.c.bf16 %v2528, %v2526
        %v2555 = vpack.c.bf16 %v2529, %v2527
        %v2556 = vpack.c.bf16 %v2532, %v2530
        %v2557 = vpack.c.bf16 %v2533, %v2531
        %v2558 = vpack.c.bf16 %v2536, %v2534
        %v2559 = vpack.c.bf16 %v2537, %v2535
        %v2560 = vpack.c.bf16 %v2540, %v2538
        %v2561 = vpack.c.bf16 %v2541, %v2539
        %v2562 = vpack.c.bf16 %v2544, %v2542
        %v2563 = vpack.c.bf16 %v2545, %v2543
        %v2564 = vpack.c.bf16 %v2548, %v2546
        %v2565 = vpack.c.bf16 %v2549, %v2547
        %v2567 = vmul.bf16 %v2550, 1069105081
        %v2568 = vpow.bf16.pop %v2567
        %v2570 = vmul.bf16 %v2551, 1069105081
        %v2571 = vpow.bf16.pop %v2570
        %v2573 = vmul.bf16 %v2552, 1069105081
        %v2574 = vpow.bf16.pop %v2573
        %v2576 = vmul.bf16 %v2553, 1069105081
        %v2577 = vpow.bf16.pop %v2576
        %v2579 = vmul.bf16 %v2554, 1069105081
        %v2580 = vpow.bf16.pop %v2579
        %v2582 = vmul.bf16 %v2555, 1069105081
        %v2583 = vpow.bf16.pop %v2582
        %v2585 = vmul.bf16 %v2556, 1069105081
        %v2586 = vpow.bf16.pop %v2585
        %v2588 = vmul.bf16 %v2557, 1069105081
        %v2589 = vpow.bf16.pop %v2588
        %v2591 = vmul.bf16 %v2558, 1069105081
        %v2592 = vpow.bf16.pop %v2591
        %v2594 = vmul.bf16 %v2559, 1069105081
        %v2595 = vpow.bf16.pop %v2594
        %v2597 = vmul.bf16 %v2560, 1069105081
        %v2598 = vpow.bf16.pop %v2597
        %v2600 = vmul.bf16 %v2561, 1069105081
        %v2601 = vpow.bf16.pop %v2600
        %v2603 = vmul.bf16 %v2562, 1069105081
        %v2604 = vpow.bf16.pop %v2603
        %v2606 = vmul.bf16 %v2563, 1069105081
        %v2607 = vpow.bf16.pop %v2606
        %v2609 = vmul.bf16 %v2564, 1069105081
        %v2610 = vpow.bf16.pop %v2609
        %v2612 = vmul.bf16 %v2565, 1069105081
        %v2613 = vpow.bf16.pop %v2612
        %v2614 = vunpack.c.l.bf16 %v2568
        %v2615 = vunpack.c.l.bf16 %v2571
        %v2616 = vunpack.c.h.bf16 %v2568
        %v2617 = vunpack.c.h.bf16 %v2571
        %v2618 = vunpack.c.l.bf16 %v2574
        %v2619 = vunpack.c.l.bf16 %v2577
        %v2620 = vunpack.c.h.bf16 %v2574
        %v2621 = vunpack.c.h.bf16 %v2577
        %v2622 = vunpack.c.l.bf16 %v2580
        %v2623 = vunpack.c.l.bf16 %v2583
        %v2624 = vunpack.c.h.bf16 %v2580
        %v2625 = vunpack.c.h.bf16 %v2583
        %v2626 = vunpack.c.l.bf16 %v2586
        %v2627 = vunpack.c.l.bf16 %v2589
        %v2628 = vunpack.c.h.bf16 %v2586
        %v2629 = vunpack.c.h.bf16 %v2589
        %v2630 = vunpack.c.l.bf16 %v2592
        %v2631 = vunpack.c.l.bf16 %v2595
        %v2632 = vunpack.c.h.bf16 %v2592
        %v2633 = vunpack.c.h.bf16 %v2595
        %v2634 = vunpack.c.l.bf16 %v2598
        %v2635 = vunpack.c.l.bf16 %v2601
        %v2636 = vunpack.c.h.bf16 %v2598
        %v2637 = vunpack.c.h.bf16 %v2601
        %v2638 = vunpack.c.l.bf16 %v2604
        %v2639 = vunpack.c.l.bf16 %v2607
        %v2640 = vunpack.c.h.bf16 %v2604
        %v2641 = vunpack.c.h.bf16 %v2607
        %v2642 = vunpack.c.l.bf16 %v2610
        %v2643 = vunpack.c.l.bf16 %v2613
        %v2644 = vunpack.c.h.bf16 %v2610
        %v2645 = vunpack.c.h.bf16 %v2613
        %v2646 = vadd.f32 %v2614, %v2615
        %2647 = vadd.xlane.f32.xlu0 %v2646
        %v2648 = vpop.xlane.xlu0 %2647
        %v2649 = vadd.f32 %v2616, %v2617
        %2650 = vadd.xlane.f32.xlu0 %v2649
        %v2651 = vpop.xlane.xlu0 %2650
        %v2652 = vadd.f32 %v2618, %v2619
        %2653 = vadd.xlane.f32.xlu0 %v2652
        %v2654 = vpop.xlane.xlu0 %2653
        %v2655 = vadd.f32 %v2620, %v2621
        %2656 = vadd.xlane.f32.xlu0 %v2655
        %v2657 = vpop.xlane.xlu0 %2656
        %v2658 = vadd.f32 %v2622, %v2623
        %2659 = vadd.xlane.f32.xlu0 %v2658
        %v2660 = vpop.xlane.xlu0 %2659
        %v2661 = vadd.f32 %v2624, %v2625
        %2662 = vadd.xlane.f32.xlu0 %v2661
        %v2663 = vpop.xlane.xlu0 %2662
        %v2664 = vadd.f32 %v2626, %v2627
        %2665 = vadd.xlane.f32.xlu0 %v2664
        %v2666 = vpop.xlane.xlu0 %2665
        %v2667 = vadd.f32 %v2628, %v2629
        %2668 = vadd.xlane.f32.xlu0 %v2667
        %v2669 = vpop.xlane.xlu0 %2668
        %v2670 = vadd.f32 %v2630, %v2631
        %2671 = vadd.xlane.f32.xlu0 %v2670
        %v2672 = vpop.xlane.xlu0 %2671
        %v2673 = vadd.f32 %v2632, %v2633
        %2674 = vadd.xlane.f32.xlu0 %v2673
        %v2675 = vpop.xlane.xlu0 %2674
        %v2676 = vadd.f32 %v2634, %v2635
        %2677 = vadd.xlane.f32.xlu0 %v2676
        %v2678 = vpop.xlane.xlu0 %2677
        %v2679 = vadd.f32 %v2636, %v2637
        %2680 = vadd.xlane.f32.xlu0 %v2679
        %v2681 = vpop.xlane.xlu0 %2680
        %v2682 = vadd.f32 %v2638, %v2639
        %2683 = vadd.xlane.f32.xlu0 %v2682
        %v2684 = vpop.xlane.xlu0 %2683
        %v2685 = vadd.f32 %v2640, %v2641
        %2686 = vadd.xlane.f32.xlu0 %v2685
        %v2687 = vpop.xlane.xlu0 %2686
        %v2688 = vadd.f32 %v2642, %v2643
        %2689 = vadd.xlane.f32.xlu0 %v2688
        %v2690 = vpop.xlane.xlu0 %2689
        %v2691 = vadd.f32 %v2644, %v2645
        %2692 = vadd.xlane.f32.xlu0 %v2691
        %v2693 = vpop.xlane.xlu0 %2692
        %v2694 = vld [vmem:[#allocation4] sm:$0xff]
        %v2695 = vld [vmem:[#allocation4 + $0x8] sm:$0xff]
        %v2696 = vld [vmem:[#allocation4 + $0x10] sm:$0xff]
        %v2697 = vld [vmem:[#allocation4 + $0x18] sm:$0xff]
        %v2698 = vld [vmem:[#allocation4 + $0x20] sm:$0xff]
        %v2699 = vld [vmem:[#allocation4 + $0x28] sm:$0xff]
        %v2700 = vld [vmem:[#allocation4 + $0x30] sm:$0xff]
        %v2701 = vld [vmem:[#allocation4 + $0x38] sm:$0xff]
        %v2702 = vld [vmem:[#allocation4 + $0x40] sm:$0xff]
        %v2703 = vld [vmem:[#allocation4 + $0x48] sm:$0xff]
        %v2704 = vld [vmem:[#allocation4 + $0x50] sm:$0xff]
        %v2705 = vld [vmem:[#allocation4 + $0x58] sm:$0xff]
        %v2706 = vld [vmem:[#allocation4 + $0x60] sm:$0xff]
        %v2707 = vld [vmem:[#allocation4 + $0x68] sm:$0xff]
        %v2708 = vld [vmem:[#allocation4 + $0x70] sm:$0xff]
        %v2709 = vld [vmem:[#allocation4 + $0x78] sm:$0xff]
        %2710 = vmatprep.subr.bf16.mxu0 0
        %2711 = vmatpush1.bf16.msra.mxu0 %v2694
        %2712 = vmatprep.subr.bf16.mxu0 0
        %2713 = vmatpush1.bf16.msra.mxu0 %v2695
        %2714 = vmatprep.subr.bf16.mxu0 0
        %2715 = vmatpush1.bf16.msra.mxu0 %v2696
        %2716 = vmatprep.subr.bf16.mxu0 0
        %2717 = vmatpush1.bf16.msra.mxu0 %v2697
        %2718 = vmatprep.subr.bf16.mxu0 0
        %2719 = vmatpush1.bf16.msra.mxu0 %v2698
        %2720 = vmatprep.subr.bf16.mxu0 0
        %2721 = vmatpush1.bf16.msra.mxu0 %v2699
        %2722 = vmatprep.subr.bf16.mxu0 0
        %2723 = vmatpush1.bf16.msra.mxu0 %v2700
        %2724 = vmatprep.subr.bf16.mxu0 0
        %2725 = vmatpush1.bf16.msra.mxu0 %v2701
        %2726 = vmatprep.subr.bf16.mxu0 0
        %2727 = vmatpush1.bf16.msra.mxu0 %v2702
        %2728 = vmatprep.subr.bf16.mxu0 0
        %2729 = vmatpush1.bf16.msra.mxu0 %v2703
        %2730 = vmatprep.subr.bf16.mxu0 0
        %2731 = vmatpush1.bf16.msra.mxu0 %v2704
        %2732 = vmatprep.subr.bf16.mxu0 0
        %2733 = vmatpush1.bf16.msra.mxu0 %v2705
        %2734 = vmatprep.subr.bf16.mxu0 0
        %2735 = vmatpush1.bf16.msra.mxu0 %v2706
        %2736 = vmatprep.subr.bf16.mxu0 0
        %2737 = vmatpush1.bf16.msra.mxu0 %v2707
        %2738 = vmatprep.subr.bf16.mxu0 0
        %2739 = vmatpush1.bf16.msra.mxu0 %v2708
        %2740 = vmatprep.subr.bf16.mxu0 0
        %2741 = vmatpush1.bf16.msra.mxu0 %v2709
        %2742 = vmatprep.mubr.bf16.mxu0 %v2571
        %2743 = vmatmul.mubr.bf16.gmra.mrb[0].mxu0 %v2568
        %v2744 = vpop.f32.mrb[0].mxu0
        %v2745 = vadd.f32 0.0, %v2744
        %v2746 = vpop.f32.mrb[0].mxu0
        %v2747 = vpop.f32.mrb[0].mxu0
        %v2748 = vadd.f32 0.0, %v2747
        %v2749 = vpop.f32.mrb[0].mxu0
        %2750 = vmatprep.mubr.bf16.mxu0 %v2577
        %2751 = vmatmul.mubr.bf16.gmra.mrb[0].mxu0 %v2574
        %v2752 = vpop.f32.mrb[0].mxu0
        %v2753 = vadd.f32 0.0, %v2752
        %v2754 = vpop.f32.mrb[0].mxu0
        %v2755 = vpop.f32.mrb[0].mxu0
        %v2756 = vadd.f32 0.0, %v2755
        %v2757 = vpop.f32.mrb[0].mxu0
        %2758 = vmatprep.mubr.bf16.mxu0 %v2583
        %2759 = vmatmul.mubr.bf16.gmra.mrb[0].mxu0 %v2580
        %v2760 = vpop.f32.mrb[0].mxu0
        %v2761 = vadd.f32 0.0, %v2760
        %v2762 = vpop.f32.mrb[0].mxu0
        %v2763 = vpop.f32.mrb[0].mxu0
        %v2764 = vadd.f32 0.0, %v2763
        %v2765 = vpop.f32.mrb[0].mxu0
        %2766 = vmatprep.mubr.bf16.mxu0 %v2589
        %2767 = vmatmul.mubr.bf16.gmra.mrb[0].mxu0 %v2586
        %v2768 = vpop.f32.mrb[0].mxu0
        %v2769 = vadd.f32 0.0, %v2768
        %v2770 = vpop.f32.mrb[0].mxu0
        %v2771 = vpop.f32.mrb[0].mxu0
        %v2772 = vadd.f32 0.0, %v2771
        %v2773 = vpop.f32.mrb[0].mxu0
        %2774 = vmatprep.mubr.bf16.mxu0 %v2595
        %2775 = vmatmul.mubr.bf16.gmra.mrb[0].mxu0 %v2592
        %v2776 = vpop.f32.mrb[0].mxu0
        %v2777 = vadd.f32 0.0, %v2776
        %v2778 = vpop.f32.mrb[0].mxu0
        %v2779 = vpop.f32.mrb[0].mxu0
        %v2780 = vadd.f32 0.0, %v2779
        %v2781 = vpop.f32.mrb[0].mxu0
        %2782 = vmatprep.mubr.bf16.mxu0 %v2601
        %2783 = vmatmul.mubr.bf16.gmra.mrb[0].mxu0 %v2598
        %v2784 = vpop.f32.mrb[0].mxu0
        %v2785 = vadd.f32 0.0, %v2784
        %v2786 = vpop.f32.mrb[0].mxu0
        %v2787 = vpop.f32.mrb[0].mxu0
        %v2788 = vadd.f32 0.0, %v2787
        %v2789 = vpop.f32.mrb[0].mxu0
        %2790 = vmatprep.mubr.bf16.mxu0 %v2607
        %2791 = vmatmul.mubr.bf16.gmra.mrb[0].mxu0 %v2604
        %v2792 = vpop.f32.mrb[0].mxu0
        %v2793 = vadd.f32 0.0, %v2792
        %v2794 = vpop.f32.mrb[0].mxu0
        %v2795 = vpop.f32.mrb[0].mxu0
        %v2796 = vadd.f32 0.0, %v2795
        %v2797 = vpop.f32.mrb[0].mxu0
        %2798 = vmatprep.mubr.bf16.mxu0 %v2613
        %2799 = vmatmul.mubr.bf16.gmra.mrb[0].mxu0 %v2610
        %v2800 = vpop.f32.mrb[0].mxu0
        %v2801 = vadd.f32 0.0, %v2800
        %v2802 = vpop.f32.mrb[0].mxu0
        %v2803 = vpop.f32.mrb[0].mxu0
        %v2804 = vadd.f32 0.0, %v2803
        %v2805 = vpop.f32.mrb[0].mxu0
        %2806 = vdwg.mxu0
        %v2807 = vrcp.pop %v2648
        %v2808 = vrcp.pop %v2651
        %v2809 = vrcp.pop %v2654
        %v2810 = vrcp.pop %v2657
        %v2811 = vrcp.pop %v2660
        %v2812 = vrcp.pop %v2663
        %v2813 = vrcp.pop %v2666
        %v2814 = vrcp.pop %v2669
        %v2815 = vrcp.pop %v2672
        %v2816 = vrcp.pop %v2675
        %v2817 = vrcp.pop %v2678
        %v2818 = vrcp.pop %v2681
        %v2819 = vrcp.pop %v2684
        %v2820 = vrcp.pop %v2687
        %v2821 = vrcp.pop %v2690
        %v2822 = vrcp.pop %v2693
        %v2823 = vmul.f32 %v2745, %v2807
        %v2824 = vmul.f32 %v2748, %v2808
        %v2825 = vmul.f32 %v2753, %v2809
        %v2826 = vmul.f32 %v2756, %v2810
        %v2827 = vmul.f32 %v2761, %v2811
        %v2828 = vmul.f32 %v2764, %v2812
        %v2829 = vmul.f32 %v2769, %v2813
        %v2830 = vmul.f32 %v2772, %v2814
        %v2831 = vmul.f32 %v2777, %v2815
        %v2832 = vmul.f32 %v2780, %v2816
        %v2833 = vmul.f32 %v2785, %v2817
        %v2834 = vmul.f32 %v2788, %v2818
        %v2835 = vmul.f32 %v2793, %v2819
        %v2836 = vmul.f32 %v2796, %v2820
        %v2837 = vmul.f32 %v2801, %v2821
        %v2838 = vmul.f32 %v2804, %v2822
        %v2839 = vpack.c.bf16 %v2824, %v2823
        %v2840 = vpack.c.bf16 %v2826, %v2825
        %v2841 = vpack.c.bf16 %v2828, %v2827
        %v2842 = vpack.c.bf16 %v2830, %v2829
        %v2843 = vpack.c.bf16 %v2832, %v2831
        %v2844 = vpack.c.bf16 %v2834, %v2833
        %v2845 = vpack.c.bf16 %v2836, %v2835
        %v2846 = vpack.c.bf16 %v2838, %v2837
        %v2847 = vld [vmem:[%s7] sm:$0xf]
        %v2848 = vld [vmem:[%s7 + $0x4] sm:$0xf]
        %v2849 = vld [vmem:[%s7 + $0x8] sm:$0xf]
        %v2850 = vld [vmem:[%s7 + $0xc] sm:$0xf]
        %v2851 = vld [vmem:[%s7 + $0x10] sm:$0xf]
        %v2852 = vld [vmem:[%s7 + $0x14] sm:$0xf]
        %v2853 = vld [vmem:[%s7 + $0x18] sm:$0xf]
        %v2854 = vld [vmem:[%s7 + $0x1c] sm:$0xf]
        %v2855 = vld [vmem:[%s7 + $0x20] sm:$0xf]
        %v2856 = vld [vmem:[%s7 + $0x24] sm:$0xf]
        %v2857 = vld [vmem:[%s7 + $0x28] sm:$0xf]
        %v2858 = vld [vmem:[%s7 + $0x2c] sm:$0xf]
        %v2859 = vld [vmem:[%s7 + $0x30] sm:$0xf]
        %v2860 = vld [vmem:[%s7 + $0x34] sm:$0xf]
        %v2861 = vld [vmem:[%s7 + $0x38] sm:$0xf]
        %v2862 = vld [vmem:[%s7 + $0x3c] sm:$0xf]
        %v2863 = vld [vmem:[%s8] sm:$0x1]
        %v2865 = vlaneseq
        %v2866 = vshrl.u32 %v2865, 7
        %v2867 = vsub.s32 0, %v2866
        %v2868 = vrot.slane %v2863, %v2867
        %v2886 = vunpack.c.l.b16 %v2847
        %v2887 = vunpack.c.l.b16 %v2848
        %v2888 = vunpack.c.l.b16 %v2849
        %v2889 = vunpack.c.l.b16 %v2850
        %v2890 = vunpack.c.l.b16 %v2851
        %v2891 = vunpack.c.l.b16 %v2852
        %v2892 = vunpack.c.l.b16 %v2853
        %v2893 = vunpack.c.l.b16 %v2854
        %v2894 = vunpack.c.l.b16 %v2855
        %v2895 = vunpack.c.l.b16 %v2856
        %v2896 = vunpack.c.l.b16 %v2857
        %v2897 = vunpack.c.l.b16 %v2858
        %v2898 = vunpack.c.l.b16 %v2859
        %v2899 = vunpack.c.l.b16 %v2860
        %v2900 = vunpack.c.l.b16 %v2861
        %v2901 = vunpack.c.l.b16 %v2862
        %v2902 = vpack.c.b16 %v2887, %v2886
        %v2903 = vpack.c.b16 %v2889, %v2888
        %v2904 = vpack.c.b16 %v2891, %v2890
        %v2905 = vpack.c.b16 %v2893, %v2892
        %v2906 = vpack.c.b16 %v2895, %v2894
        %v2907 = vpack.c.b16 %v2897, %v2896
        %v2908 = vpack.c.b16 %v2899, %v2898
        %v2909 = vpack.c.b16 %v2901, %v2900
        %2918 = vmatprep.subr.bf16.mxu0 0
        %2919 = vmatpush1.bf16.msra.mxu0 %v2902
        %2920 = vmatprep.subr.bf16.mxu0 0
        %2921 = vmatpush1.bf16.msra.mxu0 %v2903
        %2922 = vmatprep.subr.bf16.mxu0 0
        %2923 = vmatpush1.bf16.msra.mxu0 %v2904
        %2924 = vmatprep.subr.bf16.mxu0 0
        %2925 = vmatpush1.bf16.msra.mxu0 %v2905
        %2926 = vmatprep.subr.bf16.mxu0 0
        %2927 = vmatpush1.bf16.msra.mxu0 %v2906
        %2928 = vmatprep.subr.bf16.mxu0 0
        %2929 = vmatpush1.bf16.msra.mxu0 %v2907
        %2930 = vmatprep.subr.bf16.mxu0 0
        %2931 = vmatpush1.bf16.msra.mxu0 %v2908
        %2932 = vmatprep.subr.bf16.mxu0 0
        %2933 = vmatpush1.bf16.msra.mxu0 %v2909
        %2934 = vmatprep.subr.bf16.mxu0 0
        %2935 = vmatpush1.bf16.msra.mxu0 0
        %2936 = vmatprep.subr.bf16.mxu0 0
        %2937 = vmatpush1.bf16.msra.mxu0 0
        %2938 = vmatprep.subr.bf16.mxu0 0
        %2939 = vmatpush1.bf16.msra.mxu0 0
        %2940 = vmatprep.subr.bf16.mxu0 0
        %2941 = vmatpush1.bf16.msra.mxu0 0
        %2942 = vmatprep.subr.bf16.mxu0 0
        %2943 = vmatpush1.bf16.msra.mxu0 0
        %2944 = vmatprep.subr.bf16.mxu0 0
        %2945 = vmatpush1.bf16.msra.mxu0 0
        %2946 = vmatprep.subr.bf16.mxu0 0
        %2947 = vmatpush1.bf16.msra.mxu0 0
        %2948 = vmatprep.subr.bf16.mxu0 0
        %2949 = vmatpush1.bf16.msra.mxu0 0
        %2950 = vmatprep.mubr.bf16.mxu0 0
        %2951 = vmatmul.mubr.bf16.gmra.mrb[0].mxu0 %v2839
        %v2952 = vpop.f32.mrb[0].mxu0
        %v2953 = vadd.f32 %v2868, %v2952
        %v2954 = vpop.f32.mrb[0].mxu0
        %v2955 = vpop.f32.mrb[0].mxu0
        %v2956 = vadd.f32 %v2868, %v2955
        %v2957 = vpop.f32.mrb[0].mxu0
        %2958 = vmatprep.mubr.bf16.mxu0 0
        %2959 = vmatmul.mubr.bf16.gmra.mrb[0].mxu0 %v2840
        %v2960 = vpop.f32.mrb[0].mxu0
        %v2961 = vadd.f32 %v2868, %v2960
        %v2962 = vpop.f32.mrb[0].mxu0
        %v2963 = vpop.f32.mrb[0].mxu0
        %v2964 = vadd.f32 %v2868, %v2963
        %v2965 = vpop.f32.mrb[0].mxu0
        %2966 = vmatprep.mubr.bf16.mxu0 0
        %2967 = vmatmul.mubr.bf16.gmra.mrb[0].mxu0 %v2841
        %v2968 = vpop.f32.mrb[0].mxu0
        %v2969 = vadd.f32 %v2868, %v2968
        %v2970 = vpop.f32.mrb[0].mxu0
        %v2971 = vpop.f32.mrb[0].mxu0
        %v2972 = vadd.f32 %v2868, %v2971
        %v2973 = vpop.f32.mrb[0].mxu0
        %2974 = vmatprep.mubr.bf16.mxu0 0
        %2975 = vmatmul.mubr.bf16.gmra.mrb[0].mxu0 %v2842
        %v2976 = vpop.f32.mrb[0].mxu0
        %v2977 = vadd.f32 %v2868, %v2976
        %v2978 = vpop.f32.mrb[0].mxu0
        %v2979 = vpop.f32.mrb[0].mxu0
        %v2980 = vadd.f32 %v2868, %v2979
        %v2981 = vpop.f32.mrb[0].mxu0
        %2982 = vmatprep.mubr.bf16.mxu0 0
        %2983 = vmatmul.mubr.bf16.gmra.mrb[0].mxu0 %v2843
        %v2984 = vpop.f32.mrb[0].mxu0
        %v2985 = vadd.f32 %v2868, %v2984
        %v2986 = vpop.f32.mrb[0].mxu0
        %v2987 = vpop.f32.mrb[0].mxu0
        %v2988 = vadd.f32 %v2868, %v2987
        %v2989 = vpop.f32.mrb[0].mxu0
        %2990 = vmatprep.mubr.bf16.mxu0 0
        %2991 = vmatmul.mubr.bf16.gmra.mrb[0].mxu0 %v2844
        %v2992 = vpop.f32.mrb[0].mxu0
        %v2993 = vadd.f32 %v2868, %v2992
        %v2994 = vpop.f32.mrb[0].mxu0
        %v2995 = vpop.f32.mrb[0].mxu0
        %v2996 = vadd.f32 %v2868, %v2995
        %v2997 = vpop.f32.mrb[0].mxu0
        %2998 = vmatprep.mubr.bf16.mxu0 0
        %2999 = vmatmul.mubr.bf16.gmra.mrb[0].mxu0 %v2845
        %v3000 = vpop.f32.mrb[0].mxu0
        %v3001 = vadd.f32 %v2868, %v3000
        %v3002 = vpop.f32.mrb[0].mxu0
        %v3003 = vpop.f32.mrb[0].mxu0
        %v3004 = vadd.f32 %v2868, %v3003
        %v3005 = vpop.f32.mrb[0].mxu0
        %3006 = vmatprep.mubr.bf16.mxu0 0
        %3007 = vmatmul.mubr.bf16.gmra.mrb[0].mxu0 %v2846
        %v3008 = vpop.f32.mrb[0].mxu0
        %v3009 = vadd.f32 %v2868, %v3008
        %v3010 = vpop.f32.mrb[0].mxu0
        %v3011 = vpop.f32.mrb[0].mxu0
        %v3012 = vadd.f32 %v2868, %v3011
        %v3013 = vpop.f32.mrb[0].mxu0
        %3014 = vdwg.mxu0
        %s3015 = scalar_lea.vmem %s330, 128
        %v3016 = vld [vmem:[%s3015] sm:$0xff]
        %v3017 = vld [vmem:[%s3015 + $0x8] sm:$0xff]
        %v3018 = vld [vmem:[%s3015 + $0x10] sm:$0xff]
        %v3019 = vld [vmem:[%s3015 + $0x18] sm:$0xff]
        %v3020 = vld [vmem:[%s3015 + $0x20] sm:$0xff]
        %v3021 = vld [vmem:[%s3015 + $0x28] sm:$0xff]
        %v3022 = vld [vmem:[%s3015 + $0x30] sm:$0xff]
        %v3023 = vld [vmem:[%s3015 + $0x38] sm:$0xff]
        %v3024 = vld [vmem:[%s3015 + $0x40] sm:$0xff]
        %v3025 = vld [vmem:[%s3015 + $0x48] sm:$0xff]
        %v3026 = vld [vmem:[%s3015 + $0x50] sm:$0xff]
        %v3027 = vld [vmem:[%s3015 + $0x58] sm:$0xff]
        %v3028 = vld [vmem:[%s3015 + $0x60] sm:$0xff]
        %v3029 = vld [vmem:[%s3015 + $0x68] sm:$0xff]
        %v3030 = vld [vmem:[%s3015 + $0x70] sm:$0xff]
        %v3031 = vld [vmem:[%s3015 + $0x78] sm:$0xff]
        %v3032 = vadd.f32 %v3016, %v2953
        %v3033 = vadd.f32 %v3017, %v2956
        %v3034 = vadd.f32 %v3018, %v2961
        %v3035 = vadd.f32 %v3019, %v2964
        %v3036 = vadd.f32 %v3020, %v2969
        %v3037 = vadd.f32 %v3021, %v2972
        %v3038 = vadd.f32 %v3022, %v2977
        %v3039 = vadd.f32 %v3023, %v2980
        %v3040 = vadd.f32 %v3024, %v2985
        %v3041 = vadd.f32 %v3025, %v2988
        %v3042 = vadd.f32 %v3026, %v2993
        %v3043 = vadd.f32 %v3027, %v2996
        %v3044 = vadd.f32 %v3028, %v3001
        %v3045 = vadd.f32 %v3029, %v3004
        %v3046 = vadd.f32 %v3030, %v3009
        %v3047 = vadd.f32 %v3031, %v3012
        %s3048 = scalar_lea.vmem %s325, 128 [#allocation5]
        %3049 = vst [vmem:[%s3048] sm:$0xff] %v3032
        %3050 = vst [vmem:[%s3048 + $0x8] sm:$0xff] %v3033
        %3051 = vst [vmem:[%s3048 + $0x10] sm:$0xff] %v3034
        %3052 = vst [vmem:[%s3048 + $0x18] sm:$0xff] %v3035
        %3053 = vst [vmem:[%s3048 + $0x20] sm:$0xff] %v3036
        %3054 = vst [vmem:[%s3048 + $0x28] sm:$0xff] %v3037
        %3055 = vst [vmem:[%s3048 + $0x30] sm:$0xff] %v3038
        %3056 = vst [vmem:[%s3048 + $0x38] sm:$0xff] %v3039
        %3057 = vst [vmem:[%s3048 + $0x40] sm:$0xff] %v3040
        %3058 = vst [vmem:[%s3048 + $0x48] sm:$0xff] %v3041
        %3059 = vst [vmem:[%s3048 + $0x50] sm:$0xff] %v3042
        %3060 = vst [vmem:[%s3048 + $0x58] sm:$0xff] %v3043
        %3061 = vst [vmem:[%s3048 + $0x60] sm:$0xff] %v3044
        %3062 = vst [vmem:[%s3048 + $0x68] sm:$0xff] %v3045
        %3063 = vst [vmem:[%s3048 + $0x70] sm:$0xff] %v3046
        %3064 = vst [vmem:[%s3048 + $0x78] sm:$0xff] %v3047
        %s3065 = sand.u32 %s225, 1
        %s3066 = scalar_lea.sflag [#allocation6], %s3065
        %s3067 = sand.u32 %s225, 1
        %s3068 = smul.addr %s3067, 256
        %s3069 = scalar_lea.vmem [#allocation5], %s3068
        // Predicated region
        $region57: #{attn_block_seq.1} parent=55 // pred_check
          %p3070 = pneg %p235
        $region58: #{attn_block_seq.1} parent=55 // pred_check_branch
          %3072 = sbr.rel (%p3070) target = $region60
        $region59: #{attn_block_seq.1} parent=55 // pred_region
          %s3074 = ssub.s32 4096, 4096
          %3075 = vsyncadd %s3066, %s3074
          %s3076 = smul.addr %s23, 32
          %s3077 = smul.addr %s3076, 128
          %s3078 = scalar_lea.hbm %s9, %s3077
          %s3079 = sshll.u32 %s3069, 4
          %s3080 = int_to_ptr.vmem [resolvable:$true] %s3079
          %3085 = dma.vmem_to_hbm [thread:$0]  %s3080, 4096, %s3078, %s3066, 128, 128, 8
        $region60: #{attn_block_seq.1} parent=55 // pred_fallthru
          _
      $region56: #{attn_block_seq.1} parent=5 // pred_fallthru
        _
      %p3086 = scmp.le.s32.totalorder 2, %s18
      // Predicated region
      $region61: #{attn_block_seq.1} parent=5 // pred_check
        %p3087 = pneg %p3086
      $region62: #{attn_block_seq.1} parent=5 // pred_check_branch
        %3089 = sbr.rel (%p3087) target = $region64
      $region63: #{attn_block_seq.1} parent=5 // pred_region
        %s3090 = ssub.s32 %s18, 2
        // Predicated region
        $region65: #{attn_block_seq.1} parent=63 // pred_check
          %p3091 = pneg %p241
        $region66: #{attn_block_seq.1} parent=63 // pred_check_branch
          %3093 = sbr.rel (%p3091) target = $region68
        $region67: #{attn_block_seq.1} parent=63 // pred_region
          %s3094 = sand.u32 %s226, 1
          %s3095 = scalar_lea.sflag [#allocation6], %s3094
          %s3096 = sand.u32 %s226, 1
          %s3097 = smul.addr %s3096, 256
          %s3098 = scalar_lea.vmem [#allocation5], %s3097
          %3099 = dma.done %s3095, 4096
        $region68: #{attn_block_seq.1} parent=63 // pred_fallthru
          _
      $region64: #{attn_block_seq.1} parent=5 // pred_fallthru
        _
    $region6: #{attn_block_seq.1} parent=1 // loop_footer
      %s22 = sadd.s32 1, %s18
    $region7: #{attn_block_seq.1} parent=1 // loop_footer_branch
      %17 = sbr.rel target = $region3
    $region8: #{attn_block_seq.1} parent=1 // loop_exit
      _
    %3100 = vsyncpa [#allocation6], 1
    %s3101 = scalar_lea.sflag [#allocation6], 1
    %3102 = vsyncpa %s3101, 1

</llo_original>
